<compile_context>
chip_gen: v5e
topology: v5e:2x2
jax: 0.10.0
libtpu: 0.0.40
codegen_flags: <defaults>
</compile_context>

<pallas_src>
import functools

import jax
import jax.numpy as jnp
import numpy as np
from jax import lax
from jax.experimental import pallas as pl
from jax.experimental.pallas import tpu as pltpu


def _round_up(x, m):
    return ((x + m - 1) // m) * m


# ----------------------------- Pallas kernel -------------------------------------------

def _bilstm_kernel(len_ref, xf_ref, xb_ref, wihf_ref, wihb_ref, bf_ref, bb_ref,
                   whf_ref, whb_ref,                     # inputs
                   outf_ref, outb_ref,                   # outputs (lane-dense, HP wide)
                   xpf_ref, xpb_ref, hf_ref, cf_ref, hb_ref, cb_ref,  # VMEM scratch
                   *, Tc, BP):
    """One grid step = one forward time-chunk (times [k*Tc, k*Tc+Tc)) and one backward
    time-chunk (times [(K-1-k)*Tc, ...) processed in reverse), interleaved for ILP.

    len_ref  : (BP, 1)       int32   valid lengths (0 for padded batch rows)
    xf_ref   : (Tc*BP, D)    f32     raw input rows for the forward chunk (time-major)
    xb_ref   : (Tc*BP, D)    f32     raw input rows for the backward chunk
    wih*     : (D, G)        f32     input weights, gate blocks 128-lane aligned (G=4*HP)
    b*       : (1, G)        f32     combined bias (b_ih + b_hh), gate-aligned
    wh*      : (HP, G)       f32     recurrent weights, rows padded H->HP
    out*_ref : (Tc*BP, HP)   f32     per-direction hidden states, full-lane-width rows
    xp*_ref  : (Tc*BP, G)    f32     scratch: chunk pre-activations (never touch HBM)
    h*/c*    : (BP, HP)      f32     scratch: recurrent state carried across grid steps
    """
    k = pl.program_id(0)
    K = pl.num_programs(0)
    HP, G = whf_ref.shape

    @pl.when(k == 0)
    def _init_state():
        hf_ref[...] = jnp.zeros_like(hf_ref)
        cf_ref[...] = jnp.zeros_like(cf_ref)
        hb_ref[...] = jnp.zeros_like(hb_ref)
        cb_ref[...] = jnp.zeros_like(cb_ref)

    lens = len_ref[...]                                   # (BP, 1) int32, loop-invariant

    # Hoisted non-recurrent input projection for this chunk: one MXU matmul per direction
    # with M = Tc*BP rows; pre-activations live only in VMEM scratch.
    xpf_ref[...] = (jnp.dot(xf_ref[...], wihf_ref[...],
                            preferred_element_type=jnp.float32) + bf_ref[...])
    xpb_ref[...] = (jnp.dot(xb_ref[...], wihb_ref[...],
                            preferred_element_type=jnp.float32) + bb_ref[...])

    t0_f = k * Tc                  # global start time of this forward chunk
    t0_b = (K - 1 - k) * Tc        # global start time of this backward chunk

    def cell(pre, h, c, whh_ref):
        gates = pre + jnp.dot(h, whh_ref[...], preferred_element_type=jnp.float32)
        # PyTorch gate order i, f, g, o — each gate block is 128-lane aligned (width HP).
        i = jax.nn.sigmoid(gates[:, 0 * HP:1 * HP])
        f = jax.nn.sigmoid(gates[:, 1 * HP:2 * HP])
        g = jnp.tanh(gates[:, 2 * HP:3 * HP])
        o = jax.nn.sigmoid(gates[:, 3 * HP:4 * HP])
        c_new = f * c + i * g
        return o * jnp.tanh(c_new), c_new

    def step(s, carry):
        h_f, c_f, h_b, c_b = carry

        # ---- forward direction: local step s, global time t0_f + s ----
        row_f = pl.multiple_of(s * BP, BP)
        valid_f = lens > (t0_f + s)                        # (BP, 1) bool
        hfn, cfn = cell(xpf_ref[pl.ds(row_f, BP), :], h_f, c_f, whf_ref)
        h_f = jnp.where(valid_f, hfn, h_f)
        c_f = jnp.where(valid_f, cfn, c_f)
        outf_ref[pl.ds(row_f, BP), :] = jnp.where(valid_f, h_f, 0.0)   # dense HP-lane store

        # ---- backward direction: local step Tc-1-s, global time t0_b + Tc-1-s ----
        sb = Tc - 1 - s
        row_b = pl.multiple_of(sb * BP, BP)
        valid_b = lens > (t0_b + sb)
        hbn, cbn = cell(xpb_ref[pl.ds(row_b, BP), :], h_b, c_b, whb_ref)
        h_b = jnp.where(valid_b, hbn, h_b)
        c_b = jnp.where(valid_b, cbn, c_b)
        outb_ref[pl.ds(row_b, BP), :] = jnp.where(valid_b, h_b, 0.0)

        return h_f, c_f, h_b, c_b

    carry0 = (hf_ref[...], cf_ref[...], hb_ref[...], cb_ref[...])
    h_f, c_f, h_b, c_b = lax.fori_loop(0, Tc, step, carry0, unroll=min(Tc, 8))
    hf_ref[...], cf_ref[...] = h_f, c_f
    hb_ref[...], cb_ref[...] = h_b, c_b


# ----------------------------- wrapper --------------------------------------------------

def _pad_gates_lanes(w, H, HP):
    """(rows, 4H) -> (rows, 4*HP): each gate block starts on a 128-lane boundary."""
    if HP == H:
        return w
    rows = w.shape[0]
    w4 = w.reshape(rows, 4, H)
    w4 = jnp.pad(w4, ((0, 0), (0, 0), (0, HP - H)))
    return w4.reshape(rows, 4 * HP)


def bilstm_encoder_pallas(sent_rep, seq_lens, params, *, time_chunk=4):
    """sent_rep: (B, T, D) f32, seq_lens: (B,) int32 -> (B, T, 2H) f32."""
    B, T, D = sent_rep.shape
    H = params["whh_f"].shape[0]
    HP = _round_up(H, 128)              # lane-aligned per-gate / per-direction width
    G = 4 * HP
    BP = max(8, _round_up(B, 8))        # at least one sublane tile of MXU rows
    Tc = max(1, min(time_chunk, T))
    T_pad = _round_up(T, Tc)
    K = T_pad // Tc

    x = sent_rep.astype(jnp.float32)
    # Time-major, batch padded to BP, time padded to K*Tc, flattened so every kernel ref
    # is a plain 2-D (rows, lanes) tile and every store is lane-dense.
    x_tm = jnp.transpose(x, (1, 0, 2))                                   # (T, B, D)
    x_tm = jnp.pad(x_tm, ((0, T_pad - T), (0, BP - B), (0, 0)))          # (T_pad, BP, D)
    x2d = x_tm.reshape(T_pad * BP, D)

    lens = jnp.zeros((BP, 1), jnp.int32).at[:B, 0].set(seq_lens.astype(jnp.int32))

    # Gate-aligned, zero-padded weights.  Padded gate lanes see zero pre-activation and
    # zero recurrent weights, so padded h/c lanes stay exactly 0 through the recurrence.
    wih_f = _pad_gates_lanes(params["wih_f"].astype(jnp.float32), H, HP)   # (D, G)
    wih_b = _pad_gates_lanes(params["wih_b"].astype(jnp.float32), H, HP)
    b_f = _pad_gates_lanes(params["b_f"].astype(jnp.float32), H, HP)       # (1, G)
    b_b = _pad_gates_lanes(params["b_b"].astype(jnp.float32), H, HP)
    whh_f = jnp.pad(_pad_gates_lanes(params["whh_f"].astype(jnp.float32), H, HP),
                    ((0, HP - H), (0, 0)))                                  # (HP, G)
    whh_b = jnp.pad(_pad_gates_lanes(params["whh_b"].astype(jnp.float32), H, HP),
                    ((0, HP - H), (0, 0)))

    const2 = lambda k: (0, 0)
    kernel = functools.partial(_bilstm_kernel, Tc=Tc, BP=BP)
    out_f2, out_b2 = pl.pallas_call(
        kernel,
        grid=(K,),
        in_specs=[
            pl.BlockSpec((BP, 1), const2),                          # seq lengths
            pl.BlockSpec((Tc * BP, D), lambda k: (k, 0)),           # x, forward chunks
            pl.BlockSpec((Tc * BP, D), lambda k: (K - 1 - k, 0)),   # x, backward chunks
            pl.BlockSpec((D, G), const2),                           # W_ih fwd
            pl.BlockSpec((D, G), const2),                           # W_ih bwd
            pl.BlockSpec((1, G), const2),                           # bias fwd (b_ih+b_hh)
            pl.BlockSpec((1, G), const2),                           # bias bwd
            pl.BlockSpec((HP, G), const2),                          # W_hh fwd
            pl.BlockSpec((HP, G), const2),                          # W_hh bwd
        ],
        out_specs=[
            pl.BlockSpec((Tc * BP, HP), lambda k: (k, 0)),          # fwd hidden (lane-dense)
            pl.BlockSpec((Tc * BP, HP), lambda k: (K - 1 - k, 0)),  # bwd hidden (lane-dense)
        ],
        out_shape=[
            jax.ShapeDtypeStruct((T_pad * BP, HP), jnp.float32),
            jax.ShapeDtypeStruct((T_pad * BP, HP), jnp.float32),
        ],
        scratch_shapes=[
            pltpu.VMEM((Tc * BP, G), jnp.float32),   # fwd chunk pre-activations
            pltpu.VMEM((Tc * BP, G), jnp.float32),   # bwd chunk pre-activations
            pltpu.VMEM((BP, HP), jnp.float32),       # h fwd (carried across grid steps)
            pltpu.VMEM((BP, HP), jnp.float32),       # c fwd
            pltpu.VMEM((BP, HP), jnp.float32),       # h bwd
            pltpu.VMEM((BP, HP), jnp.float32),       # c bwd
        ],
        compiler_params=pltpu.CompilerParams(
            dimension_semantics=("arbitrary",),      # serial recurrence across time chunks
            vmem_limit_bytes=48 * 1024 * 1024,       # explicit budget (v7x-safe)
        ),
    )(lens, x2d, x2d, wih_f, wih_b, b_f, b_b, whh_f, whh_b)

    out_f = out_f2.reshape(T_pad, BP, HP)[:T, :B, :H]
    out_b = out_b2.reshape(T_pad, BP, HP)[:T, :B, :H]
    # Dropout is identity in eval mode.
    # TODO(synk): fold this transpose/concat into the consumer (extra HBM pass at scale).
    return jnp.transpose(jnp.concatenate([out_f, out_b], axis=-1), (1, 0, 2))  # (B, T, 2H)


# ----------------------------- pure numpy reference ------------------------------------

def _sigmoid(x):
    return 1.0 / (1.0 + np.exp(-x))


def _cell_ref(x, h, c, wih, whh, b, H):
    gates = x @ wih + h @ whh + b[0]
    i = _sigmoid(gates[0:H]); f = _sigmoid(gates[H:2 * H])
    g = np.tanh(gates[2 * H:3 * H]); o = _sigmoid(gates[3 * H:4 * H])
    c_new = f * c + i * g
    return o * np.tanh(c_new), c_new


def bilstm_encoder_ref(x, lens, params):
    x = np.asarray(x, np.float32)
    p = {k: np.asarray(v, np.float32) for k, v in params.items()}
    B, T, D = x.shape
    H = p["whh_f"].shape[0]
    out = np.zeros((B, T, 2 * H), np.float32)
    for b in range(B):
        L = int(lens[b])
        h = np.zeros(H, np.float32); c = np.zeros(H, np.float32)
        for t in range(L):
            h, c = _cell_ref(x[b, t], h, c, p["wih_f"], p["whh_f"], p["b_f"], H)
            out[b, t, :H] = h
        h = np.zeros(H, np.float32); c = np.zeros(H, np.float32)
        for t in range(L - 1, -1, -1):
            h, c = _cell_ref(x[b, t], h, c, p["wih_b"], p["whh_b"], p["b_b"], H)
            out[b, t, H:] = h
    return out


# ----------------------------- parameters / main ----------------------------------------

def init_params(key, input_dim, hidden_dim):
    H = hidden_dim // 2
    k = 1.0 / np.sqrt(H)  # PyTorch LSTM init scale
    ks = jax.random.split(key, 8)
    u = lambda kk, shape: jax.random.uniform(kk, shape, jnp.float32, minval=-k, maxval=k)
    return {
        "wih_f": u(ks[0], (input_dim, 4 * H)),
        "whh_f": u(ks[1], (H, 4 * H)),
        "b_f":   u(ks[2], (1, 4 * H)),
        "wih_b": u(ks[3], (input_dim, 4 * H)),
        "whh_b": u(ks[4], (H, 4 * H)),
        "b_b":   u(ks[5], (1, 4 * H)),
    }


if __name__ == "__main__":
    B, T, D, HIDDEN = 2, 8, 32, 64   # batch, num_sents, emb_size, hidden_dim

    key = jax.random.PRNGKey(0)
    kx, kp = jax.random.split(key)
    sent_rep = jax.random.normal(kx, (B, T, D), jnp.float32)
    seq_lens = jnp.array([8, 5], dtype=jnp.int32)   # max == T so padded output shape matches
    params = init_params(kp, D, HIDDEN)

    out = bilstm_encoder_pallas(sent_rep, seq_lens, params, time_chunk=4)
    out = jax.block_until_ready(out)

    ref = bilstm_encoder_ref(np.asarray(sent_rep), np.asarray(seq_lens), params)
    np.testing.assert_allclose(np.asarray(out), ref, atol=1e-4, rtol=1e-4)

    assert out.shape == (B, T, HIDDEN)
    print("KERNEL_OK")
</pallas_src>

<mosaic_0001>
module attributes {stable_mosaic.version = 11 : i64} {
  func.func @_bilstm_kernel(%arg0: i32, %arg1: memref<8x1xi32, #tpu.memory_space<vmem>>, %arg2: memref<32x32xf32, #tpu.memory_space<vmem>>, %arg3: memref<32x32xf32, #tpu.memory_space<vmem>>, %arg4: memref<32x512xf32, #tpu.memory_space<vmem>>, %arg5: memref<32x512xf32, #tpu.memory_space<vmem>>, %arg6: memref<1x512xf32, #tpu.memory_space<vmem>>, %arg7: memref<1x512xf32, #tpu.memory_space<vmem>>, %arg8: memref<128x512xf32, #tpu.memory_space<vmem>>, %arg9: memref<128x512xf32, #tpu.memory_space<vmem>>, %arg10: memref<32x128xf32, #tpu.memory_space<vmem>>, %arg11: memref<32x128xf32, #tpu.memory_space<vmem>>, %arg12: memref<32x512xf32, #tpu.memory_space<vmem>>, %arg13: memref<32x512xf32, #tpu.memory_space<vmem>>, %arg14: memref<8x128xf32, #tpu.memory_space<vmem>>, %arg15: memref<8x128xf32, #tpu.memory_space<vmem>>, %arg16: memref<8x128xf32, #tpu.memory_space<vmem>>, %arg17: memref<8x128xf32, #tpu.memory_space<vmem>>) attributes {dimension_semantics = [#tpu.dimension_semantics<arbitrary>], iteration_bounds = array<i64: 2>, scalar_prefetch = 0 : i64, scratch_operands = 6 : i64, tpu.core_type = #tpu.core_type<tc>, window_params = [{pipeline_mode = #tpu.pipeline_mode<synchronous>, transform_indices = @transform_0, window_bounds = array<i64: 8, 1>}, {transform_indices = @transform_1, window_bounds = array<i64: 32, 32>}, {transform_indices = @transform_2, window_bounds = array<i64: 32, 32>}, {pipeline_mode = #tpu.pipeline_mode<synchronous>, transform_indices = @transform_3, window_bounds = array<i64: 32, 512>}, {pipeline_mode = #tpu.pipeline_mode<synchronous>, transform_indices = @transform_4, window_bounds = array<i64: 32, 512>}, {pipeline_mode = #tpu.pipeline_mode<synchronous>, transform_indices = @transform_5, window_bounds = array<i64: 1, 512>}, {pipeline_mode = #tpu.pipeline_mode<synchronous>, transform_indices = @transform_6, window_bounds = array<i64: 1, 512>}, {pipeline_mode = #tpu.pipeline_mode<synchronous>, transform_indices = @transform_7, window_bounds = array<i64: 128, 512>}, {pipeline_mode = #tpu.pipeline_mode<synchronous>, transform_indices = @transform_8, window_bounds = array<i64: 128, 512>}, {transform_indices = @transform_9, window_bounds = array<i64: 32, 128>}, {transform_indices = @transform_10, window_bounds = array<i64: 32, 128>}]} {
    %c0_i32 = arith.constant 0 : i32
    %0 = arith.cmpi eq, %arg0, %c0_i32 : i32
    %1 = arith.extui %0 : i1 to i32
    %c0_i32_0 = arith.constant 0 : i32
    %2 = arith.cmpi ne, %1, %c0_i32_0 : i32
    scf.if %2 {
      %cst_122 = arith.constant 0.000000e+00 : f32
      %409 = vector.broadcast %cst_122 : f32 to vector<8x128xf32>
      %c0_123 = arith.constant 0 : index
      %c0_124 = arith.constant 0 : index
      %410 = vector.load %arg14[%c0_123, %c0_124] : memref<8x128xf32, #tpu.memory_space<vmem>>, vector<8x128xf32>
      tpu.vector_store %arg14[%c0_123, %c0_124], %409 {strides = array<i32>} : memref<8x128xf32, #tpu.memory_space<vmem>>, vector<8x128xf32>,
      %cst_125 = arith.constant 0.000000e+00 : f32
      %411 = vector.broadcast %cst_125 : f32 to vector<8x128xf32>
      %c0_126 = arith.constant 0 : index
      %c0_127 = arith.constant 0 : index
      %412 = vector.load %arg15[%c0_126, %c0_127] : memref<8x128xf32, #tpu.memory_space<vmem>>, vector<8x128xf32>
      tpu.vector_store %arg15[%c0_126, %c0_127], %411 {strides = array<i32>} : memref<8x128xf32, #tpu.memory_space<vmem>>, vector<8x128xf32>,
      %cst_128 = arith.constant 0.000000e+00 : f32
      %413 = vector.broadcast %cst_128 : f32 to vector<8x128xf32>
      %c0_129 = arith.constant 0 : index
      %c0_130 = arith.constant 0 : index
      %414 = vector.load %arg16[%c0_129, %c0_130] : memref<8x128xf32, #tpu.memory_space<vmem>>, vector<8x128xf32>
      tpu.vector_store %arg16[%c0_129, %c0_130], %413 {strides = array<i32>} : memref<8x128xf32, #tpu.memory_space<vmem>>, vector<8x128xf32>,
      %cst_131 = arith.constant 0.000000e+00 : f32
      %415 = vector.broadcast %cst_131 : f32 to vector<8x128xf32>
      %c0_132 = arith.constant 0 : index
      %c0_133 = arith.constant 0 : index
      %416 = vector.load %arg17[%c0_132, %c0_133] : memref<8x128xf32, #tpu.memory_space<vmem>>, vector<8x128xf32>
      tpu.vector_store %arg17[%c0_132, %c0_133], %415 {strides = array<i32>} : memref<8x128xf32, #tpu.memory_space<vmem>>, vector<8x128xf32>,
    } else {
    }
    %c0 = arith.constant 0 : index
    %c0_1 = arith.constant 0 : index
    %3 = vector.load %arg1[%c0, %c0_1] : memref<8x1xi32, #tpu.memory_space<vmem>>, vector<8x1xi32>
    %c0_2 = arith.constant 0 : index
    %c0_3 = arith.constant 0 : index
    %4 = vector.load %arg2[%c0_2, %c0_3] : memref<32x32xf32, #tpu.memory_space<vmem>>, vector<32x32xf32>
    %c0_4 = arith.constant 0 : index
    %c0_5 = arith.constant 0 : index
    %5 = vector.load %arg4[%c0_4, %c0_5] : memref<32x512xf32, #tpu.memory_space<vmem>>, vector<32x512xf32>
    %cst = arith.constant dense<0.000000e+00> : vector<32x512xf32>
    %6 = tpu.matmul %4, %5, %cst {dimension_numbers = #tpu.dot_dimension_numbers<[1], [0], [0], [1], [0, 0, 1, 1], [], []>} : vector<32x32xf32>, vector<32x512xf32>, vector<32x512xf32> -> vector<32x512xf32>
    %c0_6 = arith.constant 0 : index
    %c0_7 = arith.constant 0 : index
    %7 = vector.load %arg6[%c0_6, %c0_7] : memref<1x512xf32, #tpu.memory_space<vmem>>, vector<1x512xf32>
    %8 = vector.broadcast %7 : vector<1x512xf32> to vector<32x512xf32>
    %9 = arith.addf %6, %8 : vector<32x512xf32>
    %c0_8 = arith.constant 0 : index
    %c0_9 = arith.constant 0 : index
    %10 = vector.load %arg12[%c0_8, %c0_9] : memref<32x512xf32, #tpu.memory_space<vmem>>, vector<32x512xf32>
    tpu.vector_store %arg12[%c0_8, %c0_9], %9 {strides = array<i32>} : memref<32x512xf32, #tpu.memory_space<vmem>>, vector<32x512xf32>,
    %c0_10 = arith.constant 0 : index
    %c0_11 = arith.constant 0 : index
    %11 = vector.load %arg3[%c0_10, %c0_11] : memref<32x32xf32, #tpu.memory_space<vmem>>, vector<32x32xf32>
    %c0_12 = arith.constant 0 : index
    %c0_13 = arith.constant 0 : index
    %12 = vector.load %arg5[%c0_12, %c0_13] : memref<32x512xf32, #tpu.memory_space<vmem>>, vector<32x512xf32>
    %cst_14 = arith.constant dense<0.000000e+00> : vector<32x512xf32>
    %13 = tpu.matmul %11, %12, %cst_14 {dimension_numbers = #tpu.dot_dimension_numbers<[1], [0], [0], [1], [0, 0, 1, 1], [], []>} : vector<32x32xf32>, vector<32x512xf32>, vector<32x512xf32> -> vector<32x512xf32>
    %c0_15 = arith.constant 0 : index
    %c0_16 = arith.constant 0 : index
    %14 = vector.load %arg7[%c0_15, %c0_16] : memref<1x512xf32, #tpu.memory_space<vmem>>, vector<1x512xf32>
    %15 = vector.broadcast %14 : vector<1x512xf32> to vector<32x512xf32>
    %16 = arith.addf %13, %15 : vector<32x512xf32>
    %c0_17 = arith.constant 0 : index
    %c0_18 = arith.constant 0 : index
    %17 = vector.load %arg13[%c0_17, %c0_18] : memref<32x512xf32, #tpu.memory_space<vmem>>, vector<32x512xf32>
    tpu.vector_store %arg13[%c0_17, %c0_18], %16 {strides = array<i32>} : memref<32x512xf32, #tpu.memory_space<vmem>>, vector<32x512xf32>,
    %c4_i32 = arith.constant 4 : i32
    %18 = arith.muli %arg0, %c4_i32 : i32
    %c1_i32 = arith.constant 1 : i32
    %19 = arith.subi %c1_i32, %arg0 : i32
    %c4_i32_19 = arith.constant 4 : i32
    %20 = arith.muli %19, %c4_i32_19 : i32
    %c0_20 = arith.constant 0 : index
    %c0_21 = arith.constant 0 : index
    %21 = vector.load %arg14[%c0_20, %c0_21] : memref<8x128xf32, #tpu.memory_space<vmem>>, vector<8x128xf32>
    %c0_22 = arith.constant 0 : index
    %c0_23 = arith.constant 0 : index
    %22 = vector.load %arg15[%c0_22, %c0_23] : memref<8x128xf32, #tpu.memory_space<vmem>>, vector<8x128xf32>
    %c0_24 = arith.constant 0 : index
    %c0_25 = arith.constant 0 : index
    %23 = vector.load %arg16[%c0_24, %c0_25] : memref<8x128xf32, #tpu.memory_space<vmem>>, vector<8x128xf32>
    %c0_26 = arith.constant 0 : index
    %c0_27 = arith.constant 0 : index
    %24 = vector.load %arg17[%c0_26, %c0_27] : memref<8x128xf32, #tpu.memory_space<vmem>>, vector<8x128xf32>
    %c0_i32_28 = arith.constant 0 : i32
    %c8_i32 = arith.constant 8 : i32
    %25 = arith.muli %c0_i32_28, %c8_i32 : i32
    %26 = tpu.assume_multiple %25, 8 : i32
    %27 = arith.addi %18, %c0_i32_28 : i32
    %28 = vector.broadcast %27 : i32 to vector<8x1xi32>
    %29 = arith.cmpi sgt, %3, %28 : vector<8x1xi32>
    %30 = arith.index_cast %26 : i32 to index
    %c0_29 = arith.constant 0 : index
    %31 = vector.load %arg12[%30, %c0_29] : memref<32x512xf32, #tpu.memory_space<vmem>>, vector<8x512xf32>
    %c0_30 = arith.constant 0 : index
    %c0_31 = arith.constant 0 : index
    %32 = vector.load %arg8[%c0_30, %c0_31] : memref<128x512xf32, #tpu.memory_space<vmem>>, vector<128x512xf32>
    %cst_32 = arith.constant dense<0.000000e+00> : vector<8x512xf32>
    %33 = tpu.matmul %21, %32, %cst_32 {dimension_numbers = #tpu.dot_dimension_numbers<[1], [0], [0], [1], [0, 0, 1, 1], [], []>} : vector<8x128xf32>, vector<128x512xf32>, vector<8x512xf32> -> vector<8x512xf32>
    %34 = arith.addf %31, %33 : vector<8x512xf32>
    %35 = vector.extract_strided_slice %34 {offsets = [0, 0], sizes = [8, 128], strides = [1, 1]} : vector<8x512xf32> to vector<8x128xf32>
    %36 = arith.negf %35 : vector<8x128xf32>
    %37 = math.exp %36 : vector<8x128xf32>
    %cst_33 = arith.constant 1.000000e+00 : f32
    %38 = vector.broadcast %cst_33 : f32 to vector<8x128xf32>
    %39 = arith.addf %38, %37 : vector<8x128xf32>
    %40 = arith.divf %38, %39 : vector<8x128xf32>
    %41 = vector.extract_strided_slice %34 {offsets = [0, 128], sizes = [8, 128], strides = [1, 1]} : vector<8x512xf32> to vector<8x128xf32>
    %42 = arith.negf %41 : vector<8x128xf32>
    %43 = math.exp %42 : vector<8x128xf32>
    %cst_34 = arith.constant 1.000000e+00 : f32
    %44 = vector.broadcast %cst_34 : f32 to vector<8x128xf32>
    %45 = arith.addf %44, %43 : vector<8x128xf32>
    %46 = arith.divf %44, %45 : vector<8x128xf32>
    %47 = vector.extract_strided_slice %34 {offsets = [0, 256], sizes = [8, 128], strides = [1, 1]} : vector<8x512xf32> to vector<8x128xf32>
    %48 = math.tanh %47 : vector<8x128xf32>
    %49 = vector.extract_strided_slice %34 {offsets = [0, 384], sizes = [8, 128], strides = [1, 1]} : vector<8x512xf32> to vector<8x128xf32>
    %50 = arith.negf %49 : vector<8x128xf32>
    %51 = math.exp %50 : vector<8x128xf32>
    %cst_35 = arith.constant 1.000000e+00 : f32
    %52 = vector.broadcast %cst_35 : f32 to vector<8x128xf32>
    %53 = arith.addf %52, %51 : vector<8x128xf32>
    %54 = arith.divf %52, %53 : vector<8x128xf32>
    %55 = arith.mulf %46, %22 : vector<8x128xf32>
    %56 = arith.mulf %40, %48 : vector<8x128xf32>
    %57 = arith.addf %55, %56 : vector<8x128xf32>
    %58 = math.tanh %57 : vector<8x128xf32>
    %59 = arith.mulf %54, %58 : vector<8x128xf32>
    %60 = vector.shape_cast %29 : vector<8x1xi1> to vector<8x1xi1>
    %61 = vector.broadcast %60 : vector<8x1xi1> to vector<8x128xi1>
    %62 = arith.select %61, %59, %21 : vector<8x128xi1>, vector<8x128xf32>
    %63 = vector.shape_cast %29 : vector<8x1xi1> to vector<8x1xi1>
    %64 = vector.broadcast %63 : vector<8x1xi1> to vector<8x128xi1>
    %65 = arith.select %64, %57, %22 : vector<8x128xi1>, vector<8x128xf32>
    %cst_36 = arith.constant 0.000000e+00 : f32
    %66 = vector.shape_cast %29 : vector<8x1xi1> to vector<8x1xi1>
    %67 = vector.broadcast %66 : vector<8x1xi1> to vector<8x128xi1>
    %68 = vector.broadcast %cst_36 : f32 to vector<8x128xf32>
    %69 = arith.select %67, %62, %68 : vector<8x128xi1>, vector<8x128xf32>
    %70 = arith.index_cast %26 : i32 to index
    %c0_37 = arith.constant 0 : index
    %71 = vector.load %arg10[%70, %c0_37] : memref<32x128xf32, #tpu.memory_space<vmem>>, vector<8x128xf32>
    tpu.vector_store %arg10[%70, %c0_37], %69 {strides = array<i32>} : memref<32x128xf32, #tpu.memory_space<vmem>>, vector<8x128xf32>,
    %c3_i32 = arith.constant 3 : i32
    %72 = arith.subi %c3_i32, %c0_i32_28 : i32
    %c8_i32_38 = arith.constant 8 : i32
    %73 = arith.muli %72, %c8_i32_38 : i32
    %74 = tpu.assume_multiple %73, 8 : i32
    %75 = arith.addi %20, %72 : i32
    %76 = vector.broadcast %75 : i32 to vector<8x1xi32>
    %77 = arith.cmpi sgt, %3, %76 : vector<8x1xi32>
    %78 = arith.index_cast %74 : i32 to index
    %c0_39 = arith.constant 0 : index
    %79 = vector.load %arg13[%78, %c0_39] : memref<32x512xf32, #tpu.memory_space<vmem>>, vector<8x512xf32>
    %c0_40 = arith.constant 0 : index
    %c0_41 = arith.constant 0 : index
    %80 = vector.load %arg9[%c0_40, %c0_41] : memref<128x512xf32, #tpu.memory_space<vmem>>, vector<128x512xf32>
    %cst_42 = arith.constant dense<0.000000e+00> : vector<8x512xf32>
    %81 = tpu.matmul %23, %80, %cst_42 {dimension_numbers = #tpu.dot_dimension_numbers<[1], [0], [0], [1], [0, 0, 1, 1], [], []>} : vector<8x128xf32>, vector<128x512xf32>, vector<8x512xf32> -> vector<8x512xf32>
    %82 = arith.addf %79, %81 : vector<8x512xf32>
    %83 = vector.extract_strided_slice %82 {offsets = [0, 0], sizes = [8, 128], strides = [1, 1]} : vector<8x512xf32> to vector<8x128xf32>
    %84 = arith.negf %83 : vector<8x128xf32>
    %85 = math.exp %84 : vector<8x128xf32>
    %cst_43 = arith.constant 1.000000e+00 : f32
    %86 = vector.broadcast %cst_43 : f32 to vector<8x128xf32>
    %87 = arith.addf %86, %85 : vector<8x128xf32>
    %88 = arith.divf %86, %87 : vector<8x128xf32>
    %89 = vector.extract_strided_slice %82 {offsets = [0, 128], sizes = [8, 128], strides = [1, 1]} : vector<8x512xf32> to vector<8x128xf32>
    %90 = arith.negf %89 : vector<8x128xf32>
    %91 = math.exp %90 : vector<8x128xf32>
    %cst_44 = arith.constant 1.000000e+00 : f32
    %92 = vector.broadcast %cst_44 : f32 to vector<8x128xf32>
    %93 = arith.addf %92, %91 : vector<8x128xf32>
    %94 = arith.divf %92, %93 : vector<8x128xf32>
    %95 = vector.extract_strided_slice %82 {offsets = [0, 256], sizes = [8, 128], strides = [1, 1]} : vector<8x512xf32> to vector<8x128xf32>
    %96 = math.tanh %95 : vector<8x128xf32>
    %97 = vector.extract_strided_slice %82 {offsets = [0, 384], sizes = [8, 128], strides = [1, 1]} : vector<8x512xf32> to vector<8x128xf32>
    %98 = arith.negf %97 : vector<8x128xf32>
    %99 = math.exp %98 : vector<8x128xf32>
    %cst_45 = arith.constant 1.000000e+00 : f32
    %100 = vector.broadcast %cst_45 : f32 to vector<8x128xf32>
    %101 = arith.addf %100, %99 : vector<8x128xf32>
    %102 = arith.divf %100, %101 : vector<8x128xf32>
    %103 = arith.mulf %94, %24 : vector<8x128xf32>
    %104 = arith.mulf %88, %96 : vector<8x128xf32>
    %105 = arith.addf %103, %104 : vector<8x128xf32>
    %106 = math.tanh %105 : vector<8x128xf32>
    %107 = arith.mulf %102, %106 : vector<8x128xf32>
    %108 = vector.shape_cast %77 : vector<8x1xi1> to vector<8x1xi1>
    %109 = vector.broadcast %108 : vector<8x1xi1> to vector<8x128xi1>
    %110 = arith.select %109, %107, %23 : vector<8x128xi1>, vector<8x128xf32>
    %111 = vector.shape_cast %77 : vector<8x1xi1> to vector<8x1xi1>
    %112 = vector.broadcast %111 : vector<8x1xi1> to vector<8x128xi1>
    %113 = arith.select %112, %105, %24 : vector<8x128xi1>, vector<8x128xf32>
    %cst_46 = arith.constant 0.000000e+00 : f32
    %114 = vector.shape_cast %77 : vector<8x1xi1> to vector<8x1xi1>
    %115 = vector.broadcast %114 : vector<8x1xi1> to vector<8x128xi1>
    %116 = vector.broadcast %cst_46 : f32 to vector<8x128xf32>
    %117 = arith.select %115, %110, %116 : vector<8x128xi1>, vector<8x128xf32>
    %118 = arith.index_cast %74 : i32 to index
    %c0_47 = arith.constant 0 : index
    %119 = vector.load %arg11[%118, %c0_47] : memref<32x128xf32, #tpu.memory_space<vmem>>, vector<8x128xf32>
    tpu.vector_store %arg11[%118, %c0_47], %117 {strides = array<i32>} : memref<32x128xf32, #tpu.memory_space<vmem>>, vector<8x128xf32>,
    %c1_i32_48 = arith.constant 1 : i32
    %c8_i32_49 = arith.constant 8 : i32
    %120 = arith.muli %c1_i32_48, %c8_i32_49 : i32
    %121 = tpu.assume_multiple %120, 8 : i32
    %122 = arith.addi %18, %c1_i32_48 : i32
    %123 = vector.broadcast %122 : i32 to vector<8x1xi32>
    %124 = arith.cmpi sgt, %3, %123 : vector<8x1xi32>
    %125 = arith.index_cast %121 : i32 to index
    %c0_50 = arith.constant 0 : index
    %126 = vector.load %arg12[%125, %c0_50] : memref<32x512xf32, #tpu.memory_space<vmem>>, vector<8x512xf32>
    %c0_51 = arith.constant 0 : index
    %c0_52 = arith.constant 0 : index
    %127 = vector.load %arg8[%c0_51, %c0_52] : memref<128x512xf32, #tpu.memory_space<vmem>>, vector<128x512xf32>
    %cst_53 = arith.constant dense<0.000000e+00> : vector<8x512xf32>
    %128 = tpu.matmul %62, %127, %cst_53 {dimension_numbers = #tpu.dot_dimension_numbers<[1], [0], [0], [1], [0, 0, 1, 1], [], []>} : vector<8x128xf32>, vector<128x512xf32>, vector<8x512xf32> -> vector<8x512xf32>
    %129 = arith.addf %126, %128 : vector<8x512xf32>
    %130 = vector.extract_strided_slice %129 {offsets = [0, 0], sizes = [8, 128], strides = [1, 1]} : vector<8x512xf32> to vector<8x128xf32>
    %131 = arith.negf %130 : vector<8x128xf32>
    %132 = math.exp %131 : vector<8x128xf32>
    %cst_54 = arith.constant 1.000000e+00 : f32
    %133 = vector.broadcast %cst_54 : f32 to vector<8x128xf32>
    %134 = arith.addf %133, %132 : vector<8x128xf32>
    %135 = arith.divf %133, %134 : vector<8x128xf32>
    %136 = vector.extract_strided_slice %129 {offsets = [0, 128], sizes = [8, 128], strides = [1, 1]} : vector<8x512xf32> to vector<8x128xf32>
    %137 = arith.negf %136 : vector<8x128xf32>
    %138 = math.exp %137 : vector<8x128xf32>
    %cst_55 = arith.constant 1.000000e+00 : f32
    %139 = vector.broadcast %cst_55 : f32 to vector<8x128xf32>
    %140 = arith.addf %139, %138 : vector<8x128xf32>
    %141 = arith.divf %139, %140 : vector<8x128xf32>
    %142 = vector.extract_strided_slice %129 {offsets = [0, 256], sizes = [8, 128], strides = [1, 1]} : vector<8x512xf32> to vector<8x128xf32>
    %143 = math.tanh %142 : vector<8x128xf32>
    %144 = vector.extract_strided_slice %129 {offsets = [0, 384], sizes = [8, 128], strides = [1, 1]} : vector<8x512xf32> to vector<8x128xf32>
    %145 = arith.negf %144 : vector<8x128xf32>
    %146 = math.exp %145 : vector<8x128xf32>
    %cst_56 = arith.constant 1.000000e+00 : f32
    %147 = vector.broadcast %cst_56 : f32 to vector<8x128xf32>
    %148 = arith.addf %147, %146 : vector<8x128xf32>
    %149 = arith.divf %147, %148 : vector<8x128xf32>
    %150 = arith.mulf %141, %65 : vector<8x128xf32>
    %151 = arith.mulf %135, %143 : vector<8x128xf32>
    %152 = arith.addf %150, %151 : vector<8x128xf32>
    %153 = math.tanh %152 : vector<8x128xf32>
    %154 = arith.mulf %149, %153 : vector<8x128xf32>
    %155 = vector.shape_cast %124 : vector<8x1xi1> to vector<8x1xi1>
    %156 = vector.broadcast %155 : vector<8x1xi1> to vector<8x128xi1>
    %157 = arith.select %156, %154, %62 : vector<8x128xi1>, vector<8x128xf32>
    %158 = vector.shape_cast %124 : vector<8x1xi1> to vector<8x1xi1>
    %159 = vector.broadcast %158 : vector<8x1xi1> to vector<8x128xi1>
    %160 = arith.select %159, %152, %65 : vector<8x128xi1>, vector<8x128xf32>
    %cst_57 = arith.constant 0.000000e+00 : f32
    %161 = vector.shape_cast %124 : vector<8x1xi1> to vector<8x1xi1>
    %162 = vector.broadcast %161 : vector<8x1xi1> to vector<8x128xi1>
    %163 = vector.broadcast %cst_57 : f32 to vector<8x128xf32>
    %164 = arith.select %162, %157, %163 : vector<8x128xi1>, vector<8x128xf32>
    %165 = arith.index_cast %121 : i32 to index
    %c0_58 = arith.constant 0 : index
    %166 = vector.load %arg10[%165, %c0_58] : memref<32x128xf32, #tpu.memory_space<vmem>>, vector<8x128xf32>
    tpu.vector_store %arg10[%165, %c0_58], %164 {strides = array<i32>} : memref<32x128xf32, #tpu.memory_space<vmem>>, vector<8x128xf32>,
    %c3_i32_59 = arith.constant 3 : i32
    %167 = arith.subi %c3_i32_59, %c1_i32_48 : i32
    %c8_i32_60 = arith.constant 8 : i32
    %168 = arith.muli %167, %c8_i32_60 : i32
    %169 = tpu.assume_multiple %168, 8 : i32
    %170 = arith.addi %20, %167 : i32
    %171 = vector.broadcast %170 : i32 to vector<8x1xi32>
    %172 = arith.cmpi sgt, %3, %171 : vector<8x1xi32>
    %173 = arith.index_cast %169 : i32 to index
    %c0_61 = arith.constant 0 : index
    %174 = vector.load %arg13[%173, %c0_61] : memref<32x512xf32, #tpu.memory_space<vmem>>, vector<8x512xf32>
    %c0_62 = arith.constant 0 : index
    %c0_63 = arith.constant 0 : index
    %175 = vector.load %arg9[%c0_62, %c0_63] : memref<128x512xf32, #tpu.memory_space<vmem>>, vector<128x512xf32>
    %cst_64 = arith.constant dense<0.000000e+00> : vector<8x512xf32>
    %176 = tpu.matmul %110, %175, %cst_64 {dimension_numbers = #tpu.dot_dimension_numbers<[1], [0], [0], [1], [0, 0, 1, 1], [], []>} : vector<8x128xf32>, vector<128x512xf32>, vector<8x512xf32> -> vector<8x512xf32>
    %177 = arith.addf %174, %176 : vector<8x512xf32>
    %178 = vector.extract_strided_slice %177 {offsets = [0, 0], sizes = [8, 128], strides = [1, 1]} : vector<8x512xf32> to vector<8x128xf32>
    %179 = arith.negf %178 : vector<8x128xf32>
    %180 = math.exp %179 : vector<8x128xf32>
    %cst_65 = arith.constant 1.000000e+00 : f32
    %181 = vector.broadcast %cst_65 : f32 to vector<8x128xf32>
    %182 = arith.addf %181, %180 : vector<8x128xf32>
    %183 = arith.divf %181, %182 : vector<8x128xf32>
    %184 = vector.extract_strided_slice %177 {offsets = [0, 128], sizes = [8, 128], strides = [1, 1]} : vector<8x512xf32> to vector<8x128xf32>
    %185 = arith.negf %184 : vector<8x128xf32>
    %186 = math.exp %185 : vector<8x128xf32>
    %cst_66 = arith.constant 1.000000e+00 : f32
    %187 = vector.broadcast %cst_66 : f32 to vector<8x128xf32>
    %188 = arith.addf %187, %186 : vector<8x128xf32>
    %189 = arith.divf %187, %188 : vector<8x128xf32>
    %190 = vector.extract_strided_slice %177 {offsets = [0, 256], sizes = [8, 128], strides = [1, 1]} : vector<8x512xf32> to vector<8x128xf32>
    %191 = math.tanh %190 : vector<8x128xf32>
    %192 = vector.extract_strided_slice %177 {offsets = [0, 384], sizes = [8, 128], strides = [1, 1]} : vector<8x512xf32> to vector<8x128xf32>
    %193 = arith.negf %192 : vector<8x128xf32>
    %194 = math.exp %193 : vector<8x128xf32>
    %cst_67 = arith.constant 1.000000e+00 : f32
    %195 = vector.broadcast %cst_67 : f32 to vector<8x128xf32>
    %196 = arith.addf %195, %194 : vector<8x128xf32>
    %197 = arith.divf %195, %196 : vector<8x128xf32>
    %198 = arith.mulf %189, %113 : vector<8x128xf32>
    %199 = arith.mulf %183, %191 : vector<8x128xf32>
    %200 = arith.addf %198, %199 : vector<8x128xf32>
    %201 = math.tanh %200 : vector<8x128xf32>
    %202 = arith.mulf %197, %201 : vector<8x128xf32>
    %203 = vector.shape_cast %172 : vector<8x1xi1> to vector<8x1xi1>
    %204 = vector.broadcast %203 : vector<8x1xi1> to vector<8x128xi1>
    %205 = arith.select %204, %202, %110 : vector<8x128xi1>, vector<8x128xf32>
    %206 = vector.shape_cast %172 : vector<8x1xi1> to vector<8x1xi1>
    %207 = vector.broadcast %206 : vector<8x1xi1> to vector<8x128xi1>
    %208 = arith.select %207, %200, %113 : vector<8x128xi1>, vector<8x128xf32>
    %cst_68 = arith.constant 0.000000e+00 : f32
    %209 = vector.shape_cast %172 : vector<8x1xi1> to vector<8x1xi1>
    %210 = vector.broadcast %209 : vector<8x1xi1> to vector<8x128xi1>
    %211 = vector.broadcast %cst_68 : f32 to vector<8x128xf32>
    %212 = arith.select %210, %205, %211 : vector<8x128xi1>, vector<8x128xf32>
    %213 = arith.index_cast %169 : i32 to index
    %c0_69 = arith.constant 0 : index
    %214 = vector.load %arg11[%213, %c0_69] : memref<32x128xf32, #tpu.memory_space<vmem>>, vector<8x128xf32>
    tpu.vector_store %arg11[%213, %c0_69], %212 {strides = array<i32>} : memref<32x128xf32, #tpu.memory_space<vmem>>, vector<8x128xf32>,
    %c2_i32 = arith.constant 2 : i32
    %c8_i32_70 = arith.constant 8 : i32
    %215 = arith.muli %c2_i32, %c8_i32_70 : i32
    %216 = tpu.assume_multiple %215, 8 : i32
    %217 = arith.addi %18, %c2_i32 : i32
    %218 = vector.broadcast %217 : i32 to vector<8x1xi32>
    %219 = arith.cmpi sgt, %3, %218 : vector<8x1xi32>
    %220 = arith.index_cast %216 : i32 to index
    %c0_71 = arith.constant 0 : index
    %221 = vector.load %arg12[%220, %c0_71] : memref<32x512xf32, #tpu.memory_space<vmem>>, vector<8x512xf32>
    %c0_72 = arith.constant 0 : index
    %c0_73 = arith.constant 0 : index
    %222 = vector.load %arg8[%c0_72, %c0_73] : memref<128x512xf32, #tpu.memory_space<vmem>>, vector<128x512xf32>
    %cst_74 = arith.constant dense<0.000000e+00> : vector<8x512xf32>
    %223 = tpu.matmul %157, %222, %cst_74 {dimension_numbers = #tpu.dot_dimension_numbers<[1], [0], [0], [1], [0, 0, 1, 1], [], []>} : vector<8x128xf32>, vector<128x512xf32>, vector<8x512xf32> -> vector<8x512xf32>
    %224 = arith.addf %221, %223 : vector<8x512xf32>
    %225 = vector.extract_strided_slice %224 {offsets = [0, 0], sizes = [8, 128], strides = [1, 1]} : vector<8x512xf32> to vector<8x128xf32>
    %226 = arith.negf %225 : vector<8x128xf32>
    %227 = math.exp %226 : vector<8x128xf32>
    %cst_75 = arith.constant 1.000000e+00 : f32
    %228 = vector.broadcast %cst_75 : f32 to vector<8x128xf32>
    %229 = arith.addf %228, %227 : vector<8x128xf32>
    %230 = arith.divf %228, %229 : vector<8x128xf32>
    %231 = vector.extract_strided_slice %224 {offsets = [0, 128], sizes = [8, 128], strides = [1, 1]} : vector<8x512xf32> to vector<8x128xf32>
    %232 = arith.negf %231 : vector<8x128xf32>
    %233 = math.exp %232 : vector<8x128xf32>
    %cst_76 = arith.constant 1.000000e+00 : f32
    %234 = vector.broadcast %cst_76 : f32 to vector<8x128xf32>
    %235 = arith.addf %234, %233 : vector<8x128xf32>
    %236 = arith.divf %234, %235 : vector<8x128xf32>
    %237 = vector.extract_strided_slice %224 {offsets = [0, 256], sizes = [8, 128], strides = [1, 1]} : vector<8x512xf32> to vector<8x128xf32>
    %238 = math.tanh %237 : vector<8x128xf32>
    %239 = vector.extract_strided_slice %224 {offsets = [0, 384], sizes = [8, 128], strides = [1, 1]} : vector<8x512xf32> to vector<8x128xf32>
    %240 = arith.negf %239 : vector<8x128xf32>
    %241 = math.exp %240 : vector<8x128xf32>
    %cst_77 = arith.constant 1.000000e+00 : f32
    %242 = vector.broadcast %cst_77 : f32 to vector<8x128xf32>
    %243 = arith.addf %242, %241 : vector<8x128xf32>
    %244 = arith.divf %242, %243 : vector<8x128xf32>
    %245 = arith.mulf %236, %160 : vector<8x128xf32>
    %246 = arith.mulf %230, %238 : vector<8x128xf32>
    %247 = arith.addf %245, %246 : vector<8x128xf32>
    %248 = math.tanh %247 : vector<8x128xf32>
    %249 = arith.mulf %244, %248 : vector<8x128xf32>
    %250 = vector.shape_cast %219 : vector<8x1xi1> to vector<8x1xi1>
    %251 = vector.broadcast %250 : vector<8x1xi1> to vector<8x128xi1>
    %252 = arith.select %251, %249, %157 : vector<8x128xi1>, vector<8x128xf32>
    %253 = vector.shape_cast %219 : vector<8x1xi1> to vector<8x1xi1>
    %254 = vector.broadcast %253 : vector<8x1xi1> to vector<8x128xi1>
    %255 = arith.select %254, %247, %160 : vector<8x128xi1>, vector<8x128xf32>
    %cst_78 = arith.constant 0.000000e+00 : f32
    %256 = vector.shape_cast %219 : vector<8x1xi1> to vector<8x1xi1>
    %257 = vector.broadcast %256 : vector<8x1xi1> to vector<8x128xi1>
    %258 = vector.broadcast %cst_78 : f32 to vector<8x128xf32>
    %259 = arith.select %257, %252, %258 : vector<8x128xi1>, vector<8x128xf32>
    %260 = arith.index_cast %216 : i32 to index
    %c0_79 = arith.constant 0 : index
    %261 = vector.load %arg10[%260, %c0_79] : memref<32x128xf32, #tpu.memory_space<vmem>>, vector<8x128xf32>
    tpu.vector_store %arg10[%260, %c0_79], %259 {strides = array<i32>} : memref<32x128xf32, #tpu.memory_space<vmem>>, vector<8x128xf32>,
    %c3_i32_80 = arith.constant 3 : i32
    %262 = arith.subi %c3_i32_80, %c2_i32 : i32
    %c8_i32_81 = arith.constant 8 : i32
    %263 = arith.muli %262, %c8_i32_81 : i32
    %264 = tpu.assume_multiple %263, 8 : i32
    %265 = arith.addi %20, %262 : i32
    %266 = vector.broadcast %265 : i32 to vector<8x1xi32>
    %267 = arith.cmpi sgt, %3, %266 : vector<8x1xi32>
    %268 = arith.index_cast %264 : i32 to index
    %c0_82 = arith.constant 0 : index
    %269 = vector.load %arg13[%268, %c0_82] : memref<32x512xf32, #tpu.memory_space<vmem>>, vector<8x512xf32>
    %c0_83 = arith.constant 0 : index
    %c0_84 = arith.constant 0 : index
    %270 = vector.load %arg9[%c0_83, %c0_84] : memref<128x512xf32, #tpu.memory_space<vmem>>, vector<128x512xf32>
    %cst_85 = arith.constant dense<0.000000e+00> : vector<8x512xf32>
    %271 = tpu.matmul %205, %270, %cst_85 {dimension_numbers = #tpu.dot_dimension_numbers<[1], [0], [0], [1], [0, 0, 1, 1], [], []>} : vector<8x128xf32>, vector<128x512xf32>, vector<8x512xf32> -> vector<8x512xf32>
    %272 = arith.addf %269, %271 : vector<8x512xf32>
    %273 = vector.extract_strided_slice %272 {offsets = [0, 0], sizes = [8, 128], strides = [1, 1]} : vector<8x512xf32> to vector<8x128xf32>
    %274 = arith.negf %273 : vector<8x128xf32>
    %275 = math.exp %274 : vector<8x128xf32>
    %cst_86 = arith.constant 1.000000e+00 : f32
    %276 = vector.broadcast %cst_86 : f32 to vector<8x128xf32>
    %277 = arith.addf %276, %275 : vector<8x128xf32>
    %278 = arith.divf %276, %277 : vector<8x128xf32>
    %279 = vector.extract_strided_slice %272 {offsets = [0, 128], sizes = [8, 128], strides = [1, 1]} : vector<8x512xf32> to vector<8x128xf32>
    %280 = arith.negf %279 : vector<8x128xf32>
    %281 = math.exp %280 : vector<8x128xf32>
    %cst_87 = arith.constant 1.000000e+00 : f32
    %282 = vector.broadcast %cst_87 : f32 to vector<8x128xf32>
    %283 = arith.addf %282, %281 : vector<8x128xf32>
    %284 = arith.divf %282, %283 : vector<8x128xf32>
    %285 = vector.extract_strided_slice %272 {offsets = [0, 256], sizes = [8, 128], strides = [1, 1]} : vector<8x512xf32> to vector<8x128xf32>
    %286 = math.tanh %285 : vector<8x128xf32>
    %287 = vector.extract_strided_slice %272 {offsets = [0, 384], sizes = [8, 128], strides = [1, 1]} : vector<8x512xf32> to vector<8x128xf32>
    %288 = arith.negf %287 : vector<8x128xf32>
    %289 = math.exp %288 : vector<8x128xf32>
    %cst_88 = arith.constant 1.000000e+00 : f32
    %290 = vector.broadcast %cst_88 : f32 to vector<8x128xf32>
    %291 = arith.addf %290, %289 : vector<8x128xf32>
    %292 = arith.divf %290, %291 : vector<8x128xf32>
    %293 = arith.mulf %284, %208 : vector<8x128xf32>
    %294 = arith.mulf %278, %286 : vector<8x128xf32>
    %295 = arith.addf %293, %294 : vector<8x128xf32>
    %296 = math.tanh %295 : vector<8x128xf32>
    %297 = arith.mulf %292, %296 : vector<8x128xf32>
    %298 = vector.shape_cast %267 : vector<8x1xi1> to vector<8x1xi1>
    %299 = vector.broadcast %298 : vector<8x1xi1> to vector<8x128xi1>
    %300 = arith.select %299, %297, %205 : vector<8x128xi1>, vector<8x128xf32>
    %301 = vector.shape_cast %267 : vector<8x1xi1> to vector<8x1xi1>
    %302 = vector.broadcast %301 : vector<8x1xi1> to vector<8x128xi1>
    %303 = arith.select %302, %295, %208 : vector<8x128xi1>, vector<8x128xf32>
    %cst_89 = arith.constant 0.000000e+00 : f32
    %304 = vector.shape_cast %267 : vector<8x1xi1> to vector<8x1xi1>
    %305 = vector.broadcast %304 : vector<8x1xi1> to vector<8x128xi1>
    %306 = vector.broadcast %cst_89 : f32 to vector<8x128xf32>
    %307 = arith.select %305, %300, %306 : vector<8x128xi1>, vector<8x128xf32>
    %308 = arith.index_cast %264 : i32 to index
    %c0_90 = arith.constant 0 : index
    %309 = vector.load %arg11[%308, %c0_90] : memref<32x128xf32, #tpu.memory_space<vmem>>, vector<8x128xf32>
    tpu.vector_store %arg11[%308, %c0_90], %307 {strides = array<i32>} : memref<32x128xf32, #tpu.memory_space<vmem>>, vector<8x128xf32>,
    %c3_i32_91 = arith.constant 3 : i32
    %c8_i32_92 = arith.constant 8 : i32
    %310 = arith.muli %c3_i32_91, %c8_i32_92 : i32
    %311 = tpu.assume_multiple %310, 8 : i32
    %312 = arith.addi %18, %c3_i32_91 : i32
    %313 = vector.broadcast %312 : i32 to vector<8x1xi32>
    %314 = arith.cmpi sgt, %3, %313 : vector<8x1xi32>
    %315 = arith.index_cast %311 : i32 to index
    %c0_93 = arith.constant 0 : index
    %316 = vector.load %arg12[%315, %c0_93] : memref<32x512xf32, #tpu.memory_space<vmem>>, vector<8x512xf32>
    %c0_94 = arith.constant 0 : index
    %c0_95 = arith.constant 0 : index
    %317 = vector.load %arg8[%c0_94, %c0_95] : memref<128x512xf32, #tpu.memory_space<vmem>>, vector<128x512xf32>
    %cst_96 = arith.constant dense<0.000000e+00> : vector<8x512xf32>
    %318 = tpu.matmul %252, %317, %cst_96 {dimension_numbers = #tpu.dot_dimension_numbers<[1], [0], [0], [1], [0, 0, 1, 1], [], []>} : vector<8x128xf32>, vector<128x512xf32>, vector<8x512xf32> -> vector<8x512xf32>
    %319 = arith.addf %316, %318 : vector<8x512xf32>
    %320 = vector.extract_strided_slice %319 {offsets = [0, 0], sizes = [8, 128], strides = [1, 1]} : vector<8x512xf32> to vector<8x128xf32>
    %321 = arith.negf %320 : vector<8x128xf32>
    %322 = math.exp %321 : vector<8x128xf32>
    %cst_97 = arith.constant 1.000000e+00 : f32
    %323 = vector.broadcast %cst_97 : f32 to vector<8x128xf32>
    %324 = arith.addf %323, %322 : vector<8x128xf32>
    %325 = arith.divf %323, %324 : vector<8x128xf32>
    %326 = vector.extract_strided_slice %319 {offsets = [0, 128], sizes = [8, 128], strides = [1, 1]} : vector<8x512xf32> to vector<8x128xf32>
    %327 = arith.negf %326 : vector<8x128xf32>
    %328 = math.exp %327 : vector<8x128xf32>
    %cst_98 = arith.constant 1.000000e+00 : f32
    %329 = vector.broadcast %cst_98 : f32 to vector<8x128xf32>
    %330 = arith.addf %329, %328 : vector<8x128xf32>
    %331 = arith.divf %329, %330 : vector<8x128xf32>
    %332 = vector.extract_strided_slice %319 {offsets = [0, 256], sizes = [8, 128], strides = [1, 1]} : vector<8x512xf32> to vector<8x128xf32>
    %333 = math.tanh %332 : vector<8x128xf32>
    %334 = vector.extract_strided_slice %319 {offsets = [0, 384], sizes = [8, 128], strides = [1, 1]} : vector<8x512xf32> to vector<8x128xf32>
    %335 = arith.negf %334 : vector<8x128xf32>
    %336 = math.exp %335 : vector<8x128xf32>
    %cst_99 = arith.constant 1.000000e+00 : f32
    %337 = vector.broadcast %cst_99 : f32 to vector<8x128xf32>
    %338 = arith.addf %337, %336 : vector<8x128xf32>
    %339 = arith.divf %337, %338 : vector<8x128xf32>
    %340 = arith.mulf %331, %255 : vector<8x128xf32>
    %341 = arith.mulf %325, %333 : vector<8x128xf32>
    %342 = arith.addf %340, %341 : vector<8x128xf32>
    %343 = math.tanh %342 : vector<8x128xf32>
    %344 = arith.mulf %339, %343 : vector<8x128xf32>
    %345 = vector.shape_cast %314 : vector<8x1xi1> to vector<8x1xi1>
    %346 = vector.broadcast %345 : vector<8x1xi1> to vector<8x128xi1>
    %347 = arith.select %346, %344, %252 : vector<8x128xi1>, vector<8x128xf32>
    %348 = vector.shape_cast %314 : vector<8x1xi1> to vector<8x1xi1>
    %349 = vector.broadcast %348 : vector<8x1xi1> to vector<8x128xi1>
    %350 = arith.select %349, %342, %255 : vector<8x128xi1>, vector<8x128xf32>
    %cst_100 = arith.constant 0.000000e+00 : f32
    %351 = vector.shape_cast %314 : vector<8x1xi1> to vector<8x1xi1>
    %352 = vector.broadcast %351 : vector<8x1xi1> to vector<8x128xi1>
    %353 = vector.broadcast %cst_100 : f32 to vector<8x128xf32>
    %354 = arith.select %352, %347, %353 : vector<8x128xi1>, vector<8x128xf32>
    %355 = arith.index_cast %311 : i32 to index
    %c0_101 = arith.constant 0 : index
    %356 = vector.load %arg10[%355, %c0_101] : memref<32x128xf32, #tpu.memory_space<vmem>>, vector<8x128xf32>
    tpu.vector_store %arg10[%355, %c0_101], %354 {strides = array<i32>} : memref<32x128xf32, #tpu.memory_space<vmem>>, vector<8x128xf32>,
    %c3_i32_102 = arith.constant 3 : i32
    %357 = arith.subi %c3_i32_102, %c3_i32_91 : i32
    %c8_i32_103 = arith.constant 8 : i32
    %358 = arith.muli %357, %c8_i32_103 : i32
    %359 = tpu.assume_multiple %358, 8 : i32
    %360 = arith.addi %20, %357 : i32
    %361 = vector.broadcast %360 : i32 to vector<8x1xi32>
    %362 = arith.cmpi sgt, %3, %361 : vector<8x1xi32>
    %363 = arith.index_cast %359 : i32 to index
    %c0_104 = arith.constant 0 : index
    %364 = vector.load %arg13[%363, %c0_104] : memref<32x512xf32, #tpu.memory_space<vmem>>, vector<8x512xf32>
    %c0_105 = arith.constant 0 : index
    %c0_106 = arith.constant 0 : index
    %365 = vector.load %arg9[%c0_105, %c0_106] : memref<128x512xf32, #tpu.memory_space<vmem>>, vector<128x512xf32>
    %cst_107 = arith.constant dense<0.000000e+00> : vector<8x512xf32>
    %366 = tpu.matmul %300, %365, %cst_107 {dimension_numbers = #tpu.dot_dimension_numbers<[1], [0], [0], [1], [0, 0, 1, 1], [], []>} : vector<8x128xf32>, vector<128x512xf32>, vector<8x512xf32> -> vector<8x512xf32>
    %367 = arith.addf %364, %366 : vector<8x512xf32>
    %368 = vector.extract_strided_slice %367 {offsets = [0, 0], sizes = [8, 128], strides = [1, 1]} : vector<8x512xf32> to vector<8x128xf32>
    %369 = arith.negf %368 : vector<8x128xf32>
    %370 = math.exp %369 : vector<8x128xf32>
    %cst_108 = arith.constant 1.000000e+00 : f32
    %371 = vector.broadcast %cst_108 : f32 to vector<8x128xf32>
    %372 = arith.addf %371, %370 : vector<8x128xf32>
    %373 = arith.divf %371, %372 : vector<8x128xf32>
    %374 = vector.extract_strided_slice %367 {offsets = [0, 128], sizes = [8, 128], strides = [1, 1]} : vector<8x512xf32> to vector<8x128xf32>
    %375 = arith.negf %374 : vector<8x128xf32>
    %376 = math.exp %375 : vector<8x128xf32>
    %cst_109 = arith.constant 1.000000e+00 : f32
    %377 = vector.broadcast %cst_109 : f32 to vector<8x128xf32>
    %378 = arith.addf %377, %376 : vector<8x128xf32>
    %379 = arith.divf %377, %378 : vector<8x128xf32>
    %380 = vector.extract_strided_slice %367 {offsets = [0, 256], sizes = [8, 128], strides = [1, 1]} : vector<8x512xf32> to vector<8x128xf32>
    %381 = math.tanh %380 : vector<8x128xf32>
    %382 = vector.extract_strided_slice %367 {offsets = [0, 384], sizes = [8, 128], strides = [1, 1]} : vector<8x512xf32> to vector<8x128xf32>
    %383 = arith.negf %382 : vector<8x128xf32>
    %384 = math.exp %383 : vector<8x128xf32>
    %cst_110 = arith.constant 1.000000e+00 : f32
    %385 = vector.broadcast %cst_110 : f32 to vector<8x128xf32>
    %386 = arith.addf %385, %384 : vector<8x128xf32>
    %387 = arith.divf %385, %386 : vector<8x128xf32>
    %388 = arith.mulf %379, %303 : vector<8x128xf32>
    %389 = arith.mulf %373, %381 : vector<8x128xf32>
    %390 = arith.addf %388, %389 : vector<8x128xf32>
    %391 = math.tanh %390 : vector<8x128xf32>
    %392 = arith.mulf %387, %391 : vector<8x128xf32>
    %393 = vector.shape_cast %362 : vector<8x1xi1> to vector<8x1xi1>
    %394 = vector.broadcast %393 : vector<8x1xi1> to vector<8x128xi1>
    %395 = arith.select %394, %392, %300 : vector<8x128xi1>, vector<8x128xf32>
    %396 = vector.shape_cast %362 : vector<8x1xi1> to vector<8x1xi1>
    %397 = vector.broadcast %396 : vector<8x1xi1> to vector<8x128xi1>
    %398 = arith.select %397, %390, %303 : vector<8x128xi1>, vector<8x128xf32>
    %cst_111 = arith.constant 0.000000e+00 : f32
    %399 = vector.shape_cast %362 : vector<8x1xi1> to vector<8x1xi1>
    %400 = vector.broadcast %399 : vector<8x1xi1> to vector<8x128xi1>
    %401 = vector.broadcast %cst_111 : f32 to vector<8x128xf32>
    %402 = arith.select %400, %395, %401 : vector<8x128xi1>, vector<8x128xf32>
    %403 = arith.index_cast %359 : i32 to index
    %c0_112 = arith.constant 0 : index
    %404 = vector.load %arg11[%403, %c0_112] : memref<32x128xf32, #tpu.memory_space<vmem>>, vector<8x128xf32>
    tpu.vector_store %arg11[%403, %c0_112], %402 {strides = array<i32>} : memref<32x128xf32, #tpu.memory_space<vmem>>, vector<8x128xf32>,
    %c4_i32_113 = arith.constant 4 : i32
    %c0_114 = arith.constant 0 : index
    %c0_115 = arith.constant 0 : index
    %405 = vector.load %arg14[%c0_114, %c0_115] : memref<8x128xf32, #tpu.memory_space<vmem>>, vector<8x128xf32>
    tpu.vector_store %arg14[%c0_114, %c0_115], %347 {strides = array<i32>} : memref<8x128xf32, #tpu.memory_space<vmem>>, vector<8x128xf32>,
    %c0_116 = arith.constant 0 : index
    %c0_117 = arith.constant 0 : index
    %406 = vector.load %arg15[%c0_116, %c0_117] : memref<8x128xf32, #tpu.memory_space<vmem>>, vector<8x128xf32>
    tpu.vector_store %arg15[%c0_116, %c0_117], %350 {strides = array<i32>} : memref<8x128xf32, #tpu.memory_space<vmem>>, vector<8x128xf32>,
    %c0_118 = arith.constant 0 : index
    %c0_119 = arith.constant 0 : index
    %407 = vector.load %arg16[%c0_118, %c0_119] : memref<8x128xf32, #tpu.memory_space<vmem>>, vector<8x128xf32>
    tpu.vector_store %arg16[%c0_118, %c0_119], %395 {strides = array<i32>} : memref<8x128xf32, #tpu.memory_space<vmem>>, vector<8x128xf32>,
    %c0_120 = arith.constant 0 : index
    %c0_121 = arith.constant 0 : index
    %408 = vector.load %arg17[%c0_120, %c0_121] : memref<8x128xf32, #tpu.memory_space<vmem>>, vector<8x128xf32>
    tpu.vector_store %arg17[%c0_120, %c0_121], %398 {strides = array<i32>} : memref<8x128xf32, #tpu.memory_space<vmem>>, vector<8x128xf32>,
    return
  }
  func.func @transform_0(%arg0: i32) -> (i32, i32) {
    %c0_i32 = arith.constant 0 : i32
    %c0_i32_0 = arith.constant 0 : i32
    %c0_i32_1 = arith.constant 0 : i32
    return %c0_i32, %c0_i32_0 : i32, i32
  }
  func.func @transform_1(%arg0: i32) -> (i32, i32) {
    %c0_i32 = arith.constant 0 : i32
    %c0_i32_0 = arith.constant 0 : i32
    return %arg0, %c0_i32 : i32, i32
  }
  func.func @transform_2(%arg0: i32) -> (i32, i32) {
    %c1_i32 = arith.constant 1 : i32
    %0 = arith.subi %c1_i32, %arg0 : i32
    %c0_i32 = arith.constant 0 : i32
    %c0_i32_0 = arith.constant 0 : i32
    return %0, %c0_i32 : i32, i32
  }
  func.func @transform_3(%arg0: i32) -> (i32, i32) {
    %c0_i32 = arith.constant 0 : i32
    %c0_i32_0 = arith.constant 0 : i32
    %c0_i32_1 = arith.constant 0 : i32
    return %c0_i32, %c0_i32_0 : i32, i32
  }
  func.func @transform_4(%arg0: i32) -> (i32, i32) {
    %c0_i32 = arith.constant 0 : i32
    %c0_i32_0 = arith.constant 0 : i32
    %c0_i32_1 = arith.constant 0 : i32
    return %c0_i32, %c0_i32_0 : i32, i32
  }
  func.func @transform_5(%arg0: i32) -> (i32, i32) {
    %c0_i32 = arith.constant 0 : i32
    %c0_i32_0 = arith.constant 0 : i32
    %c0_i32_1 = arith.constant 0 : i32
    return %c0_i32, %c0_i32_0 : i32, i32
  }
  func.func @transform_6(%arg0: i32) -> (i32, i32) {
    %c0_i32 = arith.constant 0 : i32
    %c0_i32_0 = arith.constant 0 : i32
    %c0_i32_1 = arith.constant 0 : i32
    return %c0_i32, %c0_i32_0 : i32, i32
  }
  func.func @transform_7(%arg0: i32) -> (i32, i32) {
    %c0_i32 = arith.constant 0 : i32
    %c0_i32_0 = arith.constant 0 : i32
    %c0_i32_1 = arith.constant 0 : i32
    return %c0_i32, %c0_i32_0 : i32, i32
  }
  func.func @transform_8(%arg0: i32) -> (i32, i32) {
    %c0_i32 = arith.constant 0 : i32
    %c0_i32_0 = arith.constant 0 : i32
    %c0_i32_1 = arith.constant 0 : i32
    return %c0_i32, %c0_i32_0 : i32, i32
  }
  func.func @transform_9(%arg0: i32) -> (i32, i32) {
    %c0_i32 = arith.constant 0 : i32
    %c0_i32_0 = arith.constant 0 : i32
    return %arg0, %c0_i32 : i32, i32
  }
  func.func @transform_10(%arg0: i32) -> (i32, i32) {
    %c1_i32 = arith.constant 1 : i32
    %0 = arith.subi %c1_i32, %arg0 : i32
    %c0_i32 = arith.constant 0 : i32
    %c0_i32_0 = arith.constant 0 : i32
    return %0, %c0_i32 : i32, i32
  }
}

</mosaic_0001>

<llo_original>
// kernel: tpu_custom_call.1
$region0: #{tpu_custom_call.1}
  #allocation0 [shape = 'u32[]', space=smem, size = 0x4, offset = 0x4, fixed_abs, tag = 'smem constant byte address 0x4 - core index']
  #allocation1 [shape = 'u32[72,128]{1,0:T(1,128)}', space=vmem, size = 0x9000, scoped, tag = 'internal scratch']
  #allocation2 [shape = 'f32[32,512]{1,0:T(8,128)}', space=vmem, size = 0x10000, scoped, tag = 'scratch operand']
  #allocation3 [shape = 'f32[32,512]{1,0:T(8,128)}', space=vmem, size = 0x10000, scoped, tag = 'scratch operand']
  #allocation4 [shape = 'f32[8,128]{1,0:T(8,128)}', space=vmem, size = 0x1000, scoped, tag = 'scratch operand']
  #allocation5 [shape = 'f32[8,128]{1,0:T(8,128)}', space=vmem, size = 0x1000, scoped, tag = 'scratch operand']
  #allocation6 [shape = 'f32[8,128]{1,0:T(8,128)}', space=vmem, size = 0x1000, scoped, tag = 'scratch operand']
  #allocation7 [shape = 'f32[8,128]{1,0:T(8,128)}', space=vmem, size = 0x1000, scoped, tag = 'scratch operand']
  %s0 = inlined_call_operand.vmem [shape: s32[8,1], index: 0, kind: input, shape index: {}]
  %s1 = inlined_call_operand.vmem [shape: f32[64,32], index: 1, kind: input, shape index: {}]
  %s2 = inlined_call_operand.vmem [shape: f32[64,32], index: 2, kind: input, shape index: {}]
  %s3 = inlined_call_operand.vmem [shape: f32[32,512], index: 3, kind: input, shape index: {}]
  %s4 = inlined_call_operand.hbm [shape: f32[32,512], index: 4, kind: input, shape index: {}]
  %s5 = inlined_call_operand.vmem [shape: f32[1,512], index: 5, kind: input, shape index: {}]
  %s6 = inlined_call_operand.vmem [shape: f32[1,512], index: 6, kind: input, shape index: {}]
  %s7 = inlined_call_operand.hbm [shape: f32[128,512], index: 7, kind: input, shape index: {}]
  %s8 = inlined_call_operand.hbm [shape: f32[128,512], index: 8, kind: input, shape index: {}]
  %s9 = inlined_call_operand.hbm [shape: f32[64,128], index: 9, kind: output, shape index: {0}]
  %s10 = inlined_call_operand.hbm [shape: f32[64,128], index: 10, kind: output, shape index: {1}]
  %11 = xla_tuple %s9, %s10
  %s12 = sld [smem:[#allocation0]]
  $region93: #{tpu_custom_call.1} parent=0
    _
  %s14 = ssub.s32 1, %s12
  %s15 = scalar_select 0, %s14, %s12
  $region1: #{tpu_custom_call.1} parent=0
    #allocation8 [shape = 'u8[65536]{0}', space=vmem, size = 0x10000, scoped, tag = 'input window, operand 4, single buffered']
    #allocation9 [shape = 's32[2]{0}', space=sflag, size = 0x8, scoped, tag = 'scoped memory for tpu_custom_call.1']
    #allocation10 [shape = 's32[2]{0}', space=sflag, size = 0x8, scoped, tag = 'scoped memory for tpu_custom_call.1']
    #allocation11 [shape = 'u8[262144]{0}', space=vmem, size = 0x40000, scoped, tag = 'input window, operand 7, single buffered']
    #allocation12 [shape = 's32[1]{0}', space=sflag, size = 0x4, scoped, tag = 'scoped memory for tpu_custom_call.1']
    #allocation13 [shape = 'u8[262144]{0}', space=vmem, size = 0x40000, scoped, tag = 'input window, operand 8, single buffered']
    #allocation14 [shape = 'u8[32768]{0}', space=vmem, size = 0x8000, scoped, tag = 'output window, operand 0']
    #allocation15 [shape = 'u8[32768]{0}', space=vmem, size = 0x8000, scoped, tag = 'output window, operand 1']
    #allocation16 [shape = 's32[2]{0}', space=sflag, size = 0x8, scoped, tag = 'scoped memory for tpu_custom_call.1']
    %16 = vsyncpa [#allocation9], 0
    %17 = vsyncpa [#allocation12], 0
    %18 = vsyncpa [#allocation10], 0
    %s19 = scalar_lea.sflag [#allocation10], 1
    %20 = vsyncpa %s19, 0
    %21 = vsyncpa [#allocation16], 0
    %s22 = scalar_lea.sflag [#allocation16], 1
    %23 = vsyncpa %s22, 0
    loop: start=0, step=1, limit=4
    $region2: #{tpu_custom_call.1} parent=1 // loop_pre_header
      _
    $region3: #{tpu_custom_call.1} parent=1 // loop_header
      %s25 = sphi 0, %s29
      %p26 = scmp.ge.s32.totalorder %s25, 4
      %s33 = sphi 0, %s33
      %s35 = sphi 0, %s33
      %s36 = sphi 0, %s35
      %s50 = sphi 0, %s36
      %s56 = sphi 0, %s58
      %s59 = sphi 0, %s56
      %s60 = sphi 0, %s59
      %s76 = sphi 0, %s60
      %s84 = sphi 0, %s86
      %s87 = sphi 0, %s84
      %s88 = sphi 0, %s87
      %s104 = sphi 0, %s88
      %s108 = sphi 0, %s108
      %s110 = sphi 0, %s108
      %s111 = sphi 0, %s110
      %s125 = sphi 0, %s111
      %s129 = sphi 0, %s129
      %s131 = sphi 0, %s129
      %s132 = sphi 0, %s131
      %s146 = sphi 0, %s132
      %s150 = sphi 0, %s150
      %s152 = sphi 0, %s150
      %s153 = sphi 0, %s152
      %s167 = sphi 0, %s153
      %s171 = sphi 0, %s171
      %s173 = sphi 0, %s171
      %s174 = sphi 0, %s173
      %s188 = sphi 0, %s174
      %s192 = sphi 0, %s192
      %s194 = sphi 0, %s192
      %s195 = sphi 0, %s194
      %s209 = sphi 0, %s195
      %s213 = sphi 0, %s213
      %s215 = sphi 0, %s213
      %s216 = sphi 0, %s215
      %s230 = sphi 0, %s216
      %s236 = sphi 0, %s238
      %s239 = sphi 0, %s236
      %s240 = sphi 0, %s239
      %s256 = sphi 0, %s240
      %s264 = sphi 0, %s266
      %s267 = sphi 0, %s264
      %s268 = sphi 0, %s267
      %s284 = sphi 0, %s268
    $region4: #{tpu_custom_call.1} parent=1 // loop_header_branch
      %28 = sbr.rel (%p26) target = $region8
    $region5: #{tpu_custom_call.1} parent=1 // loop_body
      %s30 = ssub.s32 %s25, 1
      %s31 = ssub.s32 %s25, 2
      %s32 = sadd.s32 %s25, 1
      %s34 = sadd.s32 %s33, 1
      %p37 = scmp.eq.s32.totalorder %s25, 1
      %p38 = scmp.ne.s32.totalorder %s33, %s35
      %p39 = scmp.eq.s32.totalorder %s25, 0
      %p40 = por %p38, %p39
      %p41 = scmp.ne.s32.totalorder %s33, %s35
      %p42 = scmp.eq.s32.totalorder %s30, 1
      %p43 = por %p41, %p42
      %p44 = scmp.ne.s32.totalorder %s35, %s36
      %p45 = scmp.eq.s32.totalorder %s30, 0
      %p46 = por %p44, %p45
      %p47 = scmp.ne.s32.totalorder %s35, %s36
      %p48 = scmp.eq.s32.totalorder %s31, 1
      %p49 = por %p47, %p48
      %p51 = scmp.ne.s32.totalorder %s36, %s50
      %p52 = scmp.eq.s32.totalorder %s31, 0
      %p53 = por %p51, %p52
      %s54 = ssub.s32 %s25, %s32
      %p55 = scmp.eq.s32.totalorder %s54, 0
      %s57 = sadd.s32 %s56, 1
      %s58 = scalar_select %p55, %s56, %s57
      %p61 = pneg %p55
      %p62 = scmp.eq.s32.totalorder %s25, 1
      %p63 = por %p61, %p62
      %p64 = scmp.ne.s32.totalorder %s56, %s59
      %p65 = scmp.eq.s32.totalorder %s25, 0
      %p66 = por %p64, %p65
      %p67 = scmp.ne.s32.totalorder %s56, %s59
      %p68 = scmp.eq.s32.totalorder %s30, 1
      %p69 = por %p67, %p68
      %p70 = scmp.ne.s32.totalorder %s59, %s60
      %p71 = scmp.eq.s32.totalorder %s30, 0
      %p72 = por %p70, %p71
      %p73 = scmp.ne.s32.totalorder %s59, %s60
      %p74 = scmp.eq.s32.totalorder %s31, 1
      %p75 = por %p73, %p74
      %p77 = scmp.ne.s32.totalorder %s60, %s76
      %p78 = scmp.eq.s32.totalorder %s31, 0
      %p79 = por %p77, %p78
      %s80 = ssub.s32 1, %s25
      %s81 = ssub.s32 1, %s32
      %s82 = ssub.s32 %s80, %s81
      %p83 = scmp.eq.s32.totalorder %s82, 0
      %s85 = sadd.s32 %s84, 1
      %s86 = scalar_select %p83, %s84, %s85
      %p89 = pneg %p83
      %p90 = scmp.eq.s32.totalorder %s25, 1
      %p91 = por %p89, %p90
      %p92 = scmp.ne.s32.totalorder %s84, %s87
      %p93 = scmp.eq.s32.totalorder %s25, 0
      %p94 = por %p92, %p93
      %p95 = scmp.ne.s32.totalorder %s84, %s87
      %p96 = scmp.eq.s32.totalorder %s30, 1
      %p97 = por %p95, %p96
      %p98 = scmp.ne.s32.totalorder %s87, %s88
      %p99 = scmp.eq.s32.totalorder %s30, 0
      %p100 = por %p98, %p99
      %p101 = scmp.ne.s32.totalorder %s87, %s88
      %p102 = scmp.eq.s32.totalorder %s31, 1
      %p103 = por %p101, %p102
      %p105 = scmp.ne.s32.totalorder %s88, %s104
      %p106 = scmp.eq.s32.totalorder %s31, 0
      %p107 = por %p105, %p106
      %s109 = sadd.s32 %s108, 1
      %p112 = scmp.eq.s32.totalorder %s25, 1
      %p113 = scmp.ne.s32.totalorder %s108, %s110
      %p114 = scmp.eq.s32.totalorder %s25, 0
      %p115 = por %p113, %p114
      %p116 = scmp.ne.s32.totalorder %s108, %s110
      %p117 = scmp.eq.s32.totalorder %s30, 1
      %p118 = por %p116, %p117
      %p119 = scmp.ne.s32.totalorder %s110, %s111
      %p120 = scmp.eq.s32.totalorder %s30, 0
      %p121 = por %p119, %p120
      %p122 = scmp.ne.s32.totalorder %s110, %s111
      %p123 = scmp.eq.s32.totalorder %s31, 1
      %p124 = por %p122, %p123
      %p126 = scmp.ne.s32.totalorder %s111, %s125
      %p127 = scmp.eq.s32.totalorder %s31, 0
      %p128 = por %p126, %p127
      %s130 = sadd.s32 %s129, 1
      %p133 = scmp.eq.s32.totalorder %s25, 1
      %p134 = scmp.ne.s32.totalorder %s129, %s131
      %p135 = scmp.eq.s32.totalorder %s25, 0
      %p136 = por %p134, %p135
      %p137 = scmp.ne.s32.totalorder %s129, %s131
      %p138 = scmp.eq.s32.totalorder %s30, 1
      %p139 = por %p137, %p138
      %p140 = scmp.ne.s32.totalorder %s131, %s132
      %p141 = scmp.eq.s32.totalorder %s30, 0
      %p142 = por %p140, %p141
      %p143 = scmp.ne.s32.totalorder %s131, %s132
      %p144 = scmp.eq.s32.totalorder %s31, 1
      %p145 = por %p143, %p144
      %p147 = scmp.ne.s32.totalorder %s132, %s146
      %p148 = scmp.eq.s32.totalorder %s31, 0
      %p149 = por %p147, %p148
      %s151 = sadd.s32 %s150, 1
      %p154 = scmp.eq.s32.totalorder %s25, 1
      %p155 = scmp.ne.s32.totalorder %s150, %s152
      %p156 = scmp.eq.s32.totalorder %s25, 0
      %p157 = por %p155, %p156
      %p158 = scmp.ne.s32.totalorder %s150, %s152
      %p159 = scmp.eq.s32.totalorder %s30, 1
      %p160 = por %p158, %p159
      %p161 = scmp.ne.s32.totalorder %s152, %s153
      %p162 = scmp.eq.s32.totalorder %s30, 0
      %p163 = por %p161, %p162
      %p164 = scmp.ne.s32.totalorder %s152, %s153
      %p165 = scmp.eq.s32.totalorder %s31, 1
      %p166 = por %p164, %p165
      %p168 = scmp.ne.s32.totalorder %s153, %s167
      %p169 = scmp.eq.s32.totalorder %s31, 0
      %p170 = por %p168, %p169
      %s172 = sadd.s32 %s171, 1
      %p175 = scmp.eq.s32.totalorder %s25, 1
      %p176 = scmp.ne.s32.totalorder %s171, %s173
      %p177 = scmp.eq.s32.totalorder %s25, 0
      %p178 = por %p176, %p177
      %p179 = scmp.ne.s32.totalorder %s171, %s173
      %p180 = scmp.eq.s32.totalorder %s30, 1
      %p181 = por %p179, %p180
      %p182 = scmp.ne.s32.totalorder %s173, %s174
      %p183 = scmp.eq.s32.totalorder %s30, 0
      %p184 = por %p182, %p183
      %p185 = scmp.ne.s32.totalorder %s173, %s174
      %p186 = scmp.eq.s32.totalorder %s31, 1
      %p187 = por %p185, %p186
      %p189 = scmp.ne.s32.totalorder %s174, %s188
      %p190 = scmp.eq.s32.totalorder %s31, 0
      %p191 = por %p189, %p190
      %s193 = sadd.s32 %s192, 1
      %p196 = scmp.eq.s32.totalorder %s25, 1
      %p197 = scmp.ne.s32.totalorder %s192, %s194
      %p198 = scmp.eq.s32.totalorder %s25, 0
      %p199 = por %p197, %p198
      %p200 = scmp.ne.s32.totalorder %s192, %s194
      %p201 = scmp.eq.s32.totalorder %s30, 1
      %p202 = por %p200, %p201
      %p203 = scmp.ne.s32.totalorder %s194, %s195
      %p204 = scmp.eq.s32.totalorder %s30, 0
      %p205 = por %p203, %p204
      %p206 = scmp.ne.s32.totalorder %s194, %s195
      %p207 = scmp.eq.s32.totalorder %s31, 1
      %p208 = por %p206, %p207
      %p210 = scmp.ne.s32.totalorder %s195, %s209
      %p211 = scmp.eq.s32.totalorder %s31, 0
      %p212 = por %p210, %p211
      %s214 = sadd.s32 %s213, 1
      %p217 = scmp.eq.s32.totalorder %s25, 1
      %p218 = scmp.ne.s32.totalorder %s213, %s215
      %p219 = scmp.eq.s32.totalorder %s25, 0
      %p220 = por %p218, %p219
      %p221 = scmp.ne.s32.totalorder %s213, %s215
      %p222 = scmp.eq.s32.totalorder %s30, 1
      %p223 = por %p221, %p222
      %p224 = scmp.ne.s32.totalorder %s215, %s216
      %p225 = scmp.eq.s32.totalorder %s30, 0
      %p226 = por %p224, %p225
      %p227 = scmp.ne.s32.totalorder %s215, %s216
      %p228 = scmp.eq.s32.totalorder %s31, 1
      %p229 = por %p227, %p228
      %p231 = scmp.ne.s32.totalorder %s216, %s230
      %p232 = scmp.eq.s32.totalorder %s31, 0
      %p233 = por %p231, %p232
      %s234 = ssub.s32 %s25, %s32
      %p235 = scmp.eq.s32.totalorder %s234, 0
      %s237 = sadd.s32 %s236, 1
      %s238 = scalar_select %p235, %s236, %s237
      %p241 = pneg %p235
      %p242 = scmp.eq.s32.totalorder %s25, 1
      %p243 = por %p241, %p242
      %p244 = scmp.ne.s32.totalorder %s236, %s239
      %p245 = scmp.eq.s32.totalorder %s25, 0
      %p246 = por %p244, %p245
      %p247 = scmp.ne.s32.totalorder %s236, %s239
      %p248 = scmp.eq.s32.totalorder %s30, 1
      %p249 = por %p247, %p248
      %p250 = scmp.ne.s32.totalorder %s239, %s240
      %p251 = scmp.eq.s32.totalorder %s30, 0
      %p252 = por %p250, %p251
      %p253 = scmp.ne.s32.totalorder %s239, %s240
      %p254 = scmp.eq.s32.totalorder %s31, 1
      %p255 = por %p253, %p254
      %p257 = scmp.ne.s32.totalorder %s240, %s256
      %p258 = scmp.eq.s32.totalorder %s31, 0
      %p259 = por %p257, %p258
      %s260 = ssub.s32 1, %s25
      %s261 = ssub.s32 1, %s32
      %s262 = ssub.s32 %s260, %s261
      %p263 = scmp.eq.s32.totalorder %s262, 0
      %s265 = sadd.s32 %s264, 1
      %s266 = scalar_select %p263, %s264, %s265
      %p269 = pneg %p263
      %p270 = scmp.eq.s32.totalorder %s25, 1
      %p271 = por %p269, %p270
      %p272 = scmp.ne.s32.totalorder %s264, %s267
      %p273 = scmp.eq.s32.totalorder %s25, 0
      %p274 = por %p272, %p273
      %p275 = scmp.ne.s32.totalorder %s264, %s267
      %p276 = scmp.eq.s32.totalorder %s30, 1
      %p277 = por %p275, %p276
      %p278 = scmp.ne.s32.totalorder %s267, %s268
      %p279 = scmp.eq.s32.totalorder %s30, 0
      %p280 = por %p278, %p279
      %p281 = scmp.ne.s32.totalorder %s267, %s268
      %p282 = scmp.eq.s32.totalorder %s31, 1
      %p283 = por %p281, %p282
      %p285 = scmp.ne.s32.totalorder %s268, %s284
      %p286 = scmp.eq.s32.totalorder %s31, 0
      %p287 = por %p285, %p286
      %p288 = scmp.le.s32.totalorder 1, %s25
      %p289 = scmp.lt.s32.totalorder %s25, 3
      %p290 = pnand %p288, %p289
      %p291 = pneg %p290
      // Predicated region
      $region9: #{tpu_custom_call.1} parent=5 // pred_check
        _
      $region10: #{tpu_custom_call.1} parent=5 // pred_check_branch
        %293 = sbr.rel (%p290) target = $region12
      $region11: #{tpu_custom_call.1} parent=5 // pred_region
        %s294 = ssub.s32 %s25, 1
        // Predicated region
        $region13: #{tpu_custom_call.1} parent=11 // pred_check
          %p295 = pneg %p46
        $region14: #{tpu_custom_call.1} parent=11 // pred_check_branch
          %297 = sbr.rel (%p295) target = $region16
        $region15: #{tpu_custom_call.1} parent=11 // pred_region
          _
        $region16: #{tpu_custom_call.1} parent=11 // pred_fallthru
          _
        // Predicated region
        $region17: #{tpu_custom_call.1} parent=11 // pred_check
          %p298 = pneg %p121
        $region18: #{tpu_custom_call.1} parent=11 // pred_check_branch
          %300 = sbr.rel (%p298) target = $region20
        $region19: #{tpu_custom_call.1} parent=11 // pred_region
          _
        $region20: #{tpu_custom_call.1} parent=11 // pred_fallthru
          _
        // Predicated region
        $region21: #{tpu_custom_call.1} parent=11 // pred_check
          %p301 = pneg %p142
        $region22: #{tpu_custom_call.1} parent=11 // pred_check_branch
          %303 = sbr.rel (%p301) target = $region24
        $region23: #{tpu_custom_call.1} parent=11 // pred_region
          %305 = vsyncadd [#allocation9], 0
          %s306 = sshll.u32 %s4, 4
          %s307 = int_to_ptr.hbm [resolvable:$true] %s306
          %s308 = sshll.u32 [#allocation8], 4
          %s309 = int_to_ptr.vmem [resolvable:$true] %s308
          %314 = dma.hbm_to_vmem [thread:$0]  %s307, 2048, %s309, [#allocation9], 512, 512, 32
        $region24: #{tpu_custom_call.1} parent=11 // pred_fallthru
          _
        // Predicated region
        $region25: #{tpu_custom_call.1} parent=11 // pred_check
          %p315 = pneg %p163
        $region26: #{tpu_custom_call.1} parent=11 // pred_check_branch
          %317 = sbr.rel (%p315) target = $region28
        $region27: #{tpu_custom_call.1} parent=11 // pred_region
          _
        $region28: #{tpu_custom_call.1} parent=11 // pred_fallthru
          _
        // Predicated region
        $region29: #{tpu_custom_call.1} parent=11 // pred_check
          %p318 = pneg %p184
        $region30: #{tpu_custom_call.1} parent=11 // pred_check_branch
          %320 = sbr.rel (%p318) target = $region32
        $region31: #{tpu_custom_call.1} parent=11 // pred_region
          _
        $region32: #{tpu_custom_call.1} parent=11 // pred_fallthru
          _
        // Predicated region
        $region33: #{tpu_custom_call.1} parent=11 // pred_check
          %p321 = pneg %p205
        $region34: #{tpu_custom_call.1} parent=11 // pred_check_branch
          %323 = sbr.rel (%p321) target = $region36
        $region35: #{tpu_custom_call.1} parent=11 // pred_region
          %325 = vsyncadd [#allocation12], 0
          %s326 = sshll.u32 %s7, 4
          %s327 = int_to_ptr.hbm [resolvable:$true] %s326
          %s328 = sshll.u32 [#allocation11], 4
          %s329 = int_to_ptr.vmem [resolvable:$true] %s328
          %334 = dma.hbm_to_vmem [thread:$0]  %s327, 8192, %s329, [#allocation12], 512, 512, 32
        $region36: #{tpu_custom_call.1} parent=11 // pred_fallthru
          _
        // Predicated region
        $region37: #{tpu_custom_call.1} parent=11 // pred_check
          %p335 = pneg %p226
        $region38: #{tpu_custom_call.1} parent=11 // pred_check_branch
          %337 = sbr.rel (%p335) target = $region40
        $region39: #{tpu_custom_call.1} parent=11 // pred_region
          %339 = vsyncadd [#allocation12], 0
          %s340 = sshll.u32 %s8, 4
          %s341 = int_to_ptr.hbm [resolvable:$true] %s340
          %s342 = sshll.u32 [#allocation13], 4
          %s343 = int_to_ptr.vmem [resolvable:$true] %s342
          %348 = dma.hbm_to_vmem [thread:$0]  %s341, 8192, %s343, [#allocation12], 512, 512, 32
        $region40: #{tpu_custom_call.1} parent=11 // pred_fallthru
          _
      $region12: #{tpu_custom_call.1} parent=5 // pred_fallthru
        _
      %p349 = scmp.lt.s32.totalorder %s25, 2
      // Predicated region
      $region41: #{tpu_custom_call.1} parent=5 // pred_check
        %p350 = pneg %p349
      $region42: #{tpu_custom_call.1} parent=5 // pred_check_branch
        %352 = sbr.rel (%p350) target = $region44
      $region43: #{tpu_custom_call.1} parent=5 // pred_region
        // Predicated region
        $region45: #{tpu_custom_call.1} parent=43 // pred_check
          %p353 = pneg %p66
        $region46: #{tpu_custom_call.1} parent=43 // pred_check_branch
          %355 = sbr.rel (%p353) target = $region48
        $region47: #{tpu_custom_call.1} parent=43 // pred_region
          %s356 = smul.u32 4, %s25
          %p357 = scmp.lt.s32.totalorder %s356, 7
          %s358 = scalar_select %p357, %s356, 7
          %s359 = smul.addr %s358, 8
          %s360 = scalar_lea.vmem %s1, %s359
          %s361 = smul.u32 4, %s25
        $region48: #{tpu_custom_call.1} parent=43 // pred_fallthru
          _
        // Predicated region
        $region49: #{tpu_custom_call.1} parent=43 // pred_check
          %p362 = pneg %p94
        $region50: #{tpu_custom_call.1} parent=43 // pred_check_branch
          %364 = sbr.rel (%p362) target = $region52
        $region51: #{tpu_custom_call.1} parent=43 // pred_region
          %s365 = ssub.s32 1, %s25
          %s366 = smul.u32 4, %s365
          %p367 = scmp.lt.s32.totalorder %s366, 7
          %s368 = scalar_select %p367, %s366, 7
          %s369 = smul.addr %s368, 8
          %s370 = scalar_lea.vmem %s2, %s369
          %s371 = ssub.s32 1, %s25
          %s372 = smul.u32 4, %s371
        $region52: #{tpu_custom_call.1} parent=43 // pred_fallthru
          _
      $region44: #{tpu_custom_call.1} parent=5 // pred_fallthru
        _
      %p373 = scmp.le.s32.totalorder 1, %s25
      %p374 = scmp.lt.s32.totalorder %s25, 3
      %p375 = pnand %p373, %p374
      %p376 = pneg %p375
      // Predicated region
      $region53: #{tpu_custom_call.1} parent=5 // pred_check
        _
      $region54: #{tpu_custom_call.1} parent=5 // pred_check_branch
        %378 = sbr.rel (%p375) target = $region56
      $region55: #{tpu_custom_call.1} parent=5 // pred_region
        %s379 = ssub.s32 %s25, 1
        // Predicated region
        $region57: #{tpu_custom_call.1} parent=55 // pred_check
          %p380 = pneg %p142
        $region58: #{tpu_custom_call.1} parent=55 // pred_check_branch
          %382 = sbr.rel (%p380) target = $region60
        $region59: #{tpu_custom_call.1} parent=55 // pred_region
          %384 = dma.done [#allocation9], 2048
        $region60: #{tpu_custom_call.1} parent=55 // pred_fallthru
          _
        // Predicated region
        $region61: #{tpu_custom_call.1} parent=55 // pred_check
          %p385 = pneg %p205
        $region62: #{tpu_custom_call.1} parent=55 // pred_check_branch
          %387 = sbr.rel (%p385) target = $region64
        $region63: #{tpu_custom_call.1} parent=55 // pred_region
          %389 = dma.done [#allocation12], 8192
        $region64: #{tpu_custom_call.1} parent=55 // pred_fallthru
          _
        // Predicated region
        $region65: #{tpu_custom_call.1} parent=55 // pred_check
          %p390 = pneg %p226
        $region66: #{tpu_custom_call.1} parent=55 // pred_check_branch
          %392 = sbr.rel (%p390) target = $region68
        $region67: #{tpu_custom_call.1} parent=55 // pred_region
          %394 = dma.done [#allocation12], 8192
        $region68: #{tpu_custom_call.1} parent=55 // pred_fallthru
          _
        %p395 = pneg %p46
        %p396 = pneg %p43
        %s397 = smul.u32 4, %s30
        %p398 = scmp.lt.s32.totalorder %s397, 7
        %s399 = scalar_select %p398, %s397, 7
        %s400 = smul.addr %s399, 8
        %s401 = scalar_lea.vmem %s1, %s400
        %p402 = pneg %p72
        %p403 = pneg %p69
        %s404 = ssub.s32 1, %s30
        %s405 = smul.u32 4, %s404
        %p406 = scmp.lt.s32.totalorder %s405, 7
        %s407 = scalar_select %p406, %s405, 7
        %s408 = smul.addr %s407, 8
        %s409 = scalar_lea.vmem %s2, %s408
        %p410 = pneg %p100
        %p411 = pneg %p97
        %p412 = pneg %p121
        %p413 = pneg %p118
        %p414 = pneg %p142
        %p415 = pneg %p139
        %p416 = pneg %p163
        %p417 = pneg %p160
        %p418 = pneg %p184
        %p419 = pneg %p181
        %p420 = pneg %p205
        %p421 = pneg %p202
        %p422 = pneg %p226
        %p423 = pneg %p223
        %p424 = pneg %p252
        %p425 = pneg %p249
        %s426 = sand.u32 %s239, 1
        %s427 = scalar_lea.sflag [#allocation10], %s426
        %s428 = sand.u32 %s239, 1
        %s429 = smul.addr %s428, 32
        %s430 = scalar_lea.vmem [#allocation14], %s429
        %p431 = pneg %p280
        %p432 = pneg %p277
        %s433 = sand.u32 %s267, 1
        %s434 = scalar_lea.sflag [#allocation16], %s433
        %s435 = sand.u32 %s267, 1
        %s436 = smul.addr %s435, 32
        %s437 = scalar_lea.vmem [#allocation15], %s436
        %s438 = smul.u32 4, %s30
        %p439 = scmp.lt.s32.totalorder %s438, 7
        %s440 = scalar_select %p439, %s438, 7
        %s441 = smul.addr %s440, 8
        %s442 = scalar_lea.vmem %s1, %s441
        %s443 = smul.u32 4, %s30
        %s444 = ssub.s32 1, %s30
        %s445 = smul.u32 4, %s444
        %p446 = scmp.lt.s32.totalorder %s445, 7
        %s447 = scalar_select %p446, %s445, 7
        %s448 = smul.addr %s447, 8
        %s449 = scalar_lea.vmem %s2, %s448
        %s450 = ssub.s32 1, %s30
        %s451 = smul.u32 4, %s450
        %s452 = smul.u32 4, %s30
        %s453 = ssub.s32 1, %s30
        %s454 = smul.u32 4, %s453
        %p455 = scmp.eq.s32.totalorder %s30, 0
        // Predicated region
        $region69: #{tpu_custom_call.1} parent=55 // pred_check
          %p456 = pneg %p455
        $region70: #{tpu_custom_call.1} parent=55 // pred_check_branch
          %458 = sbr.rel (%p456) target = $region72
        $region71: #{tpu_custom_call.1} parent=55 // pred_region
          %459 = vst [vmem:[#allocation4] sm:$0xff] 0.0
          %460 = vst [vmem:[#allocation5] sm:$0xff] 0.0
          %461 = vst [vmem:[#allocation6] sm:$0xff] 0.0
          %462 = vst [vmem:[#allocation7] sm:$0xff] 0.0
        $region72: #{tpu_custom_call.1} parent=55 // pred_fallthru
          _
        %v463 = vld [vmem:[%s0] sm:$0xff]
        %v464 = vld [vmem:[%s442] sm:$0xff]
        %v465 = vld [vmem:[%s442 + $0x8] sm:$0xff]
        %v466 = vld [vmem:[%s442 + $0x10] sm:$0xff]
        %v467 = vld [vmem:[%s442 + $0x18] sm:$0xff]
        %v468 = vld [vmem:[%s3] sm:$0xff]
        %v469 = vld [vmem:[%s3 + $0x8] sm:$0xff]
        %v470 = vld [vmem:[%s3 + $0x10] sm:$0xff]
        %v471 = vld [vmem:[%s3 + $0x18] sm:$0xff]
        %v472 = vld [vmem:[%s3 + $0x20] sm:$0xff]
        %v473 = vld [vmem:[%s3 + $0x28] sm:$0xff]
        %v474 = vld [vmem:[%s3 + $0x30] sm:$0xff]
        %v475 = vld [vmem:[%s3 + $0x38] sm:$0xff]
        %v476 = vld [vmem:[%s3 + $0x40] sm:$0xff]
        %v477 = vld [vmem:[%s3 + $0x48] sm:$0xff]
        %v478 = vld [vmem:[%s3 + $0x50] sm:$0xff]
        %v479 = vld [vmem:[%s3 + $0x58] sm:$0xff]
        %v480 = vld [vmem:[%s3 + $0x60] sm:$0xff]
        %v481 = vld [vmem:[%s3 + $0x68] sm:$0xff]
        %v482 = vld [vmem:[%s3 + $0x70] sm:$0xff]
        %v483 = vld [vmem:[%s3 + $0x78] sm:$0xff]
        %v484 = vld [vmem:[%s5] sm:$0xf]
        %v486 = vperm.slane %v484, 0
        %v487 = vperm.slane %v484, 1
        %v488 = vperm.slane %v484, 2
        %v489 = vperm.slane %v484, 3
        %vm494 = vcmask 261120
        %v496 = vsel %vm494, %v464, 0
        %v499 = vsel %vm494, %v465, 0
        %v502 = vsel %vm494, %v466, 0
        %v505 = vsel %vm494, %v467, 0
        %507 = vmatpush.msra.mxu0 0.0
        %508 = vmatpush.msra.mxu0 0.0
        %509 = vmatpush.msra.mxu0 0.0
        %510 = vmatpush.msra.mxu0 0.0
        %511 = vmatpush.msra.mxu0 0.0
        %512 = vmatpush.msra.mxu0 0.0
        %513 = vmatpush.msra.mxu0 0.0
        %514 = vmatpush.msra.mxu0 0.0
        %515 = vmatpush.msra.mxu0 0.0
        %516 = vmatpush.msra.mxu0 0.0
        %517 = vmatpush.msra.mxu0 0.0
        %518 = vmatpush.msra.mxu0 0.0
        %519 = vmatpush.msra.mxu0 %v480
        %520 = vmatpush.msra.mxu0 %v476
        %521 = vmatpush.msra.mxu0 %v472
        %522 = vmatpush.msra.mxu0 %v468
        %523 = vmatmul.f32.gmra.mxu0 %v496
        %v524 = vpop.f32.mrf.mxu0
        %v525 = vadd.f32 %v486, %v524
        %526 = vmatmul.f32.gmra.mxu0 %v499
        %v527 = vpop.f32.mrf.mxu0
        %v528 = vadd.f32 %v486, %v527
        %529 = vmatmul.f32.gmra.mxu0 %v502
        %v530 = vpop.f32.mrf.mxu0
        %v531 = vadd.f32 %v486, %v530
        %532 = vmatmul.f32.gmra.mxu0 %v505
        %v533 = vpop.f32.mrf.mxu0
        %v534 = vadd.f32 %v486, %v533
        %535 = vdwg.mxu0
        %536 = vmatpush.msra.mxu0 0.0
        %537 = vmatpush.msra.mxu0 0.0
        %538 = vmatpush.msra.mxu0 0.0
        %539 = vmatpush.msra.mxu0 0.0
        %540 = vmatpush.msra.mxu0 0.0
        %541 = vmatpush.msra.mxu0 0.0
        %542 = vmatpush.msra.mxu0 0.0
        %543 = vmatpush.msra.mxu0 0.0
        %544 = vmatpush.msra.mxu0 0.0
        %545 = vmatpush.msra.mxu0 0.0
        %546 = vmatpush.msra.mxu0 0.0
        %547 = vmatpush.msra.mxu0 0.0
        %548 = vmatpush.msra.mxu0 %v481
        %549 = vmatpush.msra.mxu0 %v477
        %550 = vmatpush.msra.mxu0 %v473
        %551 = vmatpush.msra.mxu0 %v469
        %552 = vmatmul.f32.gmra.mxu0 %v496
        %v553 = vpop.f32.mrf.mxu0
        %v554 = vadd.f32 %v487, %v553
        %555 = vmatmul.f32.gmra.mxu0 %v499
        %v556 = vpop.f32.mrf.mxu0
        %v557 = vadd.f32 %v487, %v556
        %558 = vmatmul.f32.gmra.mxu0 %v502
        %v559 = vpop.f32.mrf.mxu0
        %v560 = vadd.f32 %v487, %v559
        %561 = vmatmul.f32.gmra.mxu0 %v505
        %v562 = vpop.f32.mrf.mxu0
        %v563 = vadd.f32 %v487, %v562
        %564 = vdwg.mxu0
        %565 = vmatpush.msra.mxu0 0.0
        %566 = vmatpush.msra.mxu0 0.0
        %567 = vmatpush.msra.mxu0 0.0
        %568 = vmatpush.msra.mxu0 0.0
        %569 = vmatpush.msra.mxu0 0.0
        %570 = vmatpush.msra.mxu0 0.0
        %571 = vmatpush.msra.mxu0 0.0
        %572 = vmatpush.msra.mxu0 0.0
        %573 = vmatpush.msra.mxu0 0.0
        %574 = vmatpush.msra.mxu0 0.0
        %575 = vmatpush.msra.mxu0 0.0
        %576 = vmatpush.msra.mxu0 0.0
        %577 = vmatpush.msra.mxu0 %v482
        %578 = vmatpush.msra.mxu0 %v478
        %579 = vmatpush.msra.mxu0 %v474
        %580 = vmatpush.msra.mxu0 %v470
        %581 = vmatmul.f32.gmra.mxu0 %v496
        %v582 = vpop.f32.mrf.mxu0
        %v583 = vadd.f32 %v488, %v582
        %584 = vmatmul.f32.gmra.mxu0 %v499
        %v585 = vpop.f32.mrf.mxu0
        %v586 = vadd.f32 %v488, %v585
        %587 = vmatmul.f32.gmra.mxu0 %v502
        %v588 = vpop.f32.mrf.mxu0
        %v589 = vadd.f32 %v488, %v588
        %590 = vmatmul.f32.gmra.mxu0 %v505
        %v591 = vpop.f32.mrf.mxu0
        %v592 = vadd.f32 %v488, %v591
        %593 = vdwg.mxu0
        %594 = vmatpush.msra.mxu0 0.0
        %595 = vmatpush.msra.mxu0 0.0
        %596 = vmatpush.msra.mxu0 0.0
        %597 = vmatpush.msra.mxu0 0.0
        %598 = vmatpush.msra.mxu0 0.0
        %599 = vmatpush.msra.mxu0 0.0
        %600 = vmatpush.msra.mxu0 0.0
        %601 = vmatpush.msra.mxu0 0.0
        %602 = vmatpush.msra.mxu0 0.0
        %603 = vmatpush.msra.mxu0 0.0
        %604 = vmatpush.msra.mxu0 0.0
        %605 = vmatpush.msra.mxu0 0.0
        %606 = vmatpush.msra.mxu0 %v483
        %607 = vmatpush.msra.mxu0 %v479
        %608 = vmatpush.msra.mxu0 %v475
        %609 = vmatpush.msra.mxu0 %v471
        %610 = vmatmul.f32.gmra.mxu0 %v496
        %v611 = vpop.f32.mrf.mxu0
        %v612 = vadd.f32 %v489, %v611
        %613 = vmatmul.f32.gmra.mxu0 %v499
        %v614 = vpop.f32.mrf.mxu0
        %v615 = vadd.f32 %v489, %v614
        %616 = vmatmul.f32.gmra.mxu0 %v502
        %v617 = vpop.f32.mrf.mxu0
        %v618 = vadd.f32 %v489, %v617
        %619 = vmatmul.f32.gmra.mxu0 %v505
        %v620 = vpop.f32.mrf.mxu0
        %v621 = vadd.f32 %v489, %v620
        %622 = vdwg.mxu0
        %623 = vst [vmem:[#allocation2] sm:$0xff] %v525
        %624 = vst [vmem:[#allocation2 + $0x8] sm:$0xff] %v554
        %625 = vst [vmem:[#allocation2 + $0x10] sm:$0xff] %v583
        %626 = vst [vmem:[#allocation2 + $0x18] sm:$0xff] %v612
        %627 = vst [vmem:[#allocation2 + $0x20] sm:$0xff] %v528
        %628 = vst [vmem:[#allocation2 + $0x28] sm:$0xff] %v557
        %629 = vst [vmem:[#allocation2 + $0x30] sm:$0xff] %v586
        %630 = vst [vmem:[#allocation2 + $0x38] sm:$0xff] %v615
        %631 = vst [vmem:[#allocation2 + $0x40] sm:$0xff] %v531
        %632 = vst [vmem:[#allocation2 + $0x48] sm:$0xff] %v560
        %633 = vst [vmem:[#allocation2 + $0x50] sm:$0xff] %v589
        %634 = vst [vmem:[#allocation2 + $0x58] sm:$0xff] %v618
        %635 = vst [vmem:[#allocation2 + $0x60] sm:$0xff] %v534
        %636 = vst [vmem:[#allocation2 + $0x68] sm:$0xff] %v563
        %637 = vst [vmem:[#allocation2 + $0x70] sm:$0xff] %v592
        %638 = vst [vmem:[#allocation2 + $0x78] sm:$0xff] %v621
        %v639 = vld [vmem:[%s449] sm:$0xff]
        %v640 = vld [vmem:[%s449 + $0x8] sm:$0xff]
        %v641 = vld [vmem:[%s449 + $0x10] sm:$0xff]
        %v642 = vld [vmem:[%s449 + $0x18] sm:$0xff]
        %v643 = vld [vmem:[#allocation8] sm:$0xff]
        %v644 = vld [vmem:[#allocation8 + $0x8] sm:$0xff]
        %v645 = vld [vmem:[#allocation8 + $0x10] sm:$0xff]
        %v646 = vld [vmem:[#allocation8 + $0x18] sm:$0xff]
        %v647 = vld [vmem:[#allocation8 + $0x20] sm:$0xff]
        %v648 = vld [vmem:[#allocation8 + $0x28] sm:$0xff]
        %v649 = vld [vmem:[#allocation8 + $0x30] sm:$0xff]
        %v650 = vld [vmem:[#allocation8 + $0x38] sm:$0xff]
        %v651 = vld [vmem:[#allocation8 + $0x40] sm:$0xff]
        %v652 = vld [vmem:[#allocation8 + $0x48] sm:$0xff]
        %v653 = vld [vmem:[#allocation8 + $0x50] sm:$0xff]
        %v654 = vld [vmem:[#allocation8 + $0x58] sm:$0xff]
        %v655 = vld [vmem:[#allocation8 + $0x60] sm:$0xff]
        %v656 = vld [vmem:[#allocation8 + $0x68] sm:$0xff]
        %v657 = vld [vmem:[#allocation8 + $0x70] sm:$0xff]
        %v658 = vld [vmem:[#allocation8 + $0x78] sm:$0xff]
        %v659 = vld [vmem:[%s6] sm:$0xf]
        %v661 = vperm.slane %v659, 0
        %v662 = vperm.slane %v659, 1
        %v663 = vperm.slane %v659, 2
        %v664 = vperm.slane %v659, 3
        %v670 = vsel %vm494, %v639, 0
        %v673 = vsel %vm494, %v640, 0
        %v676 = vsel %vm494, %v641, 0
        %v679 = vsel %vm494, %v642, 0
        %681 = vmatpush.msra.mxu0 0.0
        %682 = vmatpush.msra.mxu0 0.0
        %683 = vmatpush.msra.mxu0 0.0
        %684 = vmatpush.msra.mxu0 0.0
        %685 = vmatpush.msra.mxu0 0.0
        %686 = vmatpush.msra.mxu0 0.0
        %687 = vmatpush.msra.mxu0 0.0
        %688 = vmatpush.msra.mxu0 0.0
        %689 = vmatpush.msra.mxu0 0.0
        %690 = vmatpush.msra.mxu0 0.0
        %691 = vmatpush.msra.mxu0 0.0
        %692 = vmatpush.msra.mxu0 0.0
        %693 = vmatpush.msra.mxu0 %v655
        %694 = vmatpush.msra.mxu0 %v651
        %695 = vmatpush.msra.mxu0 %v647
        %696 = vmatpush.msra.mxu0 %v643
        %697 = vmatmul.f32.gmra.mxu0 %v670
        %v698 = vpop.f32.mrf.mxu0
        %v699 = vadd.f32 %v661, %v698
        %700 = vmatmul.f32.gmra.mxu0 %v673
        %v701 = vpop.f32.mrf.mxu0
        %v702 = vadd.f32 %v661, %v701
        %703 = vmatmul.f32.gmra.mxu0 %v676
        %v704 = vpop.f32.mrf.mxu0
        %v705 = vadd.f32 %v661, %v704
        %706 = vmatmul.f32.gmra.mxu0 %v679
        %v707 = vpop.f32.mrf.mxu0
        %v708 = vadd.f32 %v661, %v707
        %709 = vdwg.mxu0
        %710 = vmatpush.msra.mxu0 0.0
        %711 = vmatpush.msra.mxu0 0.0
        %712 = vmatpush.msra.mxu0 0.0
        %713 = vmatpush.msra.mxu0 0.0
        %714 = vmatpush.msra.mxu0 0.0
        %715 = vmatpush.msra.mxu0 0.0
        %716 = vmatpush.msra.mxu0 0.0
        %717 = vmatpush.msra.mxu0 0.0
        %718 = vmatpush.msra.mxu0 0.0
        %719 = vmatpush.msra.mxu0 0.0
        %720 = vmatpush.msra.mxu0 0.0
        %721 = vmatpush.msra.mxu0 0.0
        %722 = vmatpush.msra.mxu0 %v656
        %723 = vmatpush.msra.mxu0 %v652
        %724 = vmatpush.msra.mxu0 %v648
        %725 = vmatpush.msra.mxu0 %v644
        %726 = vmatmul.f32.gmra.mxu0 %v670
        %v727 = vpop.f32.mrf.mxu0
        %v728 = vadd.f32 %v662, %v727
        %729 = vmatmul.f32.gmra.mxu0 %v673
        %v730 = vpop.f32.mrf.mxu0
        %v731 = vadd.f32 %v662, %v730
        %732 = vmatmul.f32.gmra.mxu0 %v676
        %v733 = vpop.f32.mrf.mxu0
        %v734 = vadd.f32 %v662, %v733
        %735 = vmatmul.f32.gmra.mxu0 %v679
        %v736 = vpop.f32.mrf.mxu0
        %v737 = vadd.f32 %v662, %v736
        %738 = vdwg.mxu0
        %739 = vmatpush.msra.mxu0 0.0
        %740 = vmatpush.msra.mxu0 0.0
        %741 = vmatpush.msra.mxu0 0.0
        %742 = vmatpush.msra.mxu0 0.0
        %743 = vmatpush.msra.mxu0 0.0
        %744 = vmatpush.msra.mxu0 0.0
        %745 = vmatpush.msra.mxu0 0.0
        %746 = vmatpush.msra.mxu0 0.0
        %747 = vmatpush.msra.mxu0 0.0
        %748 = vmatpush.msra.mxu0 0.0
        %749 = vmatpush.msra.mxu0 0.0
        %750 = vmatpush.msra.mxu0 0.0
        %751 = vmatpush.msra.mxu0 %v657
        %752 = vmatpush.msra.mxu0 %v653
        %753 = vmatpush.msra.mxu0 %v649
        %754 = vmatpush.msra.mxu0 %v645
        %755 = vmatmul.f32.gmra.mxu0 %v670
        %v756 = vpop.f32.mrf.mxu0
        %v757 = vadd.f32 %v663, %v756
        %758 = vmatmul.f32.gmra.mxu0 %v673
        %v759 = vpop.f32.mrf.mxu0
        %v760 = vadd.f32 %v663, %v759
        %761 = vmatmul.f32.gmra.mxu0 %v676
        %v762 = vpop.f32.mrf.mxu0
        %v763 = vadd.f32 %v663, %v762
        %764 = vmatmul.f32.gmra.mxu0 %v679
        %v765 = vpop.f32.mrf.mxu0
        %v766 = vadd.f32 %v663, %v765
        %767 = vdwg.mxu0
        %768 = vmatpush.msra.mxu0 0.0
        %769 = vmatpush.msra.mxu0 0.0
        %770 = vmatpush.msra.mxu0 0.0
        %771 = vmatpush.msra.mxu0 0.0
        %772 = vmatpush.msra.mxu0 0.0
        %773 = vmatpush.msra.mxu0 0.0
        %774 = vmatpush.msra.mxu0 0.0
        %775 = vmatpush.msra.mxu0 0.0
        %776 = vmatpush.msra.mxu0 0.0
        %777 = vmatpush.msra.mxu0 0.0
        %778 = vmatpush.msra.mxu0 0.0
        %779 = vmatpush.msra.mxu0 0.0
        %780 = vmatpush.msra.mxu0 %v658
        %781 = vmatpush.msra.mxu0 %v654
        %782 = vmatpush.msra.mxu0 %v650
        %783 = vmatpush.msra.mxu0 %v646
        %784 = vmatmul.f32.gmra.mxu0 %v670
        %v785 = vpop.f32.mrf.mxu0
        %v786 = vadd.f32 %v664, %v785
        %787 = vmatmul.f32.gmra.mxu0 %v673
        %v788 = vpop.f32.mrf.mxu0
        %v789 = vadd.f32 %v664, %v788
        %790 = vmatmul.f32.gmra.mxu0 %v676
        %v791 = vpop.f32.mrf.mxu0
        %v792 = vadd.f32 %v664, %v791
        %793 = vmatmul.f32.gmra.mxu0 %v679
        %v794 = vpop.f32.mrf.mxu0
        %v795 = vadd.f32 %v664, %v794
        %796 = vdwg.mxu0
        %797 = vst [vmem:[#allocation3] sm:$0xff] %v699
        %798 = vst [vmem:[#allocation3 + $0x8] sm:$0xff] %v728
        %799 = vst [vmem:[#allocation3 + $0x10] sm:$0xff] %v757
        %800 = vst [vmem:[#allocation3 + $0x18] sm:$0xff] %v786
        %801 = vst [vmem:[#allocation3 + $0x20] sm:$0xff] %v702
        %802 = vst [vmem:[#allocation3 + $0x28] sm:$0xff] %v731
        %803 = vst [vmem:[#allocation3 + $0x30] sm:$0xff] %v760
        %804 = vst [vmem:[#allocation3 + $0x38] sm:$0xff] %v789
        %805 = vst [vmem:[#allocation3 + $0x40] sm:$0xff] %v705
        %806 = vst [vmem:[#allocation3 + $0x48] sm:$0xff] %v734
        %807 = vst [vmem:[#allocation3 + $0x50] sm:$0xff] %v763
        %808 = vst [vmem:[#allocation3 + $0x58] sm:$0xff] %v792
        %809 = vst [vmem:[#allocation3 + $0x60] sm:$0xff] %v708
        %810 = vst [vmem:[#allocation3 + $0x68] sm:$0xff] %v737
        %811 = vst [vmem:[#allocation3 + $0x70] sm:$0xff] %v766
        %812 = vst [vmem:[#allocation3 + $0x78] sm:$0xff] %v795
        %s813 = smul.u32 %s30, 4
        %s814 = ssub.s32 1, %s30
        %s815 = smul.u32 %s814, 4
        %v816 = vld [vmem:[#allocation4] sm:$0xff]
        %v817 = vld [vmem:[#allocation5] sm:$0xff]
        %v818 = vld [vmem:[#allocation6] sm:$0xff]
        %v819 = vld [vmem:[#allocation7] sm:$0xff]
        %v820 = vstv %s813
        %vm821 = vcmp.gt.s32.totalorder %v463, %v820
        %s822 = smul.u32 0, 4
        %s823 = smul.addr %s822, 8
        %s824 = scalar_lea.vmem [#allocation2], %s823
        %v825 = vld [vmem:[%s824] sm:$0xff]
        %v826 = vld [vmem:[%s824 + $0x8] sm:$0xff]
        %v827 = vld [vmem:[%s824 + $0x10] sm:$0xff]
        %v828 = vld [vmem:[%s824 + $0x18] sm:$0xff]
        %v829 = vld [vmem:[#allocation11] sm:$0xff]
        %v830 = vld [vmem:[#allocation11 + $0x8] sm:$0xff]
        %v831 = vld [vmem:[#allocation11 + $0x10] sm:$0xff]
        %v832 = vld [vmem:[#allocation11 + $0x18] sm:$0xff]
        %v833 = vld [vmem:[#allocation11 + $0x20] sm:$0xff]
        %v834 = vld [vmem:[#allocation11 + $0x28] sm:$0xff]
        %v835 = vld [vmem:[#allocation11 + $0x30] sm:$0xff]
        %v836 = vld [vmem:[#allocation11 + $0x38] sm:$0xff]
        %v837 = vld [vmem:[#allocation11 + $0x40] sm:$0xff]
        %v838 = vld [vmem:[#allocation11 + $0x48] sm:$0xff]
        %v839 = vld [vmem:[#allocation11 + $0x50] sm:$0xff]
        %v840 = vld [vmem:[#allocation11 + $0x58] sm:$0xff]
        %v841 = vld [vmem:[#allocation11 + $0x60] sm:$0xff]
        %v842 = vld [vmem:[#allocation11 + $0x68] sm:$0xff]
        %v843 = vld [vmem:[#allocation11 + $0x70] sm:$0xff]
        %v844 = vld [vmem:[#allocation11 + $0x78] sm:$0xff]
        %v845 = vld [vmem:[#allocation11 + $0x80] sm:$0xff]
        %v846 = vld [vmem:[#allocation11 + $0x88] sm:$0xff]
        %v847 = vld [vmem:[#allocation11 + $0x90] sm:$0xff]
        %v848 = vld [vmem:[#allocation11 + $0x98] sm:$0xff]
        %v849 = vld [vmem:[#allocation11 + $0xa0] sm:$0xff]
        %v850 = vld [vmem:[#allocation11 + $0xa8] sm:$0xff]
        %v851 = vld [vmem:[#allocation11 + $0xb0] sm:$0xff]
        %v852 = vld [vmem:[#allocation11 + $0xb8] sm:$0xff]
        %v853 = vld [vmem:[#allocation11 + $0xc0] sm:$0xff]
        %v854 = vld [vmem:[#allocation11 + $0xc8] sm:$0xff]
        %v855 = vld [vmem:[#allocation11 + $0xd0] sm:$0xff]
        %v856 = vld [vmem:[#allocation11 + $0xd8] sm:$0xff]
        %v857 = vld [vmem:[#allocation11 + $0xe0] sm:$0xff]
        %v858 = vld [vmem:[#allocation11 + $0xe8] sm:$0xff]
        %v859 = vld [vmem:[#allocation11 + $0xf0] sm:$0xff]
        %v860 = vld [vmem:[#allocation11 + $0xf8] sm:$0xff]
        %v861 = vld [vmem:[#allocation11 + $0x100] sm:$0xff]
        %v862 = vld [vmem:[#allocation11 + $0x108] sm:$0xff]
        %v863 = vld [vmem:[#allocation11 + $0x110] sm:$0xff]
        %v864 = vld [vmem:[#allocation11 + $0x118] sm:$0xff]
        %v865 = vld [vmem:[#allocation11 + $0x120] sm:$0xff]
        %v866 = vld [vmem:[#allocation11 + $0x128] sm:$0xff]
        %v867 = vld [vmem:[#allocation11 + $0x130] sm:$0xff]
        %v868 = vld [vmem:[#allocation11 + $0x138] sm:$0xff]
        %v869 = vld [vmem:[#allocation11 + $0x140] sm:$0xff]
        %v870 = vld [vmem:[#allocation11 + $0x148] sm:$0xff]
        %v871 = vld [vmem:[#allocation11 + $0x150] sm:$0xff]
        %v872 = vld [vmem:[#allocation11 + $0x158] sm:$0xff]
        %v873 = vld [vmem:[#allocation11 + $0x160] sm:$0xff]
        %v874 = vld [vmem:[#allocation11 + $0x168] sm:$0xff]
        %v875 = vld [vmem:[#allocation11 + $0x170] sm:$0xff]
        %v876 = vld [vmem:[#allocation11 + $0x178] sm:$0xff]
        %v877 = vld [vmem:[#allocation11 + $0x180] sm:$0xff]
        %v878 = vld [vmem:[#allocation11 + $0x188] sm:$0xff]
        %v879 = vld [vmem:[#allocation11 + $0x190] sm:$0xff]
        %v880 = vld [vmem:[#allocation11 + $0x198] sm:$0xff]
        %v881 = vld [vmem:[#allocation11 + $0x1a0] sm:$0xff]
        %v882 = vld [vmem:[#allocation11 + $0x1a8] sm:$0xff]
        %v883 = vld [vmem:[#allocation11 + $0x1b0] sm:$0xff]
        %v884 = vld [vmem:[#allocation11 + $0x1b8] sm:$0xff]
        %v885 = vld [vmem:[#allocation11 + $0x1c0] sm:$0xff]
        %v886 = vld [vmem:[#allocation11 + $0x1c8] sm:$0xff]
        %v887 = vld [vmem:[#allocation11 + $0x1d0] sm:$0xff]
        %v888 = vld [vmem:[#allocation11 + $0x1d8] sm:$0xff]
        %v889 = vld [vmem:[#allocation11 + $0x1e0] sm:$0xff]
        %v890 = vld [vmem:[#allocation11 + $0x1e8] sm:$0xff]
        %v891 = vld [vmem:[#allocation11 + $0x1f0] sm:$0xff]
        %v892 = vld [vmem:[#allocation11 + $0x1f8] sm:$0xff]
        %893 = vmatpush.msra.mxu0 %v889
        %894 = vmatpush.msra.mxu0 %v885
        %895 = vmatpush.msra.mxu0 %v881
        %896 = vmatpush.msra.mxu0 %v877
        %897 = vmatpush.msra.mxu0 %v873
        %898 = vmatpush.msra.mxu0 %v869
        %899 = vmatpush.msra.mxu0 %v865
        %900 = vmatpush.msra.mxu0 %v861
        %901 = vmatpush.msra.mxu0 %v857
        %902 = vmatpush.msra.mxu0 %v853
        %903 = vmatpush.msra.mxu0 %v849
        %904 = vmatpush.msra.mxu0 %v845
        %905 = vmatpush.msra.mxu0 %v841
        %906 = vmatpush.msra.mxu0 %v837
        %907 = vmatpush.msra.mxu0 %v833
        %908 = vmatpush.msra.mxu0 %v829
        %909 = vmatmul.f32.gmra.mxu0 %v816
        %v910 = vpop.f32.mrf.mxu0
        %v911 = vadd.f32 0.0, %v910
        %912 = vdwg.mxu0
        %913 = vmatpush.msra.mxu0 %v890
        %914 = vmatpush.msra.mxu0 %v886
        %915 = vmatpush.msra.mxu0 %v882
        %916 = vmatpush.msra.mxu0 %v878
        %917 = vmatpush.msra.mxu0 %v874
        %918 = vmatpush.msra.mxu0 %v870
        %919 = vmatpush.msra.mxu0 %v866
        %920 = vmatpush.msra.mxu0 %v862
        %921 = vmatpush.msra.mxu0 %v858
        %922 = vmatpush.msra.mxu0 %v854
        %923 = vmatpush.msra.mxu0 %v850
        %924 = vmatpush.msra.mxu0 %v846
        %925 = vmatpush.msra.mxu0 %v842
        %926 = vmatpush.msra.mxu0 %v838
        %927 = vmatpush.msra.mxu0 %v834
        %928 = vmatpush.msra.mxu0 %v830
        %929 = vmatmul.f32.gmra.mxu0 %v816
        %v930 = vpop.f32.mrf.mxu0
        %v931 = vadd.f32 0.0, %v930
        %932 = vdwg.mxu0
        %933 = vmatpush.msra.mxu0 %v891
        %934 = vmatpush.msra.mxu0 %v887
        %935 = vmatpush.msra.mxu0 %v883
        %936 = vmatpush.msra.mxu0 %v879
        %937 = vmatpush.msra.mxu0 %v875
        %938 = vmatpush.msra.mxu0 %v871
        %939 = vmatpush.msra.mxu0 %v867
        %940 = vmatpush.msra.mxu0 %v863
        %941 = vmatpush.msra.mxu0 %v859
        %942 = vmatpush.msra.mxu0 %v855
        %943 = vmatpush.msra.mxu0 %v851
        %944 = vmatpush.msra.mxu0 %v847
        %945 = vmatpush.msra.mxu0 %v843
        %946 = vmatpush.msra.mxu0 %v839
        %947 = vmatpush.msra.mxu0 %v835
        %948 = vmatpush.msra.mxu0 %v831
        %949 = vmatmul.f32.gmra.mxu0 %v816
        %v950 = vpop.f32.mrf.mxu0
        %v951 = vadd.f32 0.0, %v950
        %952 = vdwg.mxu0
        %953 = vmatpush.msra.mxu0 %v892
        %954 = vmatpush.msra.mxu0 %v888
        %955 = vmatpush.msra.mxu0 %v884
        %956 = vmatpush.msra.mxu0 %v880
        %957 = vmatpush.msra.mxu0 %v876
        %958 = vmatpush.msra.mxu0 %v872
        %959 = vmatpush.msra.mxu0 %v868
        %960 = vmatpush.msra.mxu0 %v864
        %961 = vmatpush.msra.mxu0 %v860
        %962 = vmatpush.msra.mxu0 %v856
        %963 = vmatpush.msra.mxu0 %v852
        %964 = vmatpush.msra.mxu0 %v848
        %965 = vmatpush.msra.mxu0 %v844
        %966 = vmatpush.msra.mxu0 %v840
        %967 = vmatpush.msra.mxu0 %v836
        %968 = vmatpush.msra.mxu0 %v832
        %969 = vmatmul.f32.gmra.mxu0 %v816
        %v970 = vpop.f32.mrf.mxu0
        %v971 = vadd.f32 0.0, %v970
        %972 = vdwg.mxu0
        %v973 = vadd.f32 %v825, %v911
        %v974 = vadd.f32 %v826, %v931
        %v975 = vadd.f32 %v827, %v951
        %v976 = vadd.f32 %v828, %v971
        %v977 = vxor.u32 %v973, 2147483648
        %v978 = vmul.f32 %v977, 1.442695
        %v979 = vpow.pop %v978
        %v980 = vadd.f32 %v979, 1.0
        %v981 = vrcp.pop %v980
        %v982 = vmul.f32 %v980, %v981
        %v983 = vsub.f32 1.0, %v982
        %v984 = vmul.f32 %v981, %v983
        %v985 = vadd.f32 %v981, %v984
        %vm986 = vweird.f32 %v980
        %vm987 = vweird.f32 %v981
        %vm988 = vmor %vm986, %vm987
        %v989 = vsel %vm988, %v981, %v985
        %v990 = vand.u32 2147483647, %v980
        %vm991 = vcmp.eq.f32.partialorder %v990, 8.507059e+37
        %v992 = vand.u32 %v980, 2147483648
        %v993 = vor.u32 1.1754944e-38, %v992
        %v994 = vsel %vm991, %v993, %v989
        %v995 = vmul.f32 1.0, %v994
        %v996 = vxor.u32 %v974, 2147483648
        %v997 = vmul.f32 %v996, 1.442695
        %v998 = vpow.pop %v997
        %v999 = vadd.f32 %v998, 1.0
        %v1000 = vrcp.pop %v999
        %v1001 = vmul.f32 %v999, %v1000
        %v1002 = vsub.f32 1.0, %v1001
        %v1003 = vmul.f32 %v1000, %v1002
        %v1004 = vadd.f32 %v1000, %v1003
        %vm1005 = vweird.f32 %v999
        %vm1006 = vweird.f32 %v1000
        %vm1007 = vmor %vm1005, %vm1006
        %v1008 = vsel %vm1007, %v1000, %v1004
        %v1009 = vand.u32 2147483647, %v999
        %vm1010 = vcmp.eq.f32.partialorder %v1009, 8.507059e+37
        %v1011 = vand.u32 %v999, 2147483648
        %v1012 = vor.u32 1.1754944e-38, %v1011
        %v1013 = vsel %vm1010, %v1012, %v1008
        %v1014 = vmul.f32 1.0, %v1013
        %v1015 = vtanh.pop %v975
        %v1016 = vxor.u32 %v976, 2147483648
        %v1017 = vmul.f32 %v1016, 1.442695
        %v1018 = vpow.pop %v1017
        %v1019 = vadd.f32 %v1018, 1.0
        %v1020 = vrcp.pop %v1019
        %v1021 = vmul.f32 %v1019, %v1020
        %v1022 = vsub.f32 1.0, %v1021
        %v1023 = vmul.f32 %v1020, %v1022
        %v1024 = vadd.f32 %v1020, %v1023
        %vm1025 = vweird.f32 %v1019
        %vm1026 = vweird.f32 %v1020
        %vm1027 = vmor %vm1025, %vm1026
        %v1028 = vsel %vm1027, %v1020, %v1024
        %v1029 = vand.u32 2147483647, %v1019
        %vm1030 = vcmp.eq.f32.partialorder %v1029, 8.507059e+37
        %v1031 = vand.u32 %v1019, 2147483648
        %v1032 = vor.u32 1.1754944e-38, %v1031
        %v1033 = vsel %vm1030, %v1032, %v1028
        %v1034 = vmul.f32 1.0, %v1033
        %v1035 = vmul.f32 %v1014, %v817
        %v1036 = vmul.f32 %v995, %v1015
        %v1037 = vadd.f32 %v1035, %v1036
        %v1038 = vtanh.pop %v1037
        %v1039 = vmul.f32 %v1034, %v1038
        %v1040 = vsel %vm821, 1, 0
        %1041 = vset.pattern.permute.xlu0 0
        %1042 = vperm.xlu0 %1041, %v1040
        %v1043 = vpop.permute.xlu0 %1042
        %vm1044 = vcmp.eq.s32.totalorder %v1043, 1
        %v1045 = vsel %vm1044, %v1039, %v816
        %v1046 = vsel %vm1044, %v1037, %v817
        %v1047 = vsel %vm1044, %v1039, 0.0
        %1048 = vst [vmem:[%s430] sm:$0xff] %v1047
        %s1049 = sadd.s32 %s815, 3
        %v1050 = vstv %s1049
        %vm1051 = vcmp.gt.s32.totalorder %v463, %v1050
        %s1052 = smul.u32 3, 4
        %s1053 = smul.addr %s1052, 8
        %s1054 = scalar_lea.vmem [#allocation3], %s1053
        %v1055 = vld [vmem:[%s1054] sm:$0xff]
        %v1056 = vld [vmem:[%s1054 + $0x8] sm:$0xff]
        %v1057 = vld [vmem:[%s1054 + $0x10] sm:$0xff]
        %v1058 = vld [vmem:[%s1054 + $0x18] sm:$0xff]
        %v1059 = vld [vmem:[#allocation13] sm:$0xff]
        %v1060 = vld [vmem:[#allocation13 + $0x8] sm:$0xff]
        %v1061 = vld [vmem:[#allocation13 + $0x10] sm:$0xff]
        %v1062 = vld [vmem:[#allocation13 + $0x18] sm:$0xff]
        %v1063 = vld [vmem:[#allocation13 + $0x20] sm:$0xff]
        %v1064 = vld [vmem:[#allocation13 + $0x28] sm:$0xff]
        %v1065 = vld [vmem:[#allocation13 + $0x30] sm:$0xff]
        %v1066 = vld [vmem:[#allocation13 + $0x38] sm:$0xff]
        %v1067 = vld [vmem:[#allocation13 + $0x40] sm:$0xff]
        %v1068 = vld [vmem:[#allocation13 + $0x48] sm:$0xff]
        %v1069 = vld [vmem:[#allocation13 + $0x50] sm:$0xff]
        %v1070 = vld [vmem:[#allocation13 + $0x58] sm:$0xff]
        %v1071 = vld [vmem:[#allocation13 + $0x60] sm:$0xff]
        %v1072 = vld [vmem:[#allocation13 + $0x68] sm:$0xff]
        %v1073 = vld [vmem:[#allocation13 + $0x70] sm:$0xff]
        %v1074 = vld [vmem:[#allocation13 + $0x78] sm:$0xff]
        %v1075 = vld [vmem:[#allocation13 + $0x80] sm:$0xff]
        %v1076 = vld [vmem:[#allocation13 + $0x88] sm:$0xff]
        %v1077 = vld [vmem:[#allocation13 + $0x90] sm:$0xff]
        %v1078 = vld [vmem:[#allocation13 + $0x98] sm:$0xff]
        %v1079 = vld [vmem:[#allocation13 + $0xa0] sm:$0xff]
        %v1080 = vld [vmem:[#allocation13 + $0xa8] sm:$0xff]
        %v1081 = vld [vmem:[#allocation13 + $0xb0] sm:$0xff]
        %v1082 = vld [vmem:[#allocation13 + $0xb8] sm:$0xff]
        %v1083 = vld [vmem:[#allocation13 + $0xc0] sm:$0xff]
        %v1084 = vld [vmem:[#allocation13 + $0xc8] sm:$0xff]
        %v1085 = vld [vmem:[#allocation13 + $0xd0] sm:$0xff]
        %v1086 = vld [vmem:[#allocation13 + $0xd8] sm:$0xff]
        %v1087 = vld [vmem:[#allocation13 + $0xe0] sm:$0xff]
        %v1088 = vld [vmem:[#allocation13 + $0xe8] sm:$0xff]
        %v1089 = vld [vmem:[#allocation13 + $0xf0] sm:$0xff]
        %v1090 = vld [vmem:[#allocation13 + $0xf8] sm:$0xff]
        %v1091 = vld [vmem:[#allocation13 + $0x100] sm:$0xff]
        %v1092 = vld [vmem:[#allocation13 + $0x108] sm:$0xff]
        %v1093 = vld [vmem:[#allocation13 + $0x110] sm:$0xff]
        %v1094 = vld [vmem:[#allocation13 + $0x118] sm:$0xff]
        %v1095 = vld [vmem:[#allocation13 + $0x120] sm:$0xff]
        %v1096 = vld [vmem:[#allocation13 + $0x128] sm:$0xff]
        %v1097 = vld [vmem:[#allocation13 + $0x130] sm:$0xff]
        %v1098 = vld [vmem:[#allocation13 + $0x138] sm:$0xff]
        %v1099 = vld [vmem:[#allocation13 + $0x140] sm:$0xff]
        %v1100 = vld [vmem:[#allocation13 + $0x148] sm:$0xff]
        %v1101 = vld [vmem:[#allocation13 + $0x150] sm:$0xff]
        %v1102 = vld [vmem:[#allocation13 + $0x158] sm:$0xff]
        %v1103 = vld [vmem:[#allocation13 + $0x160] sm:$0xff]
        %v1104 = vld [vmem:[#allocation13 + $0x168] sm:$0xff]
        %v1105 = vld [vmem:[#allocation13 + $0x170] sm:$0xff]
        %v1106 = vld [vmem:[#allocation13 + $0x178] sm:$0xff]
        %v1107 = vld [vmem:[#allocation13 + $0x180] sm:$0xff]
        %v1108 = vld [vmem:[#allocation13 + $0x188] sm:$0xff]
        %v1109 = vld [vmem:[#allocation13 + $0x190] sm:$0xff]
        %v1110 = vld [vmem:[#allocation13 + $0x198] sm:$0xff]
        %v1111 = vld [vmem:[#allocation13 + $0x1a0] sm:$0xff]
        %v1112 = vld [vmem:[#allocation13 + $0x1a8] sm:$0xff]
        %v1113 = vld [vmem:[#allocation13 + $0x1b0] sm:$0xff]
        %v1114 = vld [vmem:[#allocation13 + $0x1b8] sm:$0xff]
        %v1115 = vld [vmem:[#allocation13 + $0x1c0] sm:$0xff]
        %v1116 = vld [vmem:[#allocation13 + $0x1c8] sm:$0xff]
        %v1117 = vld [vmem:[#allocation13 + $0x1d0] sm:$0xff]
        %v1118 = vld [vmem:[#allocation13 + $0x1d8] sm:$0xff]
        %v1119 = vld [vmem:[#allocation13 + $0x1e0] sm:$0xff]
        %v1120 = vld [vmem:[#allocation13 + $0x1e8] sm:$0xff]
        %v1121 = vld [vmem:[#allocation13 + $0x1f0] sm:$0xff]
        %v1122 = vld [vmem:[#allocation13 + $0x1f8] sm:$0xff]
        %1123 = vmatpush.msra.mxu0 %v1119
        %1124 = vmatpush.msra.mxu0 %v1115
        %1125 = vmatpush.msra.mxu0 %v1111
        %1126 = vmatpush.msra.mxu0 %v1107
        %1127 = vmatpush.msra.mxu0 %v1103
        %1128 = vmatpush.msra.mxu0 %v1099
        %1129 = vmatpush.msra.mxu0 %v1095
        %1130 = vmatpush.msra.mxu0 %v1091
        %1131 = vmatpush.msra.mxu0 %v1087
        %1132 = vmatpush.msra.mxu0 %v1083
        %1133 = vmatpush.msra.mxu0 %v1079
        %1134 = vmatpush.msra.mxu0 %v1075
        %1135 = vmatpush.msra.mxu0 %v1071
        %1136 = vmatpush.msra.mxu0 %v1067
        %1137 = vmatpush.msra.mxu0 %v1063
        %1138 = vmatpush.msra.mxu0 %v1059
        %1139 = vmatmul.f32.gmra.mxu0 %v818
        %v1140 = vpop.f32.mrf.mxu0
        %v1141 = vadd.f32 0.0, %v1140
        %1142 = vdwg.mxu0
        %1143 = vmatpush.msra.mxu0 %v1120
        %1144 = vmatpush.msra.mxu0 %v1116
        %1145 = vmatpush.msra.mxu0 %v1112
        %1146 = vmatpush.msra.mxu0 %v1108
        %1147 = vmatpush.msra.mxu0 %v1104
        %1148 = vmatpush.msra.mxu0 %v1100
        %1149 = vmatpush.msra.mxu0 %v1096
        %1150 = vmatpush.msra.mxu0 %v1092
        %1151 = vmatpush.msra.mxu0 %v1088
        %1152 = vmatpush.msra.mxu0 %v1084
        %1153 = vmatpush.msra.mxu0 %v1080
        %1154 = vmatpush.msra.mxu0 %v1076
        %1155 = vmatpush.msra.mxu0 %v1072
        %1156 = vmatpush.msra.mxu0 %v1068
        %1157 = vmatpush.msra.mxu0 %v1064
        %1158 = vmatpush.msra.mxu0 %v1060
        %1159 = vmatmul.f32.gmra.mxu0 %v818
        %v1160 = vpop.f32.mrf.mxu0
        %v1161 = vadd.f32 0.0, %v1160
        %1162 = vdwg.mxu0
        %1163 = vmatpush.msra.mxu0 %v1121
        %1164 = vmatpush.msra.mxu0 %v1117
        %1165 = vmatpush.msra.mxu0 %v1113
        %1166 = vmatpush.msra.mxu0 %v1109
        %1167 = vmatpush.msra.mxu0 %v1105
        %1168 = vmatpush.msra.mxu0 %v1101
        %1169 = vmatpush.msra.mxu0 %v1097
        %1170 = vmatpush.msra.mxu0 %v1093
        %1171 = vmatpush.msra.mxu0 %v1089
        %1172 = vmatpush.msra.mxu0 %v1085
        %1173 = vmatpush.msra.mxu0 %v1081
        %1174 = vmatpush.msra.mxu0 %v1077
        %1175 = vmatpush.msra.mxu0 %v1073
        %1176 = vmatpush.msra.mxu0 %v1069
        %1177 = vmatpush.msra.mxu0 %v1065
        %1178 = vmatpush.msra.mxu0 %v1061
        %1179 = vmatmul.f32.gmra.mxu0 %v818
        %v1180 = vpop.f32.mrf.mxu0
        %v1181 = vadd.f32 0.0, %v1180
        %1182 = vdwg.mxu0
        %1183 = vmatpush.msra.mxu0 %v1122
        %1184 = vmatpush.msra.mxu0 %v1118
        %1185 = vmatpush.msra.mxu0 %v1114
        %1186 = vmatpush.msra.mxu0 %v1110
        %1187 = vmatpush.msra.mxu0 %v1106
        %1188 = vmatpush.msra.mxu0 %v1102
        %1189 = vmatpush.msra.mxu0 %v1098
        %1190 = vmatpush.msra.mxu0 %v1094
        %1191 = vmatpush.msra.mxu0 %v1090
        %1192 = vmatpush.msra.mxu0 %v1086
        %1193 = vmatpush.msra.mxu0 %v1082
        %1194 = vmatpush.msra.mxu0 %v1078
        %1195 = vmatpush.msra.mxu0 %v1074
        %1196 = vmatpush.msra.mxu0 %v1070
        %1197 = vmatpush.msra.mxu0 %v1066
        %1198 = vmatpush.msra.mxu0 %v1062
        %1199 = vmatmul.f32.gmra.mxu0 %v818
        %v1200 = vpop.f32.mrf.mxu0
        %v1201 = vadd.f32 0.0, %v1200
        %1202 = vdwg.mxu0
        %v1203 = vadd.f32 %v1055, %v1141
        %v1204 = vadd.f32 %v1056, %v1161
        %v1205 = vadd.f32 %v1057, %v1181
        %v1206 = vadd.f32 %v1058, %v1201
        %v1207 = vxor.u32 %v1203, 2147483648
        %v1208 = vmul.f32 %v1207, 1.442695
        %v1209 = vpow.pop %v1208
        %v1210 = vadd.f32 %v1209, 1.0
        %v1211 = vrcp.pop %v1210
        %v1212 = vmul.f32 %v1210, %v1211
        %v1213 = vsub.f32 1.0, %v1212
        %v1214 = vmul.f32 %v1211, %v1213
        %v1215 = vadd.f32 %v1211, %v1214
        %vm1216 = vweird.f32 %v1210
        %vm1217 = vweird.f32 %v1211
        %vm1218 = vmor %vm1216, %vm1217
        %v1219 = vsel %vm1218, %v1211, %v1215
        %v1220 = vand.u32 2147483647, %v1210
        %vm1221 = vcmp.eq.f32.partialorder %v1220, 8.507059e+37
        %v1222 = vand.u32 %v1210, 2147483648
        %v1223 = vor.u32 1.1754944e-38, %v1222
        %v1224 = vsel %vm1221, %v1223, %v1219
        %v1225 = vmul.f32 1.0, %v1224
        %v1226 = vxor.u32 %v1204, 2147483648
        %v1227 = vmul.f32 %v1226, 1.442695
        %v1228 = vpow.pop %v1227
        %v1229 = vadd.f32 %v1228, 1.0
        %v1230 = vrcp.pop %v1229
        %v1231 = vmul.f32 %v1229, %v1230
        %v1232 = vsub.f32 1.0, %v1231
        %v1233 = vmul.f32 %v1230, %v1232
        %v1234 = vadd.f32 %v1230, %v1233
        %vm1235 = vweird.f32 %v1229
        %vm1236 = vweird.f32 %v1230
        %vm1237 = vmor %vm1235, %vm1236
        %v1238 = vsel %vm1237, %v1230, %v1234
        %v1239 = vand.u32 2147483647, %v1229
        %vm1240 = vcmp.eq.f32.partialorder %v1239, 8.507059e+37
        %v1241 = vand.u32 %v1229, 2147483648
        %v1242 = vor.u32 1.1754944e-38, %v1241
        %v1243 = vsel %vm1240, %v1242, %v1238
        %v1244 = vmul.f32 1.0, %v1243
        %v1245 = vtanh.pop %v1205
        %v1246 = vxor.u32 %v1206, 2147483648
        %v1247 = vmul.f32 %v1246, 1.442695
        %v1248 = vpow.pop %v1247
        %v1249 = vadd.f32 %v1248, 1.0
        %v1250 = vrcp.pop %v1249
        %v1251 = vmul.f32 %v1249, %v1250
        %v1252 = vsub.f32 1.0, %v1251
        %v1253 = vmul.f32 %v1250, %v1252
        %v1254 = vadd.f32 %v1250, %v1253
        %vm1255 = vweird.f32 %v1249
        %vm1256 = vweird.f32 %v1250
        %vm1257 = vmor %vm1255, %vm1256
        %v1258 = vsel %vm1257, %v1250, %v1254
        %v1259 = vand.u32 2147483647, %v1249
        %vm1260 = vcmp.eq.f32.partialorder %v1259, 8.507059e+37
        %v1261 = vand.u32 %v1249, 2147483648
        %v1262 = vor.u32 1.1754944e-38, %v1261
        %v1263 = vsel %vm1260, %v1262, %v1258
        %v1264 = vmul.f32 1.0, %v1263
        %v1265 = vmul.f32 %v1244, %v819
        %v1266 = vmul.f32 %v1225, %v1245
        %v1267 = vadd.f32 %v1265, %v1266
        %v1268 = vtanh.pop %v1267
        %v1269 = vmul.f32 %v1264, %v1268
        %v1270 = vsel %vm1051, 1, 0
        %1271 = vset.pattern.permute.xlu0 0
        %1272 = vperm.xlu0 %1271, %v1270
        %v1273 = vpop.permute.xlu0 %1272
        %vm1274 = vcmp.eq.s32.totalorder %v1273, 1
        %v1275 = vsel %vm1274, %v1269, %v818
        %v1276 = vsel %vm1274, %v1267, %v819
        %v1277 = vsel %vm1274, %v1269, 0.0
        %s1278 = scalar_lea.vmem %s437, 24 [#allocation15]
        %1279 = vst [vmem:[%s1278] sm:$0xff] %v1277
        %s1280 = sadd.s32 %s813, 1
        %v1281 = vstv %s1280
        %vm1282 = vcmp.gt.s32.totalorder %v463, %v1281
        %s1283 = smul.u32 1, 4
        %s1284 = smul.addr %s1283, 8
        %s1285 = scalar_lea.vmem [#allocation2], %s1284
        %v1286 = vld [vmem:[%s1285] sm:$0xff]
        %v1287 = vld [vmem:[%s1285 + $0x8] sm:$0xff]
        %v1288 = vld [vmem:[%s1285 + $0x10] sm:$0xff]
        %v1289 = vld [vmem:[%s1285 + $0x18] sm:$0xff]
        %v1290 = vld [vmem:[#allocation11] sm:$0xff]
        %v1291 = vld [vmem:[#allocation11 + $0x8] sm:$0xff]
        %v1292 = vld [vmem:[#allocation11 + $0x10] sm:$0xff]
        %v1293 = vld [vmem:[#allocation11 + $0x18] sm:$0xff]
        %v1294 = vld [vmem:[#allocation11 + $0x20] sm:$0xff]
        %v1295 = vld [vmem:[#allocation11 + $0x28] sm:$0xff]
        %v1296 = vld [vmem:[#allocation11 + $0x30] sm:$0xff]
        %v1297 = vld [vmem:[#allocation11 + $0x38] sm:$0xff]
        %v1298 = vld [vmem:[#allocation11 + $0x40] sm:$0xff]
        %v1299 = vld [vmem:[#allocation11 + $0x48] sm:$0xff]
        %v1300 = vld [vmem:[#allocation11 + $0x50] sm:$0xff]
        %v1301 = vld [vmem:[#allocation11 + $0x58] sm:$0xff]
        %v1302 = vld [vmem:[#allocation11 + $0x60] sm:$0xff]
        %v1303 = vld [vmem:[#allocation11 + $0x68] sm:$0xff]
        %v1304 = vld [vmem:[#allocation11 + $0x70] sm:$0xff]
        %v1305 = vld [vmem:[#allocation11 + $0x78] sm:$0xff]
        %v1306 = vld [vmem:[#allocation11 + $0x80] sm:$0xff]
        %v1307 = vld [vmem:[#allocation11 + $0x88] sm:$0xff]
        %v1308 = vld [vmem:[#allocation11 + $0x90] sm:$0xff]
        %v1309 = vld [vmem:[#allocation11 + $0x98] sm:$0xff]
        %v1310 = vld [vmem:[#allocation11 + $0xa0] sm:$0xff]
        %v1311 = vld [vmem:[#allocation11 + $0xa8] sm:$0xff]
        %v1312 = vld [vmem:[#allocation11 + $0xb0] sm:$0xff]
        %v1313 = vld [vmem:[#allocation11 + $0xb8] sm:$0xff]
        %v1314 = vld [vmem:[#allocation11 + $0xc0] sm:$0xff]
        %v1315 = vld [vmem:[#allocation11 + $0xc8] sm:$0xff]
        %v1316 = vld [vmem:[#allocation11 + $0xd0] sm:$0xff]
        %v1317 = vld [vmem:[#allocation11 + $0xd8] sm:$0xff]
        %v1318 = vld [vmem:[#allocation11 + $0xe0] sm:$0xff]
        %v1319 = vld [vmem:[#allocation11 + $0xe8] sm:$0xff]
        %v1320 = vld [vmem:[#allocation11 + $0xf0] sm:$0xff]
        %v1321 = vld [vmem:[#allocation11 + $0xf8] sm:$0xff]
        %v1322 = vld [vmem:[#allocation11 + $0x100] sm:$0xff]
        %v1323 = vld [vmem:[#allocation11 + $0x108] sm:$0xff]
        %v1324 = vld [vmem:[#allocation11 + $0x110] sm:$0xff]
        %v1325 = vld [vmem:[#allocation11 + $0x118] sm:$0xff]
        %v1326 = vld [vmem:[#allocation11 + $0x120] sm:$0xff]
        %v1327 = vld [vmem:[#allocation11 + $0x128] sm:$0xff]
        %v1328 = vld [vmem:[#allocation11 + $0x130] sm:$0xff]
        %v1329 = vld [vmem:[#allocation11 + $0x138] sm:$0xff]
        %v1330 = vld [vmem:[#allocation11 + $0x140] sm:$0xff]
        %v1331 = vld [vmem:[#allocation11 + $0x148] sm:$0xff]
        %v1332 = vld [vmem:[#allocation11 + $0x150] sm:$0xff]
        %v1333 = vld [vmem:[#allocation11 + $0x158] sm:$0xff]
        %v1334 = vld [vmem:[#allocation11 + $0x160] sm:$0xff]
        %v1335 = vld [vmem:[#allocation11 + $0x168] sm:$0xff]
        %v1336 = vld [vmem:[#allocation11 + $0x170] sm:$0xff]
        %v1337 = vld [vmem:[#allocation11 + $0x178] sm:$0xff]
        %v1338 = vld [vmem:[#allocation11 + $0x180] sm:$0xff]
        %v1339 = vld [vmem:[#allocation11 + $0x188] sm:$0xff]
        %v1340 = vld [vmem:[#allocation11 + $0x190] sm:$0xff]
        %v1341 = vld [vmem:[#allocation11 + $0x198] sm:$0xff]
        %v1342 = vld [vmem:[#allocation11 + $0x1a0] sm:$0xff]
        %v1343 = vld [vmem:[#allocation11 + $0x1a8] sm:$0xff]
        %v1344 = vld [vmem:[#allocation11 + $0x1b0] sm:$0xff]
        %v1345 = vld [vmem:[#allocation11 + $0x1b8] sm:$0xff]
        %v1346 = vld [vmem:[#allocation11 + $0x1c0] sm:$0xff]
        %v1347 = vld [vmem:[#allocation11 + $0x1c8] sm:$0xff]
        %v1348 = vld [vmem:[#allocation11 + $0x1d0] sm:$0xff]
        %v1349 = vld [vmem:[#allocation11 + $0x1d8] sm:$0xff]
        %v1350 = vld [vmem:[#allocation11 + $0x1e0] sm:$0xff]
        %v1351 = vld [vmem:[#allocation11 + $0x1e8] sm:$0xff]
        %v1352 = vld [vmem:[#allocation11 + $0x1f0] sm:$0xff]
        %v1353 = vld [vmem:[#allocation11 + $0x1f8] sm:$0xff]
        %1354 = vmatpush.msra.mxu0 %v1350
        %1355 = vmatpush.msra.mxu0 %v1346
        %1356 = vmatpush.msra.mxu0 %v1342
        %1357 = vmatpush.msra.mxu0 %v1338
        %1358 = vmatpush.msra.mxu0 %v1334
        %1359 = vmatpush.msra.mxu0 %v1330
        %1360 = vmatpush.msra.mxu0 %v1326
        %1361 = vmatpush.msra.mxu0 %v1322
        %1362 = vmatpush.msra.mxu0 %v1318
        %1363 = vmatpush.msra.mxu0 %v1314
        %1364 = vmatpush.msra.mxu0 %v1310
        %1365 = vmatpush.msra.mxu0 %v1306
        %1366 = vmatpush.msra.mxu0 %v1302
        %1367 = vmatpush.msra.mxu0 %v1298
        %1368 = vmatpush.msra.mxu0 %v1294
        %1369 = vmatpush.msra.mxu0 %v1290
        %1370 = vmatmul.f32.gmra.mxu0 %v1045
        %v1371 = vpop.f32.mrf.mxu0
        %v1372 = vadd.f32 0.0, %v1371
        %1373 = vdwg.mxu0
        %1374 = vmatpush.msra.mxu0 %v1351
        %1375 = vmatpush.msra.mxu0 %v1347
        %1376 = vmatpush.msra.mxu0 %v1343
        %1377 = vmatpush.msra.mxu0 %v1339
        %1378 = vmatpush.msra.mxu0 %v1335
        %1379 = vmatpush.msra.mxu0 %v1331
        %1380 = vmatpush.msra.mxu0 %v1327
        %1381 = vmatpush.msra.mxu0 %v1323
        %1382 = vmatpush.msra.mxu0 %v1319
        %1383 = vmatpush.msra.mxu0 %v1315
        %1384 = vmatpush.msra.mxu0 %v1311
        %1385 = vmatpush.msra.mxu0 %v1307
        %1386 = vmatpush.msra.mxu0 %v1303
        %1387 = vmatpush.msra.mxu0 %v1299
        %1388 = vmatpush.msra.mxu0 %v1295
        %1389 = vmatpush.msra.mxu0 %v1291
        %1390 = vmatmul.f32.gmra.mxu0 %v1045
        %v1391 = vpop.f32.mrf.mxu0
        %v1392 = vadd.f32 0.0, %v1391
        %1393 = vdwg.mxu0
        %1394 = vmatpush.msra.mxu0 %v1352
        %1395 = vmatpush.msra.mxu0 %v1348
        %1396 = vmatpush.msra.mxu0 %v1344
        %1397 = vmatpush.msra.mxu0 %v1340
        %1398 = vmatpush.msra.mxu0 %v1336
        %1399 = vmatpush.msra.mxu0 %v1332
        %1400 = vmatpush.msra.mxu0 %v1328
        %1401 = vmatpush.msra.mxu0 %v1324
        %1402 = vmatpush.msra.mxu0 %v1320
        %1403 = vmatpush.msra.mxu0 %v1316
        %1404 = vmatpush.msra.mxu0 %v1312
        %1405 = vmatpush.msra.mxu0 %v1308
        %1406 = vmatpush.msra.mxu0 %v1304
        %1407 = vmatpush.msra.mxu0 %v1300
        %1408 = vmatpush.msra.mxu0 %v1296
        %1409 = vmatpush.msra.mxu0 %v1292
        %1410 = vmatmul.f32.gmra.mxu0 %v1045
        %v1411 = vpop.f32.mrf.mxu0
        %v1412 = vadd.f32 0.0, %v1411
        %1413 = vdwg.mxu0
        %1414 = vmatpush.msra.mxu0 %v1353
        %1415 = vmatpush.msra.mxu0 %v1349
        %1416 = vmatpush.msra.mxu0 %v1345
        %1417 = vmatpush.msra.mxu0 %v1341
        %1418 = vmatpush.msra.mxu0 %v1337
        %1419 = vmatpush.msra.mxu0 %v1333
        %1420 = vmatpush.msra.mxu0 %v1329
        %1421 = vmatpush.msra.mxu0 %v1325
        %1422 = vmatpush.msra.mxu0 %v1321
        %1423 = vmatpush.msra.mxu0 %v1317
        %1424 = vmatpush.msra.mxu0 %v1313
        %1425 = vmatpush.msra.mxu0 %v1309
        %1426 = vmatpush.msra.mxu0 %v1305
        %1427 = vmatpush.msra.mxu0 %v1301
        %1428 = vmatpush.msra.mxu0 %v1297
        %1429 = vmatpush.msra.mxu0 %v1293
        %1430 = vmatmul.f32.gmra.mxu0 %v1045
        %v1431 = vpop.f32.mrf.mxu0
        %v1432 = vadd.f32 0.0, %v1431
        %1433 = vdwg.mxu0
        %v1434 = vadd.f32 %v1286, %v1372
        %v1435 = vadd.f32 %v1287, %v1392
        %v1436 = vadd.f32 %v1288, %v1412
        %v1437 = vadd.f32 %v1289, %v1432
        %v1438 = vxor.u32 %v1434, 2147483648
        %v1439 = vmul.f32 %v1438, 1.442695
        %v1440 = vpow.pop %v1439
        %v1441 = vadd.f32 %v1440, 1.0
        %v1442 = vrcp.pop %v1441
        %v1443 = vmul.f32 %v1441, %v1442
        %v1444 = vsub.f32 1.0, %v1443
        %v1445 = vmul.f32 %v1442, %v1444
        %v1446 = vadd.f32 %v1442, %v1445
        %vm1447 = vweird.f32 %v1441
        %vm1448 = vweird.f32 %v1442
        %vm1449 = vmor %vm1447, %vm1448
        %v1450 = vsel %vm1449, %v1442, %v1446
        %v1451 = vand.u32 2147483647, %v1441
        %vm1452 = vcmp.eq.f32.partialorder %v1451, 8.507059e+37
        %v1453 = vand.u32 %v1441, 2147483648
        %v1454 = vor.u32 1.1754944e-38, %v1453
        %v1455 = vsel %vm1452, %v1454, %v1450
        %v1456 = vmul.f32 1.0, %v1455
        %v1457 = vxor.u32 %v1435, 2147483648
        %v1458 = vmul.f32 %v1457, 1.442695
        %v1459 = vpow.pop %v1458
        %v1460 = vadd.f32 %v1459, 1.0
        %v1461 = vrcp.pop %v1460
        %v1462 = vmul.f32 %v1460, %v1461
        %v1463 = vsub.f32 1.0, %v1462
        %v1464 = vmul.f32 %v1461, %v1463
        %v1465 = vadd.f32 %v1461, %v1464
        %vm1466 = vweird.f32 %v1460
        %vm1467 = vweird.f32 %v1461
        %vm1468 = vmor %vm1466, %vm1467
        %v1469 = vsel %vm1468, %v1461, %v1465
        %v1470 = vand.u32 2147483647, %v1460
        %vm1471 = vcmp.eq.f32.partialorder %v1470, 8.507059e+37
        %v1472 = vand.u32 %v1460, 2147483648
        %v1473 = vor.u32 1.1754944e-38, %v1472
        %v1474 = vsel %vm1471, %v1473, %v1469
        %v1475 = vmul.f32 1.0, %v1474
        %v1476 = vtanh.pop %v1436
        %v1477 = vxor.u32 %v1437, 2147483648
        %v1478 = vmul.f32 %v1477, 1.442695
        %v1479 = vpow.pop %v1478
        %v1480 = vadd.f32 %v1479, 1.0
        %v1481 = vrcp.pop %v1480
        %v1482 = vmul.f32 %v1480, %v1481
        %v1483 = vsub.f32 1.0, %v1482
        %v1484 = vmul.f32 %v1481, %v1483
        %v1485 = vadd.f32 %v1481, %v1484
        %vm1486 = vweird.f32 %v1480
        %vm1487 = vweird.f32 %v1481
        %vm1488 = vmor %vm1486, %vm1487
        %v1489 = vsel %vm1488, %v1481, %v1485
        %v1490 = vand.u32 2147483647, %v1480
        %vm1491 = vcmp.eq.f32.partialorder %v1490, 8.507059e+37
        %v1492 = vand.u32 %v1480, 2147483648
        %v1493 = vor.u32 1.1754944e-38, %v1492
        %v1494 = vsel %vm1491, %v1493, %v1489
        %v1495 = vmul.f32 1.0, %v1494
        %v1496 = vmul.f32 %v1475, %v1046
        %v1497 = vmul.f32 %v1456, %v1476
        %v1498 = vadd.f32 %v1496, %v1497
        %v1499 = vtanh.pop %v1498
        %v1500 = vmul.f32 %v1495, %v1499
        %v1501 = vsel %vm1282, 1, 0
        %1502 = vset.pattern.permute.xlu0 0
        %1503 = vperm.xlu0 %1502, %v1501
        %v1504 = vpop.permute.xlu0 %1503
        %vm1505 = vcmp.eq.s32.totalorder %v1504, 1
        %v1506 = vsel %vm1505, %v1500, %v1045
        %v1507 = vsel %vm1505, %v1498, %v1046
        %v1508 = vsel %vm1505, %v1500, 0.0
        %s1509 = scalar_lea.vmem %s430, 8 [#allocation14]
        %1510 = vst [vmem:[%s1509] sm:$0xff] %v1508
        %s1511 = sadd.s32 %s815, 2
        %v1512 = vstv %s1511
        %vm1513 = vcmp.gt.s32.totalorder %v463, %v1512
        %s1514 = smul.u32 2, 4
        %s1515 = smul.addr %s1514, 8
        %s1516 = scalar_lea.vmem [#allocation3], %s1515
        %v1517 = vld [vmem:[%s1516] sm:$0xff]
        %v1518 = vld [vmem:[%s1516 + $0x8] sm:$0xff]
        %v1519 = vld [vmem:[%s1516 + $0x10] sm:$0xff]
        %v1520 = vld [vmem:[%s1516 + $0x18] sm:$0xff]
        %v1521 = vld [vmem:[#allocation13] sm:$0xff]
        %v1522 = vld [vmem:[#allocation13 + $0x8] sm:$0xff]
        %v1523 = vld [vmem:[#allocation13 + $0x10] sm:$0xff]
        %v1524 = vld [vmem:[#allocation13 + $0x18] sm:$0xff]
        %v1525 = vld [vmem:[#allocation13 + $0x20] sm:$0xff]
        %v1526 = vld [vmem:[#allocation13 + $0x28] sm:$0xff]
        %v1527 = vld [vmem:[#allocation13 + $0x30] sm:$0xff]
        %v1528 = vld [vmem:[#allocation13 + $0x38] sm:$0xff]
        %v1529 = vld [vmem:[#allocation13 + $0x40] sm:$0xff]
        %v1530 = vld [vmem:[#allocation13 + $0x48] sm:$0xff]
        %v1531 = vld [vmem:[#allocation13 + $0x50] sm:$0xff]
        %v1532 = vld [vmem:[#allocation13 + $0x58] sm:$0xff]
        %v1533 = vld [vmem:[#allocation13 + $0x60] sm:$0xff]
        %v1534 = vld [vmem:[#allocation13 + $0x68] sm:$0xff]
        %v1535 = vld [vmem:[#allocation13 + $0x70] sm:$0xff]
        %v1536 = vld [vmem:[#allocation13 + $0x78] sm:$0xff]
        %v1537 = vld [vmem:[#allocation13 + $0x80] sm:$0xff]
        %v1538 = vld [vmem:[#allocation13 + $0x88] sm:$0xff]
        %v1539 = vld [vmem:[#allocation13 + $0x90] sm:$0xff]
        %v1540 = vld [vmem:[#allocation13 + $0x98] sm:$0xff]
        %v1541 = vld [vmem:[#allocation13 + $0xa0] sm:$0xff]
        %v1542 = vld [vmem:[#allocation13 + $0xa8] sm:$0xff]
        %v1543 = vld [vmem:[#allocation13 + $0xb0] sm:$0xff]
        %v1544 = vld [vmem:[#allocation13 + $0xb8] sm:$0xff]
        %v1545 = vld [vmem:[#allocation13 + $0xc0] sm:$0xff]
        %v1546 = vld [vmem:[#allocation13 + $0xc8] sm:$0xff]
        %v1547 = vld [vmem:[#allocation13 + $0xd0] sm:$0xff]
        %v1548 = vld [vmem:[#allocation13 + $0xd8] sm:$0xff]
        %v1549 = vld [vmem:[#allocation13 + $0xe0] sm:$0xff]
        %v1550 = vld [vmem:[#allocation13 + $0xe8] sm:$0xff]
        %v1551 = vld [vmem:[#allocation13 + $0xf0] sm:$0xff]
        %v1552 = vld [vmem:[#allocation13 + $0xf8] sm:$0xff]
        %v1553 = vld [vmem:[#allocation13 + $0x100] sm:$0xff]
        %v1554 = vld [vmem:[#allocation13 + $0x108] sm:$0xff]
        %v1555 = vld [vmem:[#allocation13 + $0x110] sm:$0xff]
        %v1556 = vld [vmem:[#allocation13 + $0x118] sm:$0xff]
        %v1557 = vld [vmem:[#allocation13 + $0x120] sm:$0xff]
        %v1558 = vld [vmem:[#allocation13 + $0x128] sm:$0xff]
        %v1559 = vld [vmem:[#allocation13 + $0x130] sm:$0xff]
        %v1560 = vld [vmem:[#allocation13 + $0x138] sm:$0xff]
        %v1561 = vld [vmem:[#allocation13 + $0x140] sm:$0xff]
        %v1562 = vld [vmem:[#allocation13 + $0x148] sm:$0xff]
        %v1563 = vld [vmem:[#allocation13 + $0x150] sm:$0xff]
        %v1564 = vld [vmem:[#allocation13 + $0x158] sm:$0xff]
        %v1565 = vld [vmem:[#allocation13 + $0x160] sm:$0xff]
        %v1566 = vld [vmem:[#allocation13 + $0x168] sm:$0xff]
        %v1567 = vld [vmem:[#allocation13 + $0x170] sm:$0xff]
        %v1568 = vld [vmem:[#allocation13 + $0x178] sm:$0xff]
        %v1569 = vld [vmem:[#allocation13 + $0x180] sm:$0xff]
        %v1570 = vld [vmem:[#allocation13 + $0x188] sm:$0xff]
        %v1571 = vld [vmem:[#allocation13 + $0x190] sm:$0xff]
        %v1572 = vld [vmem:[#allocation13 + $0x198] sm:$0xff]
        %v1573 = vld [vmem:[#allocation13 + $0x1a0] sm:$0xff]
        %v1574 = vld [vmem:[#allocation13 + $0x1a8] sm:$0xff]
        %v1575 = vld [vmem:[#allocation13 + $0x1b0] sm:$0xff]
        %v1576 = vld [vmem:[#allocation13 + $0x1b8] sm:$0xff]
        %v1577 = vld [vmem:[#allocation13 + $0x1c0] sm:$0xff]
        %v1578 = vld [vmem:[#allocation13 + $0x1c8] sm:$0xff]
        %v1579 = vld [vmem:[#allocation13 + $0x1d0] sm:$0xff]
        %v1580 = vld [vmem:[#allocation13 + $0x1d8] sm:$0xff]
        %v1581 = vld [vmem:[#allocation13 + $0x1e0] sm:$0xff]
        %v1582 = vld [vmem:[#allocation13 + $0x1e8] sm:$0xff]
        %v1583 = vld [vmem:[#allocation13 + $0x1f0] sm:$0xff]
        %v1584 = vld [vmem:[#allocation13 + $0x1f8] sm:$0xff]
        %1585 = vmatpush.msra.mxu0 %v1581
        %1586 = vmatpush.msra.mxu0 %v1577
        %1587 = vmatpush.msra.mxu0 %v1573
        %1588 = vmatpush.msra.mxu0 %v1569
        %1589 = vmatpush.msra.mxu0 %v1565
        %1590 = vmatpush.msra.mxu0 %v1561
        %1591 = vmatpush.msra.mxu0 %v1557
        %1592 = vmatpush.msra.mxu0 %v1553
        %1593 = vmatpush.msra.mxu0 %v1549
        %1594 = vmatpush.msra.mxu0 %v1545
        %1595 = vmatpush.msra.mxu0 %v1541
        %1596 = vmatpush.msra.mxu0 %v1537
        %1597 = vmatpush.msra.mxu0 %v1533
        %1598 = vmatpush.msra.mxu0 %v1529
        %1599 = vmatpush.msra.mxu0 %v1525
        %1600 = vmatpush.msra.mxu0 %v1521
        %1601 = vmatmul.f32.gmra.mxu0 %v1275
        %v1602 = vpop.f32.mrf.mxu0
        %v1603 = vadd.f32 0.0, %v1602
        %1604 = vdwg.mxu0
        %1605 = vmatpush.msra.mxu0 %v1582
        %1606 = vmatpush.msra.mxu0 %v1578
        %1607 = vmatpush.msra.mxu0 %v1574
        %1608 = vmatpush.msra.mxu0 %v1570
        %1609 = vmatpush.msra.mxu0 %v1566
        %1610 = vmatpush.msra.mxu0 %v1562
        %1611 = vmatpush.msra.mxu0 %v1558
        %1612 = vmatpush.msra.mxu0 %v1554
        %1613 = vmatpush.msra.mxu0 %v1550
        %1614 = vmatpush.msra.mxu0 %v1546
        %1615 = vmatpush.msra.mxu0 %v1542
        %1616 = vmatpush.msra.mxu0 %v1538
        %1617 = vmatpush.msra.mxu0 %v1534
        %1618 = vmatpush.msra.mxu0 %v1530
        %1619 = vmatpush.msra.mxu0 %v1526
        %1620 = vmatpush.msra.mxu0 %v1522
        %1621 = vmatmul.f32.gmra.mxu0 %v1275
        %v1622 = vpop.f32.mrf.mxu0
        %v1623 = vadd.f32 0.0, %v1622
        %1624 = vdwg.mxu0
        %1625 = vmatpush.msra.mxu0 %v1583
        %1626 = vmatpush.msra.mxu0 %v1579
        %1627 = vmatpush.msra.mxu0 %v1575
        %1628 = vmatpush.msra.mxu0 %v1571
        %1629 = vmatpush.msra.mxu0 %v1567
        %1630 = vmatpush.msra.mxu0 %v1563
        %1631 = vmatpush.msra.mxu0 %v1559
        %1632 = vmatpush.msra.mxu0 %v1555
        %1633 = vmatpush.msra.mxu0 %v1551
        %1634 = vmatpush.msra.mxu0 %v1547
        %1635 = vmatpush.msra.mxu0 %v1543
        %1636 = vmatpush.msra.mxu0 %v1539
        %1637 = vmatpush.msra.mxu0 %v1535
        %1638 = vmatpush.msra.mxu0 %v1531
        %1639 = vmatpush.msra.mxu0 %v1527
        %1640 = vmatpush.msra.mxu0 %v1523
        %1641 = vmatmul.f32.gmra.mxu0 %v1275
        %v1642 = vpop.f32.mrf.mxu0
        %v1643 = vadd.f32 0.0, %v1642
        %1644 = vdwg.mxu0
        %1645 = vmatpush.msra.mxu0 %v1584
        %1646 = vmatpush.msra.mxu0 %v1580
        %1647 = vmatpush.msra.mxu0 %v1576
        %1648 = vmatpush.msra.mxu0 %v1572
        %1649 = vmatpush.msra.mxu0 %v1568
        %1650 = vmatpush.msra.mxu0 %v1564
        %1651 = vmatpush.msra.mxu0 %v1560
        %1652 = vmatpush.msra.mxu0 %v1556
        %1653 = vmatpush.msra.mxu0 %v1552
        %1654 = vmatpush.msra.mxu0 %v1548
        %1655 = vmatpush.msra.mxu0 %v1544
        %1656 = vmatpush.msra.mxu0 %v1540
        %1657 = vmatpush.msra.mxu0 %v1536
        %1658 = vmatpush.msra.mxu0 %v1532
        %1659 = vmatpush.msra.mxu0 %v1528
        %1660 = vmatpush.msra.mxu0 %v1524
        %1661 = vmatmul.f32.gmra.mxu0 %v1275
        %v1662 = vpop.f32.mrf.mxu0
        %v1663 = vadd.f32 0.0, %v1662
        %1664 = vdwg.mxu0
        %v1665 = vadd.f32 %v1517, %v1603
        %v1666 = vadd.f32 %v1518, %v1623
        %v1667 = vadd.f32 %v1519, %v1643
        %v1668 = vadd.f32 %v1520, %v1663
        %v1669 = vxor.u32 %v1665, 2147483648
        %v1670 = vmul.f32 %v1669, 1.442695
        %v1671 = vpow.pop %v1670
        %v1672 = vadd.f32 %v1671, 1.0
        %v1673 = vrcp.pop %v1672
        %v1674 = vmul.f32 %v1672, %v1673
        %v1675 = vsub.f32 1.0, %v1674
        %v1676 = vmul.f32 %v1673, %v1675
        %v1677 = vadd.f32 %v1673, %v1676
        %vm1678 = vweird.f32 %v1672
        %vm1679 = vweird.f32 %v1673
        %vm1680 = vmor %vm1678, %vm1679
        %v1681 = vsel %vm1680, %v1673, %v1677
        %v1682 = vand.u32 2147483647, %v1672
        %vm1683 = vcmp.eq.f32.partialorder %v1682, 8.507059e+37
        %v1684 = vand.u32 %v1672, 2147483648
        %v1685 = vor.u32 1.1754944e-38, %v1684
        %v1686 = vsel %vm1683, %v1685, %v1681
        %v1687 = vmul.f32 1.0, %v1686
        %v1688 = vxor.u32 %v1666, 2147483648
        %v1689 = vmul.f32 %v1688, 1.442695
        %v1690 = vpow.pop %v1689
        %v1691 = vadd.f32 %v1690, 1.0
        %v1692 = vrcp.pop %v1691
        %v1693 = vmul.f32 %v1691, %v1692
        %v1694 = vsub.f32 1.0, %v1693
        %v1695 = vmul.f32 %v1692, %v1694
        %v1696 = vadd.f32 %v1692, %v1695
        %vm1697 = vweird.f32 %v1691
        %vm1698 = vweird.f32 %v1692
        %vm1699 = vmor %vm1697, %vm1698
        %v1700 = vsel %vm1699, %v1692, %v1696
        %v1701 = vand.u32 2147483647, %v1691
        %vm1702 = vcmp.eq.f32.partialorder %v1701, 8.507059e+37
        %v1703 = vand.u32 %v1691, 2147483648
        %v1704 = vor.u32 1.1754944e-38, %v1703
        %v1705 = vsel %vm1702, %v1704, %v1700
        %v1706 = vmul.f32 1.0, %v1705
        %v1707 = vtanh.pop %v1667
        %v1708 = vxor.u32 %v1668, 2147483648
        %v1709 = vmul.f32 %v1708, 1.442695
        %v1710 = vpow.pop %v1709
        %v1711 = vadd.f32 %v1710, 1.0
        %v1712 = vrcp.pop %v1711
        %v1713 = vmul.f32 %v1711, %v1712
        %v1714 = vsub.f32 1.0, %v1713
        %v1715 = vmul.f32 %v1712, %v1714
        %v1716 = vadd.f32 %v1712, %v1715
        %vm1717 = vweird.f32 %v1711
        %vm1718 = vweird.f32 %v1712
        %vm1719 = vmor %vm1717, %vm1718
        %v1720 = vsel %vm1719, %v1712, %v1716
        %v1721 = vand.u32 2147483647, %v1711
        %vm1722 = vcmp.eq.f32.partialorder %v1721, 8.507059e+37
        %v1723 = vand.u32 %v1711, 2147483648
        %v1724 = vor.u32 1.1754944e-38, %v1723
        %v1725 = vsel %vm1722, %v1724, %v1720
        %v1726 = vmul.f32 1.0, %v1725
        %v1727 = vmul.f32 %v1706, %v1276
        %v1728 = vmul.f32 %v1687, %v1707
        %v1729 = vadd.f32 %v1727, %v1728
        %v1730 = vtanh.pop %v1729
        %v1731 = vmul.f32 %v1726, %v1730
        %v1732 = vsel %vm1513, 1, 0
        %1733 = vset.pattern.permute.xlu0 0
        %1734 = vperm.xlu0 %1733, %v1732
        %v1735 = vpop.permute.xlu0 %1734
        %vm1736 = vcmp.eq.s32.totalorder %v1735, 1
        %v1737 = vsel %vm1736, %v1731, %v1275
        %v1738 = vsel %vm1736, %v1729, %v1276
        %v1739 = vsel %vm1736, %v1731, 0.0
        %s1740 = scalar_lea.vmem %s437, 16 [#allocation15]
        %1741 = vst [vmem:[%s1740] sm:$0xff] %v1739
        %s1742 = sadd.s32 %s813, 2
        %v1743 = vstv %s1742
        %vm1744 = vcmp.gt.s32.totalorder %v463, %v1743
        %s1745 = smul.addr %s1514, 8
        %s1746 = scalar_lea.vmem [#allocation2], %s1745
        %v1747 = vld [vmem:[%s1746] sm:$0xff]
        %v1748 = vld [vmem:[%s1746 + $0x8] sm:$0xff]
        %v1749 = vld [vmem:[%s1746 + $0x10] sm:$0xff]
        %v1750 = vld [vmem:[%s1746 + $0x18] sm:$0xff]
        %v1751 = vld [vmem:[#allocation11] sm:$0xff]
        %v1752 = vld [vmem:[#allocation11 + $0x8] sm:$0xff]
        %v1753 = vld [vmem:[#allocation11 + $0x10] sm:$0xff]
        %v1754 = vld [vmem:[#allocation11 + $0x18] sm:$0xff]
        %v1755 = vld [vmem:[#allocation11 + $0x20] sm:$0xff]
        %v1756 = vld [vmem:[#allocation11 + $0x28] sm:$0xff]
        %v1757 = vld [vmem:[#allocation11 + $0x30] sm:$0xff]
        %v1758 = vld [vmem:[#allocation11 + $0x38] sm:$0xff]
        %v1759 = vld [vmem:[#allocation11 + $0x40] sm:$0xff]
        %v1760 = vld [vmem:[#allocation11 + $0x48] sm:$0xff]
        %v1761 = vld [vmem:[#allocation11 + $0x50] sm:$0xff]
        %v1762 = vld [vmem:[#allocation11 + $0x58] sm:$0xff]
        %v1763 = vld [vmem:[#allocation11 + $0x60] sm:$0xff]
        %v1764 = vld [vmem:[#allocation11 + $0x68] sm:$0xff]
        %v1765 = vld [vmem:[#allocation11 + $0x70] sm:$0xff]
        %v1766 = vld [vmem:[#allocation11 + $0x78] sm:$0xff]
        %v1767 = vld [vmem:[#allocation11 + $0x80] sm:$0xff]
        %v1768 = vld [vmem:[#allocation11 + $0x88] sm:$0xff]
        %v1769 = vld [vmem:[#allocation11 + $0x90] sm:$0xff]
        %v1770 = vld [vmem:[#allocation11 + $0x98] sm:$0xff]
        %v1771 = vld [vmem:[#allocation11 + $0xa0] sm:$0xff]
        %v1772 = vld [vmem:[#allocation11 + $0xa8] sm:$0xff]
        %v1773 = vld [vmem:[#allocation11 + $0xb0] sm:$0xff]
        %v1774 = vld [vmem:[#allocation11 + $0xb8] sm:$0xff]
        %v1775 = vld [vmem:[#allocation11 + $0xc0] sm:$0xff]
        %v1776 = vld [vmem:[#allocation11 + $0xc8] sm:$0xff]
        %v1777 = vld [vmem:[#allocation11 + $0xd0] sm:$0xff]
        %v1778 = vld [vmem:[#allocation11 + $0xd8] sm:$0xff]
        %v1779 = vld [vmem:[#allocation11 + $0xe0] sm:$0xff]
        %v1780 = vld [vmem:[#allocation11 + $0xe8] sm:$0xff]
        %v1781 = vld [vmem:[#allocation11 + $0xf0] sm:$0xff]
        %v1782 = vld [vmem:[#allocation11 + $0xf8] sm:$0xff]
        %v1783 = vld [vmem:[#allocation11 + $0x100] sm:$0xff]
        %v1784 = vld [vmem:[#allocation11 + $0x108] sm:$0xff]
        %v1785 = vld [vmem:[#allocation11 + $0x110] sm:$0xff]
        %v1786 = vld [vmem:[#allocation11 + $0x118] sm:$0xff]
        %v1787 = vld [vmem:[#allocation11 + $0x120] sm:$0xff]
        %v1788 = vld [vmem:[#allocation11 + $0x128] sm:$0xff]
        %v1789 = vld [vmem:[#allocation11 + $0x130] sm:$0xff]
        %v1790 = vld [vmem:[#allocation11 + $0x138] sm:$0xff]
        %v1791 = vld [vmem:[#allocation11 + $0x140] sm:$0xff]
        %v1792 = vld [vmem:[#allocation11 + $0x148] sm:$0xff]
        %v1793 = vld [vmem:[#allocation11 + $0x150] sm:$0xff]
        %v1794 = vld [vmem:[#allocation11 + $0x158] sm:$0xff]
        %v1795 = vld [vmem:[#allocation11 + $0x160] sm:$0xff]
        %v1796 = vld [vmem:[#allocation11 + $0x168] sm:$0xff]
        %v1797 = vld [vmem:[#allocation11 + $0x170] sm:$0xff]
        %v1798 = vld [vmem:[#allocation11 + $0x178] sm:$0xff]
        %v1799 = vld [vmem:[#allocation11 + $0x180] sm:$0xff]
        %v1800 = vld [vmem:[#allocation11 + $0x188] sm:$0xff]
        %v1801 = vld [vmem:[#allocation11 + $0x190] sm:$0xff]
        %v1802 = vld [vmem:[#allocation11 + $0x198] sm:$0xff]
        %v1803 = vld [vmem:[#allocation11 + $0x1a0] sm:$0xff]
        %v1804 = vld [vmem:[#allocation11 + $0x1a8] sm:$0xff]
        %v1805 = vld [vmem:[#allocation11 + $0x1b0] sm:$0xff]
        %v1806 = vld [vmem:[#allocation11 + $0x1b8] sm:$0xff]
        %v1807 = vld [vmem:[#allocation11 + $0x1c0] sm:$0xff]
        %v1808 = vld [vmem:[#allocation11 + $0x1c8] sm:$0xff]
        %v1809 = vld [vmem:[#allocation11 + $0x1d0] sm:$0xff]
        %v1810 = vld [vmem:[#allocation11 + $0x1d8] sm:$0xff]
        %v1811 = vld [vmem:[#allocation11 + $0x1e0] sm:$0xff]
        %v1812 = vld [vmem:[#allocation11 + $0x1e8] sm:$0xff]
        %v1813 = vld [vmem:[#allocation11 + $0x1f0] sm:$0xff]
        %v1814 = vld [vmem:[#allocation11 + $0x1f8] sm:$0xff]
        %1815 = vmatpush.msra.mxu0 %v1811
        %1816 = vmatpush.msra.mxu0 %v1807
        %1817 = vmatpush.msra.mxu0 %v1803
        %1818 = vmatpush.msra.mxu0 %v1799
        %1819 = vmatpush.msra.mxu0 %v1795
        %1820 = vmatpush.msra.mxu0 %v1791
        %1821 = vmatpush.msra.mxu0 %v1787
        %1822 = vmatpush.msra.mxu0 %v1783
        %1823 = vmatpush.msra.mxu0 %v1779
        %1824 = vmatpush.msra.mxu0 %v1775
        %1825 = vmatpush.msra.mxu0 %v1771
        %1826 = vmatpush.msra.mxu0 %v1767
        %1827 = vmatpush.msra.mxu0 %v1763
        %1828 = vmatpush.msra.mxu0 %v1759
        %1829 = vmatpush.msra.mxu0 %v1755
        %1830 = vmatpush.msra.mxu0 %v1751
        %1831 = vmatmul.f32.gmra.mxu0 %v1506
        %v1832 = vpop.f32.mrf.mxu0
        %v1833 = vadd.f32 0.0, %v1832
        %1834 = vdwg.mxu0
        %1835 = vmatpush.msra.mxu0 %v1812
        %1836 = vmatpush.msra.mxu0 %v1808
        %1837 = vmatpush.msra.mxu0 %v1804
        %1838 = vmatpush.msra.mxu0 %v1800
        %1839 = vmatpush.msra.mxu0 %v1796
        %1840 = vmatpush.msra.mxu0 %v1792
        %1841 = vmatpush.msra.mxu0 %v1788
        %1842 = vmatpush.msra.mxu0 %v1784
        %1843 = vmatpush.msra.mxu0 %v1780
        %1844 = vmatpush.msra.mxu0 %v1776
        %1845 = vmatpush.msra.mxu0 %v1772
        %1846 = vmatpush.msra.mxu0 %v1768
        %1847 = vmatpush.msra.mxu0 %v1764
        %1848 = vmatpush.msra.mxu0 %v1760
        %1849 = vmatpush.msra.mxu0 %v1756
        %1850 = vmatpush.msra.mxu0 %v1752
        %1851 = vmatmul.f32.gmra.mxu0 %v1506
        %v1852 = vpop.f32.mrf.mxu0
        %v1853 = vadd.f32 0.0, %v1852
        %1854 = vdwg.mxu0
        %1855 = vmatpush.msra.mxu0 %v1813
        %1856 = vmatpush.msra.mxu0 %v1809
        %1857 = vmatpush.msra.mxu0 %v1805
        %1858 = vmatpush.msra.mxu0 %v1801
        %1859 = vmatpush.msra.mxu0 %v1797
        %1860 = vmatpush.msra.mxu0 %v1793
        %1861 = vmatpush.msra.mxu0 %v1789
        %1862 = vmatpush.msra.mxu0 %v1785
        %1863 = vmatpush.msra.mxu0 %v1781
        %1864 = vmatpush.msra.mxu0 %v1777
        %1865 = vmatpush.msra.mxu0 %v1773
        %1866 = vmatpush.msra.mxu0 %v1769
        %1867 = vmatpush.msra.mxu0 %v1765
        %1868 = vmatpush.msra.mxu0 %v1761
        %1869 = vmatpush.msra.mxu0 %v1757
        %1870 = vmatpush.msra.mxu0 %v1753
        %1871 = vmatmul.f32.gmra.mxu0 %v1506
        %v1872 = vpop.f32.mrf.mxu0
        %v1873 = vadd.f32 0.0, %v1872
        %1874 = vdwg.mxu0
        %1875 = vmatpush.msra.mxu0 %v1814
        %1876 = vmatpush.msra.mxu0 %v1810
        %1877 = vmatpush.msra.mxu0 %v1806
        %1878 = vmatpush.msra.mxu0 %v1802
        %1879 = vmatpush.msra.mxu0 %v1798
        %1880 = vmatpush.msra.mxu0 %v1794
        %1881 = vmatpush.msra.mxu0 %v1790
        %1882 = vmatpush.msra.mxu0 %v1786
        %1883 = vmatpush.msra.mxu0 %v1782
        %1884 = vmatpush.msra.mxu0 %v1778
        %1885 = vmatpush.msra.mxu0 %v1774
        %1886 = vmatpush.msra.mxu0 %v1770
        %1887 = vmatpush.msra.mxu0 %v1766
        %1888 = vmatpush.msra.mxu0 %v1762
        %1889 = vmatpush.msra.mxu0 %v1758
        %1890 = vmatpush.msra.mxu0 %v1754
        %1891 = vmatmul.f32.gmra.mxu0 %v1506
        %v1892 = vpop.f32.mrf.mxu0
        %v1893 = vadd.f32 0.0, %v1892
        %1894 = vdwg.mxu0
        %v1895 = vadd.f32 %v1747, %v1833
        %v1896 = vadd.f32 %v1748, %v1853
        %v1897 = vadd.f32 %v1749, %v1873
        %v1898 = vadd.f32 %v1750, %v1893
        %v1899 = vxor.u32 %v1895, 2147483648
        %v1900 = vmul.f32 %v1899, 1.442695
        %v1901 = vpow.pop %v1900
        %v1902 = vadd.f32 %v1901, 1.0
        %v1903 = vrcp.pop %v1902
        %v1904 = vmul.f32 %v1902, %v1903
        %v1905 = vsub.f32 1.0, %v1904
        %v1906 = vmul.f32 %v1903, %v1905
        %v1907 = vadd.f32 %v1903, %v1906
        %vm1908 = vweird.f32 %v1902
        %vm1909 = vweird.f32 %v1903
        %vm1910 = vmor %vm1908, %vm1909
        %v1911 = vsel %vm1910, %v1903, %v1907
        %v1912 = vand.u32 2147483647, %v1902
        %vm1913 = vcmp.eq.f32.partialorder %v1912, 8.507059e+37
        %v1914 = vand.u32 %v1902, 2147483648
        %v1915 = vor.u32 1.1754944e-38, %v1914
        %v1916 = vsel %vm1913, %v1915, %v1911
        %v1917 = vmul.f32 1.0, %v1916
        %v1918 = vxor.u32 %v1896, 2147483648
        %v1919 = vmul.f32 %v1918, 1.442695
        %v1920 = vpow.pop %v1919
        %v1921 = vadd.f32 %v1920, 1.0
        %v1922 = vrcp.pop %v1921
        %v1923 = vmul.f32 %v1921, %v1922
        %v1924 = vsub.f32 1.0, %v1923
        %v1925 = vmul.f32 %v1922, %v1924
        %v1926 = vadd.f32 %v1922, %v1925
        %vm1927 = vweird.f32 %v1921
        %vm1928 = vweird.f32 %v1922
        %vm1929 = vmor %vm1927, %vm1928
        %v1930 = vsel %vm1929, %v1922, %v1926
        %v1931 = vand.u32 2147483647, %v1921
        %vm1932 = vcmp.eq.f32.partialorder %v1931, 8.507059e+37
        %v1933 = vand.u32 %v1921, 2147483648
        %v1934 = vor.u32 1.1754944e-38, %v1933
        %v1935 = vsel %vm1932, %v1934, %v1930
        %v1936 = vmul.f32 1.0, %v1935
        %v1937 = vtanh.pop %v1897
        %v1938 = vxor.u32 %v1898, 2147483648
        %v1939 = vmul.f32 %v1938, 1.442695
        %v1940 = vpow.pop %v1939
        %v1941 = vadd.f32 %v1940, 1.0
        %v1942 = vrcp.pop %v1941
        %v1943 = vmul.f32 %v1941, %v1942
        %v1944 = vsub.f32 1.0, %v1943
        %v1945 = vmul.f32 %v1942, %v1944
        %v1946 = vadd.f32 %v1942, %v1945
        %vm1947 = vweird.f32 %v1941
        %vm1948 = vweird.f32 %v1942
        %vm1949 = vmor %vm1947, %vm1948
        %v1950 = vsel %vm1949, %v1942, %v1946
        %v1951 = vand.u32 2147483647, %v1941
        %vm1952 = vcmp.eq.f32.partialorder %v1951, 8.507059e+37
        %v1953 = vand.u32 %v1941, 2147483648
        %v1954 = vor.u32 1.1754944e-38, %v1953
        %v1955 = vsel %vm1952, %v1954, %v1950
        %v1956 = vmul.f32 1.0, %v1955
        %v1957 = vmul.f32 %v1936, %v1507
        %v1958 = vmul.f32 %v1917, %v1937
        %v1959 = vadd.f32 %v1957, %v1958
        %v1960 = vtanh.pop %v1959
        %v1961 = vmul.f32 %v1956, %v1960
        %v1962 = vsel %vm1744, 1, 0
        %1963 = vset.pattern.permute.xlu0 0
        %1964 = vperm.xlu0 %1963, %v1962
        %v1965 = vpop.permute.xlu0 %1964
        %vm1966 = vcmp.eq.s32.totalorder %v1965, 1
        %v1967 = vsel %vm1966, %v1961, %v1506
        %v1968 = vsel %vm1966, %v1959, %v1507
        %v1969 = vsel %vm1966, %v1961, 0.0
        %s1970 = scalar_lea.vmem %s430, 16 [#allocation14]
        %1971 = vst [vmem:[%s1970] sm:$0xff] %v1969
        %s1972 = sadd.s32 %s815, 1
        %v1973 = vstv %s1972
        %vm1974 = vcmp.gt.s32.totalorder %v463, %v1973
        %s1975 = smul.addr %s1283, 8
        %s1976 = scalar_lea.vmem [#allocation3], %s1975
        %v1977 = vld [vmem:[%s1976] sm:$0xff]
        %v1978 = vld [vmem:[%s1976 + $0x8] sm:$0xff]
        %v1979 = vld [vmem:[%s1976 + $0x10] sm:$0xff]
        %v1980 = vld [vmem:[%s1976 + $0x18] sm:$0xff]
        %v1981 = vld [vmem:[#allocation13] sm:$0xff]
        %v1982 = vld [vmem:[#allocation13 + $0x8] sm:$0xff]
        %v1983 = vld [vmem:[#allocation13 + $0x10] sm:$0xff]
        %v1984 = vld [vmem:[#allocation13 + $0x18] sm:$0xff]
        %v1985 = vld [vmem:[#allocation13 + $0x20] sm:$0xff]
        %v1986 = vld [vmem:[#allocation13 + $0x28] sm:$0xff]
        %v1987 = vld [vmem:[#allocation13 + $0x30] sm:$0xff]
        %v1988 = vld [vmem:[#allocation13 + $0x38] sm:$0xff]
        %v1989 = vld [vmem:[#allocation13 + $0x40] sm:$0xff]
        %v1990 = vld [vmem:[#allocation13 + $0x48] sm:$0xff]
        %v1991 = vld [vmem:[#allocation13 + $0x50] sm:$0xff]
        %v1992 = vld [vmem:[#allocation13 + $0x58] sm:$0xff]
        %v1993 = vld [vmem:[#allocation13 + $0x60] sm:$0xff]
        %v1994 = vld [vmem:[#allocation13 + $0x68] sm:$0xff]
        %v1995 = vld [vmem:[#allocation13 + $0x70] sm:$0xff]
        %v1996 = vld [vmem:[#allocation13 + $0x78] sm:$0xff]
        %v1997 = vld [vmem:[#allocation13 + $0x80] sm:$0xff]
        %v1998 = vld [vmem:[#allocation13 + $0x88] sm:$0xff]
        %v1999 = vld [vmem:[#allocation13 + $0x90] sm:$0xff]
        %v2000 = vld [vmem:[#allocation13 + $0x98] sm:$0xff]
        %v2001 = vld [vmem:[#allocation13 + $0xa0] sm:$0xff]
        %v2002 = vld [vmem:[#allocation13 + $0xa8] sm:$0xff]
        %v2003 = vld [vmem:[#allocation13 + $0xb0] sm:$0xff]
        %v2004 = vld [vmem:[#allocation13 + $0xb8] sm:$0xff]
        %v2005 = vld [vmem:[#allocation13 + $0xc0] sm:$0xff]
        %v2006 = vld [vmem:[#allocation13 + $0xc8] sm:$0xff]
        %v2007 = vld [vmem:[#allocation13 + $0xd0] sm:$0xff]
        %v2008 = vld [vmem:[#allocation13 + $0xd8] sm:$0xff]
        %v2009 = vld [vmem:[#allocation13 + $0xe0] sm:$0xff]
        %v2010 = vld [vmem:[#allocation13 + $0xe8] sm:$0xff]
        %v2011 = vld [vmem:[#allocation13 + $0xf0] sm:$0xff]
        %v2012 = vld [vmem:[#allocation13 + $0xf8] sm:$0xff]
        %v2013 = vld [vmem:[#allocation13 + $0x100] sm:$0xff]
        %v2014 = vld [vmem:[#allocation13 + $0x108] sm:$0xff]
        %v2015 = vld [vmem:[#allocation13 + $0x110] sm:$0xff]
        %v2016 = vld [vmem:[#allocation13 + $0x118] sm:$0xff]
        %v2017 = vld [vmem:[#allocation13 + $0x120] sm:$0xff]
        %v2018 = vld [vmem:[#allocation13 + $0x128] sm:$0xff]
        %v2019 = vld [vmem:[#allocation13 + $0x130] sm:$0xff]
        %v2020 = vld [vmem:[#allocation13 + $0x138] sm:$0xff]
        %v2021 = vld [vmem:[#allocation13 + $0x140] sm:$0xff]
        %v2022 = vld [vmem:[#allocation13 + $0x148] sm:$0xff]
        %v2023 = vld [vmem:[#allocation13 + $0x150] sm:$0xff]
        %v2024 = vld [vmem:[#allocation13 + $0x158] sm:$0xff]
        %v2025 = vld [vmem:[#allocation13 + $0x160] sm:$0xff]
        %v2026 = vld [vmem:[#allocation13 + $0x168] sm:$0xff]
        %v2027 = vld [vmem:[#allocation13 + $0x170] sm:$0xff]
        %v2028 = vld [vmem:[#allocation13 + $0x178] sm:$0xff]
        %v2029 = vld [vmem:[#allocation13 + $0x180] sm:$0xff]
        %v2030 = vld [vmem:[#allocation13 + $0x188] sm:$0xff]
        %v2031 = vld [vmem:[#allocation13 + $0x190] sm:$0xff]
        %v2032 = vld [vmem:[#allocation13 + $0x198] sm:$0xff]
        %v2033 = vld [vmem:[#allocation13 + $0x1a0] sm:$0xff]
        %v2034 = vld [vmem:[#allocation13 + $0x1a8] sm:$0xff]
        %v2035 = vld [vmem:[#allocation13 + $0x1b0] sm:$0xff]
        %v2036 = vld [vmem:[#allocation13 + $0x1b8] sm:$0xff]
        %v2037 = vld [vmem:[#allocation13 + $0x1c0] sm:$0xff]
        %v2038 = vld [vmem:[#allocation13 + $0x1c8] sm:$0xff]
        %v2039 = vld [vmem:[#allocation13 + $0x1d0] sm:$0xff]
        %v2040 = vld [vmem:[#allocation13 + $0x1d8] sm:$0xff]
        %v2041 = vld [vmem:[#allocation13 + $0x1e0] sm:$0xff]
        %v2042 = vld [vmem:[#allocation13 + $0x1e8] sm:$0xff]
        %v2043 = vld [vmem:[#allocation13 + $0x1f0] sm:$0xff]
        %v2044 = vld [vmem:[#allocation13 + $0x1f8] sm:$0xff]
        %2045 = vmatpush.msra.mxu0 %v2041
        %2046 = vmatpush.msra.mxu0 %v2037
        %2047 = vmatpush.msra.mxu0 %v2033
        %2048 = vmatpush.msra.mxu0 %v2029
        %2049 = vmatpush.msra.mxu0 %v2025
        %2050 = vmatpush.msra.mxu0 %v2021
        %2051 = vmatpush.msra.mxu0 %v2017
        %2052 = vmatpush.msra.mxu0 %v2013
        %2053 = vmatpush.msra.mxu0 %v2009
        %2054 = vmatpush.msra.mxu0 %v2005
        %2055 = vmatpush.msra.mxu0 %v2001
        %2056 = vmatpush.msra.mxu0 %v1997
        %2057 = vmatpush.msra.mxu0 %v1993
        %2058 = vmatpush.msra.mxu0 %v1989
        %2059 = vmatpush.msra.mxu0 %v1985
        %2060 = vmatpush.msra.mxu0 %v1981
        %2061 = vmatmul.f32.gmra.mxu0 %v1737
        %v2062 = vpop.f32.mrf.mxu0
        %v2063 = vadd.f32 0.0, %v2062
        %2064 = vdwg.mxu0
        %2065 = vmatpush.msra.mxu0 %v2042
        %2066 = vmatpush.msra.mxu0 %v2038
        %2067 = vmatpush.msra.mxu0 %v2034
        %2068 = vmatpush.msra.mxu0 %v2030
        %2069 = vmatpush.msra.mxu0 %v2026
        %2070 = vmatpush.msra.mxu0 %v2022
        %2071 = vmatpush.msra.mxu0 %v2018
        %2072 = vmatpush.msra.mxu0 %v2014
        %2073 = vmatpush.msra.mxu0 %v2010
        %2074 = vmatpush.msra.mxu0 %v2006
        %2075 = vmatpush.msra.mxu0 %v2002
        %2076 = vmatpush.msra.mxu0 %v1998
        %2077 = vmatpush.msra.mxu0 %v1994
        %2078 = vmatpush.msra.mxu0 %v1990
        %2079 = vmatpush.msra.mxu0 %v1986
        %2080 = vmatpush.msra.mxu0 %v1982
        %2081 = vmatmul.f32.gmra.mxu0 %v1737
        %v2082 = vpop.f32.mrf.mxu0
        %v2083 = vadd.f32 0.0, %v2082
        %2084 = vdwg.mxu0
        %2085 = vmatpush.msra.mxu0 %v2043
        %2086 = vmatpush.msra.mxu0 %v2039
        %2087 = vmatpush.msra.mxu0 %v2035
        %2088 = vmatpush.msra.mxu0 %v2031
        %2089 = vmatpush.msra.mxu0 %v2027
        %2090 = vmatpush.msra.mxu0 %v2023
        %2091 = vmatpush.msra.mxu0 %v2019
        %2092 = vmatpush.msra.mxu0 %v2015
        %2093 = vmatpush.msra.mxu0 %v2011
        %2094 = vmatpush.msra.mxu0 %v2007
        %2095 = vmatpush.msra.mxu0 %v2003
        %2096 = vmatpush.msra.mxu0 %v1999
        %2097 = vmatpush.msra.mxu0 %v1995
        %2098 = vmatpush.msra.mxu0 %v1991
        %2099 = vmatpush.msra.mxu0 %v1987
        %2100 = vmatpush.msra.mxu0 %v1983
        %2101 = vmatmul.f32.gmra.mxu0 %v1737
        %v2102 = vpop.f32.mrf.mxu0
        %v2103 = vadd.f32 0.0, %v2102
        %2104 = vdwg.mxu0
        %2105 = vmatpush.msra.mxu0 %v2044
        %2106 = vmatpush.msra.mxu0 %v2040
        %2107 = vmatpush.msra.mxu0 %v2036
        %2108 = vmatpush.msra.mxu0 %v2032
        %2109 = vmatpush.msra.mxu0 %v2028
        %2110 = vmatpush.msra.mxu0 %v2024
        %2111 = vmatpush.msra.mxu0 %v2020
        %2112 = vmatpush.msra.mxu0 %v2016
        %2113 = vmatpush.msra.mxu0 %v2012
        %2114 = vmatpush.msra.mxu0 %v2008
        %2115 = vmatpush.msra.mxu0 %v2004
        %2116 = vmatpush.msra.mxu0 %v2000
        %2117 = vmatpush.msra.mxu0 %v1996
        %2118 = vmatpush.msra.mxu0 %v1992
        %2119 = vmatpush.msra.mxu0 %v1988
        %2120 = vmatpush.msra.mxu0 %v1984
        %2121 = vmatmul.f32.gmra.mxu0 %v1737
        %v2122 = vpop.f32.mrf.mxu0
        %v2123 = vadd.f32 0.0, %v2122
        %2124 = vdwg.mxu0
        %v2125 = vadd.f32 %v1977, %v2063
        %v2126 = vadd.f32 %v1978, %v2083
        %v2127 = vadd.f32 %v1979, %v2103
        %v2128 = vadd.f32 %v1980, %v2123
        %v2129 = vxor.u32 %v2125, 2147483648
        %v2130 = vmul.f32 %v2129, 1.442695
        %v2131 = vpow.pop %v2130
        %v2132 = vadd.f32 %v2131, 1.0
        %v2133 = vrcp.pop %v2132
        %v2134 = vmul.f32 %v2132, %v2133
        %v2135 = vsub.f32 1.0, %v2134
        %v2136 = vmul.f32 %v2133, %v2135
        %v2137 = vadd.f32 %v2133, %v2136
        %vm2138 = vweird.f32 %v2132
        %vm2139 = vweird.f32 %v2133
        %vm2140 = vmor %vm2138, %vm2139
        %v2141 = vsel %vm2140, %v2133, %v2137
        %v2142 = vand.u32 2147483647, %v2132
        %vm2143 = vcmp.eq.f32.partialorder %v2142, 8.507059e+37
        %v2144 = vand.u32 %v2132, 2147483648
        %v2145 = vor.u32 1.1754944e-38, %v2144
        %v2146 = vsel %vm2143, %v2145, %v2141
        %v2147 = vmul.f32 1.0, %v2146
        %v2148 = vxor.u32 %v2126, 2147483648
        %v2149 = vmul.f32 %v2148, 1.442695
        %v2150 = vpow.pop %v2149
        %v2151 = vadd.f32 %v2150, 1.0
        %v2152 = vrcp.pop %v2151
        %v2153 = vmul.f32 %v2151, %v2152
        %v2154 = vsub.f32 1.0, %v2153
        %v2155 = vmul.f32 %v2152, %v2154
        %v2156 = vadd.f32 %v2152, %v2155
        %vm2157 = vweird.f32 %v2151
        %vm2158 = vweird.f32 %v2152
        %vm2159 = vmor %vm2157, %vm2158
        %v2160 = vsel %vm2159, %v2152, %v2156
        %v2161 = vand.u32 2147483647, %v2151
        %vm2162 = vcmp.eq.f32.partialorder %v2161, 8.507059e+37
        %v2163 = vand.u32 %v2151, 2147483648
        %v2164 = vor.u32 1.1754944e-38, %v2163
        %v2165 = vsel %vm2162, %v2164, %v2160
        %v2166 = vmul.f32 1.0, %v2165
        %v2167 = vtanh.pop %v2127
        %v2168 = vxor.u32 %v2128, 2147483648
        %v2169 = vmul.f32 %v2168, 1.442695
        %v2170 = vpow.pop %v2169
        %v2171 = vadd.f32 %v2170, 1.0
        %v2172 = vrcp.pop %v2171
        %v2173 = vmul.f32 %v2171, %v2172
        %v2174 = vsub.f32 1.0, %v2173
        %v2175 = vmul.f32 %v2172, %v2174
        %v2176 = vadd.f32 %v2172, %v2175
        %vm2177 = vweird.f32 %v2171
        %vm2178 = vweird.f32 %v2172
        %vm2179 = vmor %vm2177, %vm2178
        %v2180 = vsel %vm2179, %v2172, %v2176
        %v2181 = vand.u32 2147483647, %v2171
        %vm2182 = vcmp.eq.f32.partialorder %v2181, 8.507059e+37
        %v2183 = vand.u32 %v2171, 2147483648
        %v2184 = vor.u32 1.1754944e-38, %v2183
        %v2185 = vsel %vm2182, %v2184, %v2180
        %v2186 = vmul.f32 1.0, %v2185
        %v2187 = vmul.f32 %v2166, %v1738
        %v2188 = vmul.f32 %v2147, %v2167
        %v2189 = vadd.f32 %v2187, %v2188
        %v2190 = vtanh.pop %v2189
        %v2191 = vmul.f32 %v2186, %v2190
        %v2192 = vsel %vm1974, 1, 0
        %2193 = vset.pattern.permute.xlu0 0
        %2194 = vperm.xlu0 %2193, %v2192
        %v2195 = vpop.permute.xlu0 %2194
        %vm2196 = vcmp.eq.s32.totalorder %v2195, 1
        %v2197 = vsel %vm2196, %v2191, %v1737
        %v2198 = vsel %vm2196, %v2189, %v1738
        %v2199 = vsel %vm2196, %v2191, 0.0
        %s2200 = scalar_lea.vmem %s437, 8 [#allocation15]
        %2201 = vst [vmem:[%s2200] sm:$0xff] %v2199
        %s2202 = sadd.s32 %s813, 3
        %v2203 = vstv %s2202
        %vm2204 = vcmp.gt.s32.totalorder %v463, %v2203
        %s2205 = smul.addr %s1052, 8
        %s2206 = scalar_lea.vmem [#allocation2], %s2205
        %v2207 = vld [vmem:[%s2206] sm:$0xff]
        %v2208 = vld [vmem:[%s2206 + $0x8] sm:$0xff]
        %v2209 = vld [vmem:[%s2206 + $0x10] sm:$0xff]
        %v2210 = vld [vmem:[%s2206 + $0x18] sm:$0xff]
        %v2211 = vld [vmem:[#allocation11] sm:$0xff]
        %v2212 = vld [vmem:[#allocation11 + $0x8] sm:$0xff]
        %v2213 = vld [vmem:[#allocation11 + $0x10] sm:$0xff]
        %v2214 = vld [vmem:[#allocation11 + $0x18] sm:$0xff]
        %v2215 = vld [vmem:[#allocation11 + $0x20] sm:$0xff]
        %v2216 = vld [vmem:[#allocation11 + $0x28] sm:$0xff]
        %v2217 = vld [vmem:[#allocation11 + $0x30] sm:$0xff]
        %v2218 = vld [vmem:[#allocation11 + $0x38] sm:$0xff]
        %v2219 = vld [vmem:[#allocation11 + $0x40] sm:$0xff]
        %v2220 = vld [vmem:[#allocation11 + $0x48] sm:$0xff]
        %v2221 = vld [vmem:[#allocation11 + $0x50] sm:$0xff]
        %v2222 = vld [vmem:[#allocation11 + $0x58] sm:$0xff]
        %v2223 = vld [vmem:[#allocation11 + $0x60] sm:$0xff]
        %v2224 = vld [vmem:[#allocation11 + $0x68] sm:$0xff]
        %v2225 = vld [vmem:[#allocation11 + $0x70] sm:$0xff]
        %v2226 = vld [vmem:[#allocation11 + $0x78] sm:$0xff]
        %v2227 = vld [vmem:[#allocation11 + $0x80] sm:$0xff]
        %v2228 = vld [vmem:[#allocation11 + $0x88] sm:$0xff]
        %v2229 = vld [vmem:[#allocation11 + $0x90] sm:$0xff]
        %v2230 = vld [vmem:[#allocation11 + $0x98] sm:$0xff]
        %v2231 = vld [vmem:[#allocation11 + $0xa0] sm:$0xff]
        %v2232 = vld [vmem:[#allocation11 + $0xa8] sm:$0xff]
        %v2233 = vld [vmem:[#allocation11 + $0xb0] sm:$0xff]
        %v2234 = vld [vmem:[#allocation11 + $0xb8] sm:$0xff]
        %v2235 = vld [vmem:[#allocation11 + $0xc0] sm:$0xff]
        %v2236 = vld [vmem:[#allocation11 + $0xc8] sm:$0xff]
        %v2237 = vld [vmem:[#allocation11 + $0xd0] sm:$0xff]
        %v2238 = vld [vmem:[#allocation11 + $0xd8] sm:$0xff]
        %v2239 = vld [vmem:[#allocation11 + $0xe0] sm:$0xff]
        %v2240 = vld [vmem:[#allocation11 + $0xe8] sm:$0xff]
        %v2241 = vld [vmem:[#allocation11 + $0xf0] sm:$0xff]
        %v2242 = vld [vmem:[#allocation11 + $0xf8] sm:$0xff]
        %v2243 = vld [vmem:[#allocation11 + $0x100] sm:$0xff]
        %v2244 = vld [vmem:[#allocation11 + $0x108] sm:$0xff]
        %v2245 = vld [vmem:[#allocation11 + $0x110] sm:$0xff]
        %v2246 = vld [vmem:[#allocation11 + $0x118] sm:$0xff]
        %v2247 = vld [vmem:[#allocation11 + $0x120] sm:$0xff]
        %v2248 = vld [vmem:[#allocation11 + $0x128] sm:$0xff]
        %v2249 = vld [vmem:[#allocation11 + $0x130] sm:$0xff]
        %v2250 = vld [vmem:[#allocation11 + $0x138] sm:$0xff]
        %v2251 = vld [vmem:[#allocation11 + $0x140] sm:$0xff]
        %v2252 = vld [vmem:[#allocation11 + $0x148] sm:$0xff]
        %v2253 = vld [vmem:[#allocation11 + $0x150] sm:$0xff]
        %v2254 = vld [vmem:[#allocation11 + $0x158] sm:$0xff]
        %v2255 = vld [vmem:[#allocation11 + $0x160] sm:$0xff]
        %v2256 = vld [vmem:[#allocation11 + $0x168] sm:$0xff]
        %v2257 = vld [vmem:[#allocation11 + $0x170] sm:$0xff]
        %v2258 = vld [vmem:[#allocation11 + $0x178] sm:$0xff]
        %v2259 = vld [vmem:[#allocation11 + $0x180] sm:$0xff]
        %v2260 = vld [vmem:[#allocation11 + $0x188] sm:$0xff]
        %v2261 = vld [vmem:[#allocation11 + $0x190] sm:$0xff]
        %v2262 = vld [vmem:[#allocation11 + $0x198] sm:$0xff]
        %v2263 = vld [vmem:[#allocation11 + $0x1a0] sm:$0xff]
        %v2264 = vld [vmem:[#allocation11 + $0x1a8] sm:$0xff]
        %v2265 = vld [vmem:[#allocation11 + $0x1b0] sm:$0xff]
        %v2266 = vld [vmem:[#allocation11 + $0x1b8] sm:$0xff]
        %v2267 = vld [vmem:[#allocation11 + $0x1c0] sm:$0xff]
        %v2268 = vld [vmem:[#allocation11 + $0x1c8] sm:$0xff]
        %v2269 = vld [vmem:[#allocation11 + $0x1d0] sm:$0xff]
        %v2270 = vld [vmem:[#allocation11 + $0x1d8] sm:$0xff]
        %v2271 = vld [vmem:[#allocation11 + $0x1e0] sm:$0xff]
        %v2272 = vld [vmem:[#allocation11 + $0x1e8] sm:$0xff]
        %v2273 = vld [vmem:[#allocation11 + $0x1f0] sm:$0xff]
        %v2274 = vld [vmem:[#allocation11 + $0x1f8] sm:$0xff]
        %2275 = vmatpush.msra.mxu0 %v2271
        %2276 = vmatpush.msra.mxu0 %v2267
        %2277 = vmatpush.msra.mxu0 %v2263
        %2278 = vmatpush.msra.mxu0 %v2259
        %2279 = vmatpush.msra.mxu0 %v2255
        %2280 = vmatpush.msra.mxu0 %v2251
        %2281 = vmatpush.msra.mxu0 %v2247
        %2282 = vmatpush.msra.mxu0 %v2243
        %2283 = vmatpush.msra.mxu0 %v2239
        %2284 = vmatpush.msra.mxu0 %v2235
        %2285 = vmatpush.msra.mxu0 %v2231
        %2286 = vmatpush.msra.mxu0 %v2227
        %2287 = vmatpush.msra.mxu0 %v2223
        %2288 = vmatpush.msra.mxu0 %v2219
        %2289 = vmatpush.msra.mxu0 %v2215
        %2290 = vmatpush.msra.mxu0 %v2211
        %2291 = vmatmul.f32.gmra.mxu0 %v1967
        %v2292 = vpop.f32.mrf.mxu0
        %v2293 = vadd.f32 0.0, %v2292
        %2294 = vdwg.mxu0
        %2295 = vmatpush.msra.mxu0 %v2272
        %2296 = vmatpush.msra.mxu0 %v2268
        %2297 = vmatpush.msra.mxu0 %v2264
        %2298 = vmatpush.msra.mxu0 %v2260
        %2299 = vmatpush.msra.mxu0 %v2256
        %2300 = vmatpush.msra.mxu0 %v2252
        %2301 = vmatpush.msra.mxu0 %v2248
        %2302 = vmatpush.msra.mxu0 %v2244
        %2303 = vmatpush.msra.mxu0 %v2240
        %2304 = vmatpush.msra.mxu0 %v2236
        %2305 = vmatpush.msra.mxu0 %v2232
        %2306 = vmatpush.msra.mxu0 %v2228
        %2307 = vmatpush.msra.mxu0 %v2224
        %2308 = vmatpush.msra.mxu0 %v2220
        %2309 = vmatpush.msra.mxu0 %v2216
        %2310 = vmatpush.msra.mxu0 %v2212
        %2311 = vmatmul.f32.gmra.mxu0 %v1967
        %v2312 = vpop.f32.mrf.mxu0
        %v2313 = vadd.f32 0.0, %v2312
        %2314 = vdwg.mxu0
        %2315 = vmatpush.msra.mxu0 %v2273
        %2316 = vmatpush.msra.mxu0 %v2269
        %2317 = vmatpush.msra.mxu0 %v2265
        %2318 = vmatpush.msra.mxu0 %v2261
        %2319 = vmatpush.msra.mxu0 %v2257
        %2320 = vmatpush.msra.mxu0 %v2253
        %2321 = vmatpush.msra.mxu0 %v2249
        %2322 = vmatpush.msra.mxu0 %v2245
        %2323 = vmatpush.msra.mxu0 %v2241
        %2324 = vmatpush.msra.mxu0 %v2237
        %2325 = vmatpush.msra.mxu0 %v2233
        %2326 = vmatpush.msra.mxu0 %v2229
        %2327 = vmatpush.msra.mxu0 %v2225
        %2328 = vmatpush.msra.mxu0 %v2221
        %2329 = vmatpush.msra.mxu0 %v2217
        %2330 = vmatpush.msra.mxu0 %v2213
        %2331 = vmatmul.f32.gmra.mxu0 %v1967
        %v2332 = vpop.f32.mrf.mxu0
        %v2333 = vadd.f32 0.0, %v2332
        %2334 = vdwg.mxu0
        %2335 = vmatpush.msra.mxu0 %v2274
        %2336 = vmatpush.msra.mxu0 %v2270
        %2337 = vmatpush.msra.mxu0 %v2266
        %2338 = vmatpush.msra.mxu0 %v2262
        %2339 = vmatpush.msra.mxu0 %v2258
        %2340 = vmatpush.msra.mxu0 %v2254
        %2341 = vmatpush.msra.mxu0 %v2250
        %2342 = vmatpush.msra.mxu0 %v2246
        %2343 = vmatpush.msra.mxu0 %v2242
        %2344 = vmatpush.msra.mxu0 %v2238
        %2345 = vmatpush.msra.mxu0 %v2234
        %2346 = vmatpush.msra.mxu0 %v2230
        %2347 = vmatpush.msra.mxu0 %v2226
        %2348 = vmatpush.msra.mxu0 %v2222
        %2349 = vmatpush.msra.mxu0 %v2218
        %2350 = vmatpush.msra.mxu0 %v2214
        %2351 = vmatmul.f32.gmra.mxu0 %v1967
        %v2352 = vpop.f32.mrf.mxu0
        %v2353 = vadd.f32 0.0, %v2352
        %2354 = vdwg.mxu0
        %v2355 = vadd.f32 %v2207, %v2293
        %v2356 = vadd.f32 %v2208, %v2313
        %v2357 = vadd.f32 %v2209, %v2333
        %v2358 = vadd.f32 %v2210, %v2353
        %v2359 = vxor.u32 %v2355, 2147483648
        %v2360 = vmul.f32 %v2359, 1.442695
        %v2361 = vpow.pop %v2360
        %v2362 = vadd.f32 %v2361, 1.0
        %v2363 = vrcp.pop %v2362
        %v2364 = vmul.f32 %v2362, %v2363
        %v2365 = vsub.f32 1.0, %v2364
        %v2366 = vmul.f32 %v2363, %v2365
        %v2367 = vadd.f32 %v2363, %v2366
        %vm2368 = vweird.f32 %v2362
        %vm2369 = vweird.f32 %v2363
        %vm2370 = vmor %vm2368, %vm2369
        %v2371 = vsel %vm2370, %v2363, %v2367
        %v2372 = vand.u32 2147483647, %v2362
        %vm2373 = vcmp.eq.f32.partialorder %v2372, 8.507059e+37
        %v2374 = vand.u32 %v2362, 2147483648
        %v2375 = vor.u32 1.1754944e-38, %v2374
        %v2376 = vsel %vm2373, %v2375, %v2371
        %v2377 = vmul.f32 1.0, %v2376
        %v2378 = vxor.u32 %v2356, 2147483648
        %v2379 = vmul.f32 %v2378, 1.442695
        %v2380 = vpow.pop %v2379
        %v2381 = vadd.f32 %v2380, 1.0
        %v2382 = vrcp.pop %v2381
        %v2383 = vmul.f32 %v2381, %v2382
        %v2384 = vsub.f32 1.0, %v2383
        %v2385 = vmul.f32 %v2382, %v2384
        %v2386 = vadd.f32 %v2382, %v2385
        %vm2387 = vweird.f32 %v2381
        %vm2388 = vweird.f32 %v2382
        %vm2389 = vmor %vm2387, %vm2388
        %v2390 = vsel %vm2389, %v2382, %v2386
        %v2391 = vand.u32 2147483647, %v2381
        %vm2392 = vcmp.eq.f32.partialorder %v2391, 8.507059e+37
        %v2393 = vand.u32 %v2381, 2147483648
        %v2394 = vor.u32 1.1754944e-38, %v2393
        %v2395 = vsel %vm2392, %v2394, %v2390
        %v2396 = vmul.f32 1.0, %v2395
        %v2397 = vtanh.pop %v2357
        %v2398 = vxor.u32 %v2358, 2147483648
        %v2399 = vmul.f32 %v2398, 1.442695
        %v2400 = vpow.pop %v2399
        %v2401 = vadd.f32 %v2400, 1.0
        %v2402 = vrcp.pop %v2401
        %v2403 = vmul.f32 %v2401, %v2402
        %v2404 = vsub.f32 1.0, %v2403
        %v2405 = vmul.f32 %v2402, %v2404
        %v2406 = vadd.f32 %v2402, %v2405
        %vm2407 = vweird.f32 %v2401
        %vm2408 = vweird.f32 %v2402
        %vm2409 = vmor %vm2407, %vm2408
        %v2410 = vsel %vm2409, %v2402, %v2406
        %v2411 = vand.u32 2147483647, %v2401
        %vm2412 = vcmp.eq.f32.partialorder %v2411, 8.507059e+37
        %v2413 = vand.u32 %v2401, 2147483648
        %v2414 = vor.u32 1.1754944e-38, %v2413
        %v2415 = vsel %vm2412, %v2414, %v2410
        %v2416 = vmul.f32 1.0, %v2415
        %v2417 = vmul.f32 %v2396, %v1968
        %v2418 = vmul.f32 %v2377, %v2397
        %v2419 = vadd.f32 %v2417, %v2418
        %v2420 = vtanh.pop %v2419
        %v2421 = vmul.f32 %v2416, %v2420
        %v2422 = vsel %vm2204, 1, 0
        %2423 = vset.pattern.permute.xlu0 0
        %2424 = vperm.xlu0 %2423, %v2422
        %v2425 = vpop.permute.xlu0 %2424
        %vm2426 = vcmp.eq.s32.totalorder %v2425, 1
        %v2427 = vsel %vm2426, %v2421, %v1967
        %v2428 = vsel %vm2426, %v2419, %v1968
        %v2429 = vsel %vm2426, %v2421, 0.0
        %s2430 = scalar_lea.vmem %s430, 24 [#allocation14]
        %2431 = vst [vmem:[%s2430] sm:$0xff] %v2429
        %v2432 = vstv %s815
        %vm2433 = vcmp.gt.s32.totalorder %v463, %v2432
        %s2434 = smul.addr %s822, 8
        %s2435 = scalar_lea.vmem [#allocation3], %s2434
        %v2436 = vld [vmem:[%s2435] sm:$0xff]
        %v2437 = vld [vmem:[%s2435 + $0x8] sm:$0xff]
        %v2438 = vld [vmem:[%s2435 + $0x10] sm:$0xff]
        %v2439 = vld [vmem:[%s2435 + $0x18] sm:$0xff]
        %v2440 = vld [vmem:[#allocation13] sm:$0xff]
        %v2441 = vld [vmem:[#allocation13 + $0x8] sm:$0xff]
        %v2442 = vld [vmem:[#allocation13 + $0x10] sm:$0xff]
        %v2443 = vld [vmem:[#allocation13 + $0x18] sm:$0xff]
        %v2444 = vld [vmem:[#allocation13 + $0x20] sm:$0xff]
        %v2445 = vld [vmem:[#allocation13 + $0x28] sm:$0xff]
        %v2446 = vld [vmem:[#allocation13 + $0x30] sm:$0xff]
        %v2447 = vld [vmem:[#allocation13 + $0x38] sm:$0xff]
        %v2448 = vld [vmem:[#allocation13 + $0x40] sm:$0xff]
        %v2449 = vld [vmem:[#allocation13 + $0x48] sm:$0xff]
        %v2450 = vld [vmem:[#allocation13 + $0x50] sm:$0xff]
        %v2451 = vld [vmem:[#allocation13 + $0x58] sm:$0xff]
        %v2452 = vld [vmem:[#allocation13 + $0x60] sm:$0xff]
        %v2453 = vld [vmem:[#allocation13 + $0x68] sm:$0xff]
        %v2454 = vld [vmem:[#allocation13 + $0x70] sm:$0xff]
        %v2455 = vld [vmem:[#allocation13 + $0x78] sm:$0xff]
        %v2456 = vld [vmem:[#allocation13 + $0x80] sm:$0xff]
        %v2457 = vld [vmem:[#allocation13 + $0x88] sm:$0xff]
        %v2458 = vld [vmem:[#allocation13 + $0x90] sm:$0xff]
        %v2459 = vld [vmem:[#allocation13 + $0x98] sm:$0xff]
        %v2460 = vld [vmem:[#allocation13 + $0xa0] sm:$0xff]
        %v2461 = vld [vmem:[#allocation13 + $0xa8] sm:$0xff]
        %v2462 = vld [vmem:[#allocation13 + $0xb0] sm:$0xff]
        %v2463 = vld [vmem:[#allocation13 + $0xb8] sm:$0xff]
        %v2464 = vld [vmem:[#allocation13 + $0xc0] sm:$0xff]
        %v2465 = vld [vmem:[#allocation13 + $0xc8] sm:$0xff]
        %v2466 = vld [vmem:[#allocation13 + $0xd0] sm:$0xff]
        %v2467 = vld [vmem:[#allocation13 + $0xd8] sm:$0xff]
        %v2468 = vld [vmem:[#allocation13 + $0xe0] sm:$0xff]
        %v2469 = vld [vmem:[#allocation13 + $0xe8] sm:$0xff]
        %v2470 = vld [vmem:[#allocation13 + $0xf0] sm:$0xff]
        %v2471 = vld [vmem:[#allocation13 + $0xf8] sm:$0xff]
        %v2472 = vld [vmem:[#allocation13 + $0x100] sm:$0xff]
        %v2473 = vld [vmem:[#allocation13 + $0x108] sm:$0xff]
        %v2474 = vld [vmem:[#allocation13 + $0x110] sm:$0xff]
        %v2475 = vld [vmem:[#allocation13 + $0x118] sm:$0xff]
        %v2476 = vld [vmem:[#allocation13 + $0x120] sm:$0xff]
        %v2477 = vld [vmem:[#allocation13 + $0x128] sm:$0xff]
        %v2478 = vld [vmem:[#allocation13 + $0x130] sm:$0xff]
        %v2479 = vld [vmem:[#allocation13 + $0x138] sm:$0xff]
        %v2480 = vld [vmem:[#allocation13 + $0x140] sm:$0xff]
        %v2481 = vld [vmem:[#allocation13 + $0x148] sm:$0xff]
        %v2482 = vld [vmem:[#allocation13 + $0x150] sm:$0xff]
        %v2483 = vld [vmem:[#allocation13 + $0x158] sm:$0xff]
        %v2484 = vld [vmem:[#allocation13 + $0x160] sm:$0xff]
        %v2485 = vld [vmem:[#allocation13 + $0x168] sm:$0xff]
        %v2486 = vld [vmem:[#allocation13 + $0x170] sm:$0xff]
        %v2487 = vld [vmem:[#allocation13 + $0x178] sm:$0xff]
        %v2488 = vld [vmem:[#allocation13 + $0x180] sm:$0xff]
        %v2489 = vld [vmem:[#allocation13 + $0x188] sm:$0xff]
        %v2490 = vld [vmem:[#allocation13 + $0x190] sm:$0xff]
        %v2491 = vld [vmem:[#allocation13 + $0x198] sm:$0xff]
        %v2492 = vld [vmem:[#allocation13 + $0x1a0] sm:$0xff]
        %v2493 = vld [vmem:[#allocation13 + $0x1a8] sm:$0xff]
        %v2494 = vld [vmem:[#allocation13 + $0x1b0] sm:$0xff]
        %v2495 = vld [vmem:[#allocation13 + $0x1b8] sm:$0xff]
        %v2496 = vld [vmem:[#allocation13 + $0x1c0] sm:$0xff]
        %v2497 = vld [vmem:[#allocation13 + $0x1c8] sm:$0xff]
        %v2498 = vld [vmem:[#allocation13 + $0x1d0] sm:$0xff]
        %v2499 = vld [vmem:[#allocation13 + $0x1d8] sm:$0xff]
        %v2500 = vld [vmem:[#allocation13 + $0x1e0] sm:$0xff]
        %v2501 = vld [vmem:[#allocation13 + $0x1e8] sm:$0xff]
        %v2502 = vld [vmem:[#allocation13 + $0x1f0] sm:$0xff]
        %v2503 = vld [vmem:[#allocation13 + $0x1f8] sm:$0xff]
        %2504 = vmatpush.msra.mxu0 %v2500
        %2505 = vmatpush.msra.mxu0 %v2496
        %2506 = vmatpush.msra.mxu0 %v2492
        %2507 = vmatpush.msra.mxu0 %v2488
        %2508 = vmatpush.msra.mxu0 %v2484
        %2509 = vmatpush.msra.mxu0 %v2480
        %2510 = vmatpush.msra.mxu0 %v2476
        %2511 = vmatpush.msra.mxu0 %v2472
        %2512 = vmatpush.msra.mxu0 %v2468
        %2513 = vmatpush.msra.mxu0 %v2464
        %2514 = vmatpush.msra.mxu0 %v2460
        %2515 = vmatpush.msra.mxu0 %v2456
        %2516 = vmatpush.msra.mxu0 %v2452
        %2517 = vmatpush.msra.mxu0 %v2448
        %2518 = vmatpush.msra.mxu0 %v2444
        %2519 = vmatpush.msra.mxu0 %v2440
        %2520 = vmatmul.f32.gmra.mxu0 %v2197
        %v2521 = vpop.f32.mrf.mxu0
        %v2522 = vadd.f32 0.0, %v2521
        %2523 = vdwg.mxu0
        %2524 = vmatpush.msra.mxu0 %v2501
        %2525 = vmatpush.msra.mxu0 %v2497
        %2526 = vmatpush.msra.mxu0 %v2493
        %2527 = vmatpush.msra.mxu0 %v2489
        %2528 = vmatpush.msra.mxu0 %v2485
        %2529 = vmatpush.msra.mxu0 %v2481
        %2530 = vmatpush.msra.mxu0 %v2477
        %2531 = vmatpush.msra.mxu0 %v2473
        %2532 = vmatpush.msra.mxu0 %v2469
        %2533 = vmatpush.msra.mxu0 %v2465
        %2534 = vmatpush.msra.mxu0 %v2461
        %2535 = vmatpush.msra.mxu0 %v2457
        %2536 = vmatpush.msra.mxu0 %v2453
        %2537 = vmatpush.msra.mxu0 %v2449
        %2538 = vmatpush.msra.mxu0 %v2445
        %2539 = vmatpush.msra.mxu0 %v2441
        %2540 = vmatmul.f32.gmra.mxu0 %v2197
        %v2541 = vpop.f32.mrf.mxu0
        %v2542 = vadd.f32 0.0, %v2541
        %2543 = vdwg.mxu0
        %2544 = vmatpush.msra.mxu0 %v2502
        %2545 = vmatpush.msra.mxu0 %v2498
        %2546 = vmatpush.msra.mxu0 %v2494
        %2547 = vmatpush.msra.mxu0 %v2490
        %2548 = vmatpush.msra.mxu0 %v2486
        %2549 = vmatpush.msra.mxu0 %v2482
        %2550 = vmatpush.msra.mxu0 %v2478
        %2551 = vmatpush.msra.mxu0 %v2474
        %2552 = vmatpush.msra.mxu0 %v2470
        %2553 = vmatpush.msra.mxu0 %v2466
        %2554 = vmatpush.msra.mxu0 %v2462
        %2555 = vmatpush.msra.mxu0 %v2458
        %2556 = vmatpush.msra.mxu0 %v2454
        %2557 = vmatpush.msra.mxu0 %v2450
        %2558 = vmatpush.msra.mxu0 %v2446
        %2559 = vmatpush.msra.mxu0 %v2442
        %2560 = vmatmul.f32.gmra.mxu0 %v2197
        %v2561 = vpop.f32.mrf.mxu0
        %v2562 = vadd.f32 0.0, %v2561
        %2563 = vdwg.mxu0
        %2564 = vmatpush.msra.mxu0 %v2503
        %2565 = vmatpush.msra.mxu0 %v2499
        %2566 = vmatpush.msra.mxu0 %v2495
        %2567 = vmatpush.msra.mxu0 %v2491
        %2568 = vmatpush.msra.mxu0 %v2487
        %2569 = vmatpush.msra.mxu0 %v2483
        %2570 = vmatpush.msra.mxu0 %v2479
        %2571 = vmatpush.msra.mxu0 %v2475
        %2572 = vmatpush.msra.mxu0 %v2471
        %2573 = vmatpush.msra.mxu0 %v2467
        %2574 = vmatpush.msra.mxu0 %v2463
        %2575 = vmatpush.msra.mxu0 %v2459
        %2576 = vmatpush.msra.mxu0 %v2455
        %2577 = vmatpush.msra.mxu0 %v2451
        %2578 = vmatpush.msra.mxu0 %v2447
        %2579 = vmatpush.msra.mxu0 %v2443
        %2580 = vmatmul.f32.gmra.mxu0 %v2197
        %v2581 = vpop.f32.mrf.mxu0
        %v2582 = vadd.f32 0.0, %v2581
        %2583 = vdwg.mxu0
        %v2584 = vadd.f32 %v2436, %v2522
        %v2585 = vadd.f32 %v2437, %v2542
        %v2586 = vadd.f32 %v2438, %v2562
        %v2587 = vadd.f32 %v2439, %v2582
        %v2588 = vxor.u32 %v2584, 2147483648
        %v2589 = vmul.f32 %v2588, 1.442695
        %v2590 = vpow.pop %v2589
        %v2591 = vadd.f32 %v2590, 1.0
        %v2592 = vrcp.pop %v2591
        %v2593 = vmul.f32 %v2591, %v2592
        %v2594 = vsub.f32 1.0, %v2593
        %v2595 = vmul.f32 %v2592, %v2594
        %v2596 = vadd.f32 %v2592, %v2595
        %vm2597 = vweird.f32 %v2591
        %vm2598 = vweird.f32 %v2592
        %vm2599 = vmor %vm2597, %vm2598
        %v2600 = vsel %vm2599, %v2592, %v2596
        %v2601 = vand.u32 2147483647, %v2591
        %vm2602 = vcmp.eq.f32.partialorder %v2601, 8.507059e+37
        %v2603 = vand.u32 %v2591, 2147483648
        %v2604 = vor.u32 1.1754944e-38, %v2603
        %v2605 = vsel %vm2602, %v2604, %v2600
        %v2606 = vmul.f32 1.0, %v2605
        %v2607 = vxor.u32 %v2585, 2147483648
        %v2608 = vmul.f32 %v2607, 1.442695
        %v2609 = vpow.pop %v2608
        %v2610 = vadd.f32 %v2609, 1.0
        %v2611 = vrcp.pop %v2610
        %v2612 = vmul.f32 %v2610, %v2611
        %v2613 = vsub.f32 1.0, %v2612
        %v2614 = vmul.f32 %v2611, %v2613
        %v2615 = vadd.f32 %v2611, %v2614
        %vm2616 = vweird.f32 %v2610
        %vm2617 = vweird.f32 %v2611
        %vm2618 = vmor %vm2616, %vm2617
        %v2619 = vsel %vm2618, %v2611, %v2615
        %v2620 = vand.u32 2147483647, %v2610
        %vm2621 = vcmp.eq.f32.partialorder %v2620, 8.507059e+37
        %v2622 = vand.u32 %v2610, 2147483648
        %v2623 = vor.u32 1.1754944e-38, %v2622
        %v2624 = vsel %vm2621, %v2623, %v2619
        %v2625 = vmul.f32 1.0, %v2624
        %v2626 = vtanh.pop %v2586
        %v2627 = vxor.u32 %v2587, 2147483648
        %v2628 = vmul.f32 %v2627, 1.442695
        %v2629 = vpow.pop %v2628
        %v2630 = vadd.f32 %v2629, 1.0
        %v2631 = vrcp.pop %v2630
        %v2632 = vmul.f32 %v2630, %v2631
        %v2633 = vsub.f32 1.0, %v2632
        %v2634 = vmul.f32 %v2631, %v2633
        %v2635 = vadd.f32 %v2631, %v2634
        %vm2636 = vweird.f32 %v2630
        %vm2637 = vweird.f32 %v2631
        %vm2638 = vmor %vm2636, %vm2637
        %v2639 = vsel %vm2638, %v2631, %v2635
        %v2640 = vand.u32 2147483647, %v2630
        %vm2641 = vcmp.eq.f32.partialorder %v2640, 8.507059e+37
        %v2642 = vand.u32 %v2630, 2147483648
        %v2643 = vor.u32 1.1754944e-38, %v2642
        %v2644 = vsel %vm2641, %v2643, %v2639
        %v2645 = vmul.f32 1.0, %v2644
        %v2646 = vmul.f32 %v2625, %v2198
        %v2647 = vmul.f32 %v2606, %v2626
        %v2648 = vadd.f32 %v2646, %v2647
        %v2649 = vtanh.pop %v2648
        %v2650 = vmul.f32 %v2645, %v2649
        %v2651 = vsel %vm2433, 1, 0
        %2652 = vset.pattern.permute.xlu0 0
        %2653 = vperm.xlu0 %2652, %v2651
        %v2654 = vpop.permute.xlu0 %2653
        %vm2655 = vcmp.eq.s32.totalorder %v2654, 1
        %v2656 = vsel %vm2655, %v2650, %v2197
        %v2657 = vsel %vm2655, %v2648, %v2198
        %v2658 = vsel %vm2655, %v2650, 0.0
        %2659 = vst [vmem:[%s437] sm:$0xff] %v2658
        %2660 = vst [vmem:[#allocation4] sm:$0xff] %v2427
        %2661 = vst [vmem:[#allocation5] sm:$0xff] %v2428
        %2662 = vst [vmem:[#allocation6] sm:$0xff] %v2656
        %2663 = vst [vmem:[#allocation7] sm:$0xff] %v2657
        %s2664 = sand.u32 %s239, 1
        %s2665 = scalar_lea.sflag [#allocation10], %s2664
        %s2666 = sand.u32 %s239, 1
        %s2667 = smul.addr %s2666, 32
        %s2668 = scalar_lea.vmem [#allocation14], %s2667
        %s2669 = sand.u32 %s267, 1
        %s2670 = scalar_lea.sflag [#allocation16], %s2669
        %s2671 = sand.u32 %s267, 1
        %s2672 = smul.addr %s2671, 32
        %s2673 = scalar_lea.vmem [#allocation15], %s2672
        // Predicated region
        $region73: #{tpu_custom_call.1} parent=55 // pred_check
          %p2674 = pneg %p249
        $region74: #{tpu_custom_call.1} parent=55 // pred_check_branch
          %2676 = sbr.rel (%p2674) target = $region76
        $region75: #{tpu_custom_call.1} parent=55 // pred_region
          %s2677 = smul.u32 4, %s30
          %2679 = vsyncadd %s2665, 0
          %s2680 = smul.addr %s2677, 8
          %s2681 = scalar_lea.hbm %s9, %s2680
          %s2682 = sshll.u32 %s2668, 4
          %s2683 = int_to_ptr.vmem [resolvable:$true] %s2682
          %s2684 = sshll.u32 %s2681, 4
          %s2685 = int_to_ptr.hbm [resolvable:$true] %s2684
          %2690 = dma.vmem_to_hbm [thread:$0]  %s2683, 512, %s2685, %s2665, 128, 128, 8
        $region76: #{tpu_custom_call.1} parent=55 // pred_fallthru
          _
        // Predicated region
        $region77: #{tpu_custom_call.1} parent=55 // pred_check
          %p2691 = pneg %p277
        $region78: #{tpu_custom_call.1} parent=55 // pred_check_branch
          %2693 = sbr.rel (%p2691) target = $region80
        $region79: #{tpu_custom_call.1} parent=55 // pred_region
          %s2694 = ssub.s32 1, %s30
          %s2695 = smul.u32 4, %s2694
          %2697 = vsyncadd %s2670, 0
          %s2698 = smul.addr %s2695, 8
          %s2699 = scalar_lea.hbm %s10, %s2698
          %s2700 = sshll.u32 %s2673, 4
          %s2701 = int_to_ptr.vmem [resolvable:$true] %s2700
          %s2702 = sshll.u32 %s2699, 4
          %s2703 = int_to_ptr.hbm [resolvable:$true] %s2702
          %2708 = dma.vmem_to_hbm [thread:$0]  %s2701, 512, %s2703, %s2670, 128, 128, 8
        $region80: #{tpu_custom_call.1} parent=55 // pred_fallthru
          _
      $region56: #{tpu_custom_call.1} parent=5 // pred_fallthru
        _
      %p2709 = scmp.le.s32.totalorder 2, %s25
      // Predicated region
      $region81: #{tpu_custom_call.1} parent=5 // pred_check
        %p2710 = pneg %p2709
      $region82: #{tpu_custom_call.1} parent=5 // pred_check_branch
        %2712 = sbr.rel (%p2710) target = $region84
      $region83: #{tpu_custom_call.1} parent=5 // pred_region
        %s2713 = ssub.s32 %s25, 2
        // Predicated region
        $region85: #{tpu_custom_call.1} parent=83 // pred_check
          %p2714 = pneg %p255
        $region86: #{tpu_custom_call.1} parent=83 // pred_check_branch
          %2716 = sbr.rel (%p2714) target = $region88
        $region87: #{tpu_custom_call.1} parent=83 // pred_region
          %s2717 = sand.u32 %s240, 1
          %s2718 = scalar_lea.sflag [#allocation10], %s2717
          %s2719 = sand.u32 %s240, 1
          %s2720 = smul.addr %s2719, 32
          %s2721 = scalar_lea.vmem [#allocation14], %s2720
          %2723 = dma.done %s2718, 512
        $region88: #{tpu_custom_call.1} parent=83 // pred_fallthru
          _
        // Predicated region
        $region89: #{tpu_custom_call.1} parent=83 // pred_check
          %p2724 = pneg %p283
        $region90: #{tpu_custom_call.1} parent=83 // pred_check_branch
          %2726 = sbr.rel (%p2724) target = $region92
        $region91: #{tpu_custom_call.1} parent=83 // pred_region
          %s2727 = sand.u32 %s268, 1
          %s2728 = scalar_lea.sflag [#allocation16], %s2727
          %s2729 = sand.u32 %s268, 1
          %s2730 = smul.addr %s2729, 32
          %s2731 = scalar_lea.vmem [#allocation15], %s2730
          %2733 = dma.done %s2728, 512
        $region92: #{tpu_custom_call.1} parent=83 // pred_fallthru
          _
      $region84: #{tpu_custom_call.1} parent=5 // pred_fallthru
        _
    $region6: #{tpu_custom_call.1} parent=1 // loop_footer
      %s29 = sadd.s32 1, %s25
    $region7: #{tpu_custom_call.1} parent=1 // loop_footer_branch
      %24 = sbr.rel target = $region3
    $region8: #{tpu_custom_call.1} parent=1 // loop_exit
      _
    %2734 = vsyncpa [#allocation9], 1
    %s2735 = scalar_lea.sflag [#allocation9], 1
    %2736 = vsyncpa %s2735, 1
    %2737 = vsyncpa [#allocation12], 1
    %2738 = vsyncpa [#allocation10], 1
    %s2739 = scalar_lea.sflag [#allocation10], 1
    %2740 = vsyncpa %s2739, 1
    %2741 = vsyncpa [#allocation16], 1
    %s2742 = scalar_lea.sflag [#allocation16], 1
    %2743 = vsyncpa %s2742, 1

</llo_original>
